<compile_context>
chip_gen: v7x
topology: tpu7x:2x2x1
jax: 0.10.0
libtpu: 0.0.40
codegen_flags: <defaults>
</compile_context>

<pallas_src>
import jax
import jax.numpy as jnp
from jax import lax
from jax.experimental import pallas as pl
from jax.experimental.pallas import tpu as pltpu


def resnet_kernel(x_ref, w_in_ref, b_in_ref,
                  w1_ref, b1_ref, w2_ref, b2_ref,
                  gamma_ref, beta_ref, w_out_ref, b_out_ref,
                  out_ref):
    # Input projection: (D, F) @ (F, tb) -> (D, tb); bf16 operands, f32 accumulate.
    h = jnp.dot(w_in_ref[...], x_ref[...],
                preferred_element_type=jnp.float32) + b_in_ref[...]

    # Residual blocks (static unroll; n_hidden is small and known at trace time).
    n_blocks = w1_ref.shape[0]
    for i in range(n_blocks):
        z = jnp.dot(w1_ref[i], h.astype(jnp.bfloat16),
                    preferred_element_type=jnp.float32) + b1_ref[i]
        z = jnp.maximum(z, 0.0)                          # ReLU (f32, VPU)
        # Dropout(hidden_dropout) -> identity at inference
        z = jnp.dot(w2_ref[i], z.astype(jnp.bfloat16),
                    preferred_element_type=jnp.float32) + b2_ref[i]
        # Dropout(residual_dropout) -> identity at inference
        h = h + z

    # Prediction head: LayerNorm over the feature (sublane) axis -> ReLU, f32.
    mean = jnp.mean(h, axis=0, keepdims=True)                    # (1, tb)
    var = jnp.mean((h - mean) ** 2, axis=0, keepdims=True)       # biased, as torch
    hn = (h - mean) * lax.rsqrt(var + 1e-5)
    hn = hn * gamma_ref[...] + beta_ref[...]
    hn = jnp.maximum(hn, 0.0)

    # Linear(D, 1): VPU multiply + sublane reduce -> lane-dense (1, tb) store.
    out_ref[...] = (jnp.sum(hn * w_out_ref[...], axis=0, keepdims=True)
                    + b_out_ref[0, 0])


def _call_resnet(args, *, n, F, D, H, tb, Bp, single_buffer_weights):
    """Build the pallas_call for the transposed (batch-on-lanes) layout and run it."""
    if single_buffer_weights:
        def wspec(shape):
            # Constant block index -> no need for double buffering; halves the
            # weight VMEM footprint (matters on v7x's 64 MiB VMEM).
            return pl.BlockSpec(shape, lambda i: (0,) * len(shape),
                                pipeline_mode=pl.Buffered(1))
    else:
        def wspec(shape):
            return pl.BlockSpec(shape, lambda i: (0,) * len(shape))

    grid_spec = pltpu.PrefetchScalarGridSpec(
        num_scalar_prefetch=0,
        grid=(Bp // tb,),
        in_specs=[
            pl.BlockSpec((F, tb), lambda i: (0, i)),            # x tile (batch on lanes)
            wspec((D, F)), wspec((D, 1)),                       # w_in^T, b_in
            wspec((n, H, D)), wspec((n, H, 1)),                 # block W1^T, b1
            wspec((n, D, H)), wspec((n, D, 1)),                 # block W2^T, b2
            wspec((D, 1)), wspec((D, 1)),                       # layernorm gamma, beta
            wspec((D, 1)),                                      # w_out column
            pl.BlockSpec(memory_space=pltpu.MemorySpace.SMEM),  # b_out scalar in SMEM
        ],
        out_specs=pl.BlockSpec((1, tb), lambda i: (0, i)),      # lane-dense output
    )

    return pl.pallas_call(
        resnet_kernel,
        out_shape=jax.ShapeDtypeStruct((1, Bp), jnp.float32),
        grid_spec=grid_spec,
        compiler_params=pltpu.CompilerParams(
            dimension_semantics=("parallel",),
            vmem_limit_bytes=48 * 1024 * 1024),
    )(*args)


def resnet_forward(x, params, *, tb=128):
    """Forward pass.  x: (B, F) float32.  Returns (B, 1) float32."""
    B, F = x.shape
    (w_in, b_in, w1s, b1s, w2s, b2s, gamma, beta, w_out, b_out) = params
    n, D, H = w1s.shape

    # Pad the batch to a multiple of tb with >= 2 tiles so the grid pipelines
    # and (on v7x) shards across both TensorCores.
    n_tiles = max(pl.cdiv(B, tb), 2)
    Bp = n_tiles * tb
    xp = x if Bp == B else jnp.zeros((Bp, F), x.dtype).at[:B].set(x)

    # One-time wrapper-side layout change: batch on lanes, bf16 matmul operands
    # (accumulation happens in f32 inside the kernel; biases/LN stay f32).
    xT = xp.T.astype(jnp.bfloat16)                                   # (F, Bp)
    w_inT = w_in.T.astype(jnp.bfloat16)                              # (D, F)
    b_inT = b_in.reshape(D, 1)
    w1T = jnp.transpose(w1s, (0, 2, 1)).astype(jnp.bfloat16)         # (n, H, D)
    b1T = jnp.transpose(b1s, (0, 2, 1))                              # (n, H, 1)
    w2T = jnp.transpose(w2s, (0, 2, 1)).astype(jnp.bfloat16)         # (n, D, H)
    b2T = jnp.transpose(b2s, (0, 2, 1))                              # (n, D, 1)
    gammaT = gamma.reshape(D, 1)
    betaT = beta.reshape(D, 1)

    args = (xT, w_inT, b_inT, w1T, b1T, w2T, b2T, gammaT, betaT, w_out, b_out)
    try:
        out = _call_resnet(args, n=n, F=F, D=D, H=H, tb=tb, Bp=Bp,
                           single_buffer_weights=True)
    except Exception:
        # TODO(synk): pl.Buffered(1) single-buffering unavailable on this jax
        # version; fall back to default double-buffered weight blocks.
        out = _call_resnet(args, n=n, F=F, D=D, H=H, tb=tb, Bp=Bp,
                           single_buffer_weights=False)

    return out[0, :B].reshape(B, 1)


def init_params(key, input_shape, layer_size, n_hidden, hidden_factor):
    """Deterministic init mimicking PyTorch nn.Linear default (uniform +-1/sqrt(fan_in))."""
    d_hidden = int(hidden_factor * layer_size)
    keys = jax.random.split(key, 4 + 4 * n_hidden)
    ki = iter(keys)

    def lin(kw, kb, fan_in, fan_out):
        bound = 1.0 / jnp.sqrt(fan_in)
        w = jax.random.uniform(kw, (fan_in, fan_out), jnp.float32, -bound, bound)
        b = jax.random.uniform(kb, (1, fan_out), jnp.float32, -bound, bound)
        return w, b

    w_in, b_in = lin(next(ki), next(ki), input_shape, layer_size)

    w1s, b1s, w2s, b2s = [], [], [], []
    for _ in range(n_hidden):
        w1, b1 = lin(next(ki), next(ki), layer_size, d_hidden)
        w2, b2 = lin(next(ki), next(ki), d_hidden, layer_size)
        w1s.append(w1); b1s.append(b1); w2s.append(w2); b2s.append(b2)
    w1s = jnp.stack(w1s); b1s = jnp.stack(b1s)
    w2s = jnp.stack(w2s); b2s = jnp.stack(b2s)

    gamma = jnp.ones((1, layer_size), jnp.float32)
    beta = jnp.zeros((1, layer_size), jnp.float32)
    w_out, b_out = lin(next(ki), next(ki), layer_size, 1)
    return (w_in, b_in, w1s, b1s, w2s, b2s, gamma, beta, w_out, b_out)


def resnet_forward_ref(x, params):
    """Pure-JAX f32 reference for correctness check."""
    (w_in, b_in, w1s, b1s, w2s, b2s, gamma, beta, w_out, b_out) = params
    h = x @ w_in + b_in
    for i in range(w1s.shape[0]):
        z = jnp.maximum(h @ w1s[i] + b1s[i], 0.0)
        h = h + (z @ w2s[i] + b2s[i])
    mean = jnp.mean(h, axis=-1, keepdims=True)
    var = jnp.mean((h - mean) ** 2, axis=-1, keepdims=True)
    hn = (h - mean) / jnp.sqrt(var + 1e-5) * gamma + beta
    hn = jnp.maximum(hn, 0.0)
    return hn @ w_out + b_out


if __name__ == "__main__":
    # Tabular shapes consistent with the module: x is (batch, input_shape).
    F = 16                      # input_shape
    layer_size = 32             # params['layer_size']
    n_hidden = 3                # params['n_hidden']
    hidden_factor = 2.0         # params['hidden_factor']

    key = jax.random.PRNGKey(0)
    kx, kp, kx2 = jax.random.split(key, 3)
    params = init_params(kp, F, layer_size, n_hidden, hidden_factor)

    # Main case: multi-step, pipelined grid (4 batch tiles of 128 lanes).
    B = 512
    x = jax.random.normal(kx, (B, F), jnp.float32)
    out = jax.block_until_ready(resnet_forward(x, params))
    ref = resnet_forward_ref(x, params)
    assert out.shape == (B, 1)
    # bf16 matmul operands (f32 accumulate) -> loosened tolerance vs. f32 ref.
    assert jnp.allclose(out, ref, atol=5e-2, rtol=5e-2), "mismatch vs reference"

    # Small batch exercises the padding path (padded up to 2 tiles, sliced back).
    B2 = 8
    x2 = jax.random.normal(kx2, (B2, F), jnp.float32)
    out2 = jax.block_until_ready(resnet_forward(x2, params))
    ref2 = resnet_forward_ref(x2, params)
    assert out2.shape == (B2, 1)
    assert jnp.allclose(out2, ref2, atol=5e-2, rtol=5e-2), "mismatch vs reference (padded)"

    # TODO(synk): dropout (hidden_dropout / residual_dropout) is identity here
    # (inference semantics); training-mode dropout would use pltpu.prng_random_bits.
    print("KERNEL_OK")
</pallas_src>

<mosaic_0001>
module attributes {stable_mosaic.version = 11 : i64} {
  func.func @resnet_kernel(%arg0: i32, %arg1: memref<16x128xbf16, #tpu.memory_space<vmem>>, %arg2: memref<32x16xbf16, #tpu.memory_space<vmem>>, %arg3: memref<32x1xf32, #tpu.memory_space<vmem>>, %arg4: memref<3x64x32xbf16, #tpu.memory_space<vmem>>, %arg5: memref<3x64x1xf32, #tpu.memory_space<vmem>>, %arg6: memref<3x32x64xbf16, #tpu.memory_space<vmem>>, %arg7: memref<3x32x1xf32, #tpu.memory_space<vmem>>, %arg8: memref<32x1xf32, #tpu.memory_space<vmem>>, %arg9: memref<32x1xf32, #tpu.memory_space<vmem>>, %arg10: memref<32x1xf32, #tpu.memory_space<vmem>>, %arg11: memref<1x1xf32, #tpu.memory_space<smem>>, %arg12: memref<1x128xf32, #tpu.memory_space<vmem>>) attributes {dimension_semantics = [#tpu.dimension_semantics<parallel>], iteration_bounds = array<i64: 4>, scalar_prefetch = 0 : i64, scratch_operands = 0 : i64, tpu.core_type = #tpu.core_type<tc>, window_params = [{transform_indices = @transform_0, window_bounds = array<i64: 16, 128>}, {pipeline_mode = #tpu.pipeline_mode<synchronous>, transform_indices = @transform_1, window_bounds = array<i64: 32, 16>}, {pipeline_mode = #tpu.pipeline_mode<synchronous>, transform_indices = @transform_2, window_bounds = array<i64: 32, 1>}, {pipeline_mode = #tpu.pipeline_mode<synchronous>, transform_indices = @transform_3, window_bounds = array<i64: 3, 64, 32>}, {pipeline_mode = #tpu.pipeline_mode<synchronous>, transform_indices = @transform_4, window_bounds = array<i64: 3, 64, 1>}, {pipeline_mode = #tpu.pipeline_mode<synchronous>, transform_indices = @transform_5, window_bounds = array<i64: 3, 32, 64>}, {pipeline_mode = #tpu.pipeline_mode<synchronous>, transform_indices = @transform_6, window_bounds = array<i64: 3, 32, 1>}, {pipeline_mode = #tpu.pipeline_mode<synchronous>, transform_indices = @transform_7, window_bounds = array<i64: 32, 1>}, {pipeline_mode = #tpu.pipeline_mode<synchronous>, transform_indices = @transform_8, window_bounds = array<i64: 32, 1>}, {pipeline_mode = #tpu.pipeline_mode<synchronous>, transform_indices = @transform_9, window_bounds = array<i64: 32, 1>}, {transform_indices = @transform_10, window_bounds = array<i64: 1, 1>}, {transform_indices = @transform_11, window_bounds = array<i64: 1, 128>}]} {
    %c0 = arith.constant 0 : index
    %c0_0 = arith.constant 0 : index
    %0 = vector.load %arg2[%c0, %c0_0] : memref<32x16xbf16, #tpu.memory_space<vmem>>, vector<32x16xbf16>
    %c0_1 = arith.constant 0 : index
    %c0_2 = arith.constant 0 : index
    %1 = vector.load %arg1[%c0_1, %c0_2] : memref<16x128xbf16, #tpu.memory_space<vmem>>, vector<16x128xbf16>
    %cst = arith.constant dense<0.000000e+00> : vector<32x128xf32>
    %2 = tpu.matmul %0, %1, %cst {dimension_numbers = #tpu.dot_dimension_numbers<[1], [0], [0], [1], [0, 0, 1, 1], [], []>} : vector<32x16xbf16>, vector<16x128xbf16>, vector<32x128xf32> -> vector<32x128xf32>
    %c0_3 = arith.constant 0 : index
    %c0_4 = arith.constant 0 : index
    %3 = vector.load %arg3[%c0_3, %c0_4] : memref<32x1xf32, #tpu.memory_space<vmem>>, vector<32x1xf32>
    %4 = vector.broadcast %3 : vector<32x1xf32> to vector<32x128xf32>
    %5 = arith.addf %2, %4 : vector<32x128xf32>
    %c0_5 = arith.constant 0 : index
    %c0_6 = arith.constant 0 : index
    %c0_7 = arith.constant 0 : index
    %6 = vector.load %arg4[%c0_5, %c0_6, %c0_7] : memref<3x64x32xbf16, #tpu.memory_space<vmem>>, vector<1x64x32xbf16>
    %7 = vector.shape_cast %6 : vector<1x64x32xbf16> to vector<64x32xbf16>
    %8 = arith.truncf %5 : vector<32x128xf32> to vector<32x128xbf16>
    %cst_8 = arith.constant dense<0.000000e+00> : vector<64x128xf32>
    %9 = tpu.matmul %7, %8, %cst_8 {dimension_numbers = #tpu.dot_dimension_numbers<[1], [0], [0], [1], [0, 0, 1, 1], [], []>} : vector<64x32xbf16>, vector<32x128xbf16>, vector<64x128xf32> -> vector<64x128xf32>
    %c0_9 = arith.constant 0 : index
    %c0_10 = arith.constant 0 : index
    %c0_11 = arith.constant 0 : index
    %10 = vector.load %arg5[%c0_9, %c0_10, %c0_11] : memref<3x64x1xf32, #tpu.memory_space<vmem>>, vector<1x64x1xf32>
    %11 = vector.shape_cast %10 : vector<1x64x1xf32> to vector<64x1xf32>
    %12 = vector.broadcast %11 : vector<64x1xf32> to vector<64x128xf32>
    %13 = arith.addf %9, %12 : vector<64x128xf32>
    %cst_12 = arith.constant 0.000000e+00 : f32
    %14 = vector.broadcast %cst_12 : f32 to vector<64x128xf32>
    %15 = arith.maximumf %13, %14 : vector<64x128xf32>
    %c0_13 = arith.constant 0 : index
    %c0_14 = arith.constant 0 : index
    %c0_15 = arith.constant 0 : index
    %16 = vector.load %arg6[%c0_13, %c0_14, %c0_15] : memref<3x32x64xbf16, #tpu.memory_space<vmem>>, vector<1x32x64xbf16>
    %17 = vector.shape_cast %16 : vector<1x32x64xbf16> to vector<32x64xbf16>
    %18 = arith.truncf %15 : vector<64x128xf32> to vector<64x128xbf16>
    %cst_16 = arith.constant dense<0.000000e+00> : vector<32x128xf32>
    %19 = tpu.matmul %17, %18, %cst_16 {dimension_numbers = #tpu.dot_dimension_numbers<[1], [0], [0], [1], [0, 0, 1, 1], [], []>} : vector<32x64xbf16>, vector<64x128xbf16>, vector<32x128xf32> -> vector<32x128xf32>
    %c0_17 = arith.constant 0 : index
    %c0_18 = arith.constant 0 : index
    %c0_19 = arith.constant 0 : index
    %20 = vector.load %arg7[%c0_17, %c0_18, %c0_19] : memref<3x32x1xf32, #tpu.memory_space<vmem>>, vector<1x32x1xf32>
    %21 = vector.shape_cast %20 : vector<1x32x1xf32> to vector<32x1xf32>
    %22 = vector.broadcast %21 : vector<32x1xf32> to vector<32x128xf32>
    %23 = arith.addf %19, %22 : vector<32x128xf32>
    %24 = arith.addf %5, %23 : vector<32x128xf32>
    %c1 = arith.constant 1 : index
    %c0_20 = arith.constant 0 : index
    %c0_21 = arith.constant 0 : index
    %25 = vector.load %arg4[%c1, %c0_20, %c0_21] : memref<3x64x32xbf16, #tpu.memory_space<vmem>>, vector<1x64x32xbf16>
    %26 = vector.shape_cast %25 : vector<1x64x32xbf16> to vector<64x32xbf16>
    %27 = arith.truncf %24 : vector<32x128xf32> to vector<32x128xbf16>
    %cst_22 = arith.constant dense<0.000000e+00> : vector<64x128xf32>
    %28 = tpu.matmul %26, %27, %cst_22 {dimension_numbers = #tpu.dot_dimension_numbers<[1], [0], [0], [1], [0, 0, 1, 1], [], []>} : vector<64x32xbf16>, vector<32x128xbf16>, vector<64x128xf32> -> vector<64x128xf32>
    %c1_23 = arith.constant 1 : index
    %c0_24 = arith.constant 0 : index
    %c0_25 = arith.constant 0 : index
    %29 = vector.load %arg5[%c1_23, %c0_24, %c0_25] : memref<3x64x1xf32, #tpu.memory_space<vmem>>, vector<1x64x1xf32>
    %30 = vector.shape_cast %29 : vector<1x64x1xf32> to vector<64x1xf32>
    %31 = vector.broadcast %30 : vector<64x1xf32> to vector<64x128xf32>
    %32 = arith.addf %28, %31 : vector<64x128xf32>
    %cst_26 = arith.constant 0.000000e+00 : f32
    %33 = vector.broadcast %cst_26 : f32 to vector<64x128xf32>
    %34 = arith.maximumf %32, %33 : vector<64x128xf32>
    %c1_27 = arith.constant 1 : index
    %c0_28 = arith.constant 0 : index
    %c0_29 = arith.constant 0 : index
    %35 = vector.load %arg6[%c1_27, %c0_28, %c0_29] : memref<3x32x64xbf16, #tpu.memory_space<vmem>>, vector<1x32x64xbf16>
    %36 = vector.shape_cast %35 : vector<1x32x64xbf16> to vector<32x64xbf16>
    %37 = arith.truncf %34 : vector<64x128xf32> to vector<64x128xbf16>
    %cst_30 = arith.constant dense<0.000000e+00> : vector<32x128xf32>
    %38 = tpu.matmul %36, %37, %cst_30 {dimension_numbers = #tpu.dot_dimension_numbers<[1], [0], [0], [1], [0, 0, 1, 1], [], []>} : vector<32x64xbf16>, vector<64x128xbf16>, vector<32x128xf32> -> vector<32x128xf32>
    %c1_31 = arith.constant 1 : index
    %c0_32 = arith.constant 0 : index
    %c0_33 = arith.constant 0 : index
    %39 = vector.load %arg7[%c1_31, %c0_32, %c0_33] : memref<3x32x1xf32, #tpu.memory_space<vmem>>, vector<1x32x1xf32>
    %40 = vector.shape_cast %39 : vector<1x32x1xf32> to vector<32x1xf32>
    %41 = vector.broadcast %40 : vector<32x1xf32> to vector<32x128xf32>
    %42 = arith.addf %38, %41 : vector<32x128xf32>
    %43 = arith.addf %24, %42 : vector<32x128xf32>
    %c2 = arith.constant 2 : index
    %c0_34 = arith.constant 0 : index
    %c0_35 = arith.constant 0 : index
    %44 = vector.load %arg4[%c2, %c0_34, %c0_35] : memref<3x64x32xbf16, #tpu.memory_space<vmem>>, vector<1x64x32xbf16>
    %45 = vector.shape_cast %44 : vector<1x64x32xbf16> to vector<64x32xbf16>
    %46 = arith.truncf %43 : vector<32x128xf32> to vector<32x128xbf16>
    %cst_36 = arith.constant dense<0.000000e+00> : vector<64x128xf32>
    %47 = tpu.matmul %45, %46, %cst_36 {dimension_numbers = #tpu.dot_dimension_numbers<[1], [0], [0], [1], [0, 0, 1, 1], [], []>} : vector<64x32xbf16>, vector<32x128xbf16>, vector<64x128xf32> -> vector<64x128xf32>
    %c2_37 = arith.constant 2 : index
    %c0_38 = arith.constant 0 : index
    %c0_39 = arith.constant 0 : index
    %48 = vector.load %arg5[%c2_37, %c0_38, %c0_39] : memref<3x64x1xf32, #tpu.memory_space<vmem>>, vector<1x64x1xf32>
    %49 = vector.shape_cast %48 : vector<1x64x1xf32> to vector<64x1xf32>
    %50 = vector.broadcast %49 : vector<64x1xf32> to vector<64x128xf32>
    %51 = arith.addf %47, %50 : vector<64x128xf32>
    %cst_40 = arith.constant 0.000000e+00 : f32
    %52 = vector.broadcast %cst_40 : f32 to vector<64x128xf32>
    %53 = arith.maximumf %51, %52 : vector<64x128xf32>
    %c2_41 = arith.constant 2 : index
    %c0_42 = arith.constant 0 : index
    %c0_43 = arith.constant 0 : index
    %54 = vector.load %arg6[%c2_41, %c0_42, %c0_43] : memref<3x32x64xbf16, #tpu.memory_space<vmem>>, vector<1x32x64xbf16>
    %55 = vector.shape_cast %54 : vector<1x32x64xbf16> to vector<32x64xbf16>
    %56 = arith.truncf %53 : vector<64x128xf32> to vector<64x128xbf16>
    %cst_44 = arith.constant dense<0.000000e+00> : vector<32x128xf32>
    %57 = tpu.matmul %55, %56, %cst_44 {dimension_numbers = #tpu.dot_dimension_numbers<[1], [0], [0], [1], [0, 0, 1, 1], [], []>} : vector<32x64xbf16>, vector<64x128xbf16>, vector<32x128xf32> -> vector<32x128xf32>
    %c2_45 = arith.constant 2 : index
    %c0_46 = arith.constant 0 : index
    %c0_47 = arith.constant 0 : index
    %58 = vector.load %arg7[%c2_45, %c0_46, %c0_47] : memref<3x32x1xf32, #tpu.memory_space<vmem>>, vector<1x32x1xf32>
    %59 = vector.shape_cast %58 : vector<1x32x1xf32> to vector<32x1xf32>
    %60 = vector.broadcast %59 : vector<32x1xf32> to vector<32x128xf32>
    %61 = arith.addf %57, %60 : vector<32x128xf32>
    %62 = arith.addf %43, %61 : vector<32x128xf32>
    %cst_48 = arith.constant dense<0.000000e+00> : vector<128xf32>
    %63 = vector.multi_reduction <add>, %62, %cst_48 [0] : vector<32x128xf32> to vector<128xf32>
    %64 = vector.shape_cast %63 : vector<128xf32> to vector<1x128xf32>
    %cst_49 = arith.constant 3.200000e+01 : f32
    %65 = vector.broadcast %cst_49 : f32 to vector<1x128xf32>
    %66 = arith.divf %64, %65 : vector<1x128xf32>
    %67 = vector.broadcast %66 : vector<1x128xf32> to vector<32x128xf32>
    %68 = arith.subf %62, %67 : vector<32x128xf32>
    %69 = arith.mulf %68, %68 : vector<32x128xf32>
    %cst_50 = arith.constant dense<0.000000e+00> : vector<128xf32>
    %70 = vector.multi_reduction <add>, %69, %cst_50 [0] : vector<32x128xf32> to vector<128xf32>
    %71 = vector.shape_cast %70 : vector<128xf32> to vector<1x128xf32>
    %cst_51 = arith.constant 3.200000e+01 : f32
    %72 = vector.broadcast %cst_51 : f32 to vector<1x128xf32>
    %73 = arith.divf %71, %72 : vector<1x128xf32>
    %74 = vector.broadcast %66 : vector<1x128xf32> to vector<32x128xf32>
    %75 = arith.subf %62, %74 : vector<32x128xf32>
    %cst_52 = arith.constant 9.99999974E-6 : f32
    %76 = vector.broadcast %cst_52 : f32 to vector<1x128xf32>
    %77 = arith.addf %73, %76 : vector<1x128xf32>
    %78 = math.rsqrt %77 : vector<1x128xf32>
    %79 = vector.broadcast %78 : vector<1x128xf32> to vector<32x128xf32>
    %80 = arith.mulf %75, %79 : vector<32x128xf32>
    %c0_53 = arith.constant 0 : index
    %c0_54 = arith.constant 0 : index
    %81 = vector.load %arg8[%c0_53, %c0_54] : memref<32x1xf32, #tpu.memory_space<vmem>>, vector<32x1xf32>
    %82 = vector.broadcast %81 : vector<32x1xf32> to vector<32x128xf32>
    %83 = arith.mulf %80, %82 : vector<32x128xf32>
    %c0_55 = arith.constant 0 : index
    %c0_56 = arith.constant 0 : index
    %84 = vector.load %arg9[%c0_55, %c0_56] : memref<32x1xf32, #tpu.memory_space<vmem>>, vector<32x1xf32>
    %85 = vector.broadcast %84 : vector<32x1xf32> to vector<32x128xf32>
    %86 = arith.addf %83, %85 : vector<32x128xf32>
    %cst_57 = arith.constant 0.000000e+00 : f32
    %87 = vector.broadcast %cst_57 : f32 to vector<32x128xf32>
    %88 = arith.maximumf %86, %87 : vector<32x128xf32>
    %c0_58 = arith.constant 0 : index
    %c0_59 = arith.constant 0 : index
    %89 = vector.load %arg10[%c0_58, %c0_59] : memref<32x1xf32, #tpu.memory_space<vmem>>, vector<32x1xf32>
    %90 = vector.broadcast %89 : vector<32x1xf32> to vector<32x128xf32>
    %91 = arith.mulf %88, %90 : vector<32x128xf32>
    %cst_60 = arith.constant dense<0.000000e+00> : vector<128xf32>
    %92 = vector.multi_reduction <add>, %91, %cst_60 [0] : vector<32x128xf32> to vector<128xf32>
    %93 = vector.shape_cast %92 : vector<128xf32> to vector<1x128xf32>
    %c0_61 = arith.constant 0 : index
    %c0_62 = arith.constant 0 : index
    %94 = memref.load %arg11[%c0_61, %c0_62] : memref<1x1xf32, #tpu.memory_space<smem>>
    %95 = vector.broadcast %94 : f32 to vector<1x128xf32>
    %96 = arith.addf %93, %95 : vector<1x128xf32>
    %c0_63 = arith.constant 0 : index
    %c0_64 = arith.constant 0 : index
    %97 = vector.load %arg12[%c0_63, %c0_64] : memref<1x128xf32, #tpu.memory_space<vmem>>, vector<1x128xf32>
    tpu.vector_store %arg12[%c0_63, %c0_64], %96 {strides = array<i32>} : memref<1x128xf32, #tpu.memory_space<vmem>>, vector<1x128xf32>,
    return
  }
  func.func @transform_0(%arg0: i32) -> (i32, i32) {
    %c0_i32 = arith.constant 0 : i32
    %c0_i32_0 = arith.constant 0 : i32
    return %c0_i32, %arg0 : i32, i32
  }
  func.func @transform_1(%arg0: i32) -> (i32, i32) {
    %c0_i32 = arith.constant 0 : i32
    %c0_i32_0 = arith.constant 0 : i32
    %c0_i32_1 = arith.constant 0 : i32
    return %c0_i32, %c0_i32_0 : i32, i32
  }
  func.func @transform_2(%arg0: i32) -> (i32, i32) {
    %c0_i32 = arith.constant 0 : i32
    %c0_i32_0 = arith.constant 0 : i32
    %c0_i32_1 = arith.constant 0 : i32
    return %c0_i32, %c0_i32_0 : i32, i32
  }
  func.func @transform_3(%arg0: i32) -> (i32, i32, i32) {
    %c0_i32 = arith.constant 0 : i32
    %c0_i32_0 = arith.constant 0 : i32
    %c0_i32_1 = arith.constant 0 : i32
    %c0_i32_2 = arith.constant 0 : i32
    return %c0_i32, %c0_i32_0, %c0_i32_1 : i32, i32, i32
  }
  func.func @transform_4(%arg0: i32) -> (i32, i32, i32) {
    %c0_i32 = arith.constant 0 : i32
    %c0_i32_0 = arith.constant 0 : i32
    %c0_i32_1 = arith.constant 0 : i32
    %c0_i32_2 = arith.constant 0 : i32
    return %c0_i32, %c0_i32_0, %c0_i32_1 : i32, i32, i32
  }
  func.func @transform_5(%arg0: i32) -> (i32, i32, i32) {
    %c0_i32 = arith.constant 0 : i32
    %c0_i32_0 = arith.constant 0 : i32
    %c0_i32_1 = arith.constant 0 : i32
    %c0_i32_2 = arith.constant 0 : i32
    return %c0_i32, %c0_i32_0, %c0_i32_1 : i32, i32, i32
  }
  func.func @transform_6(%arg0: i32) -> (i32, i32, i32) {
    %c0_i32 = arith.constant 0 : i32
    %c0_i32_0 = arith.constant 0 : i32
    %c0_i32_1 = arith.constant 0 : i32
    %c0_i32_2 = arith.constant 0 : i32
    return %c0_i32, %c0_i32_0, %c0_i32_1 : i32, i32, i32
  }
  func.func @transform_7(%arg0: i32) -> (i32, i32) {
    %c0_i32 = arith.constant 0 : i32
    %c0_i32_0 = arith.constant 0 : i32
    %c0_i32_1 = arith.constant 0 : i32
    return %c0_i32, %c0_i32_0 : i32, i32
  }
  func.func @transform_8(%arg0: i32) -> (i32, i32) {
    %c0_i32 = arith.constant 0 : i32
    %c0_i32_0 = arith.constant 0 : i32
    %c0_i32_1 = arith.constant 0 : i32
    return %c0_i32, %c0_i32_0 : i32, i32
  }
  func.func @transform_9(%arg0: i32) -> (i32, i32) {
    %c0_i32 = arith.constant 0 : i32
    %c0_i32_0 = arith.constant 0 : i32
    %c0_i32_1 = arith.constant 0 : i32
    return %c0_i32, %c0_i32_0 : i32, i32
  }
  func.func @transform_10(%arg0: i32) -> (i32, i32) {
    %c0_i32 = arith.constant 0 : i32
    %c0_i32_0 = arith.constant 0 : i32
    %c0_i32_1 = arith.constant 0 : i32
    return %c0_i32, %c0_i32_0 : i32, i32
  }
  func.func @transform_11(%arg0: i32) -> (i32, i32) {
    %c0_i32 = arith.constant 0 : i32
    %c0_i32_0 = arith.constant 0 : i32
    return %c0_i32, %arg0 : i32, i32
  }
}

module attributes {stable_mosaic.version = 11 : i64} {
  func.func @resnet_kernel(%arg0: i32, %arg1: memref<16x128xbf16, #tpu.memory_space<vmem>>, %arg2: memref<32x16xbf16, #tpu.memory_space<vmem>>, %arg3: memref<32x1xf32, #tpu.memory_space<vmem>>, %arg4: memref<3x64x32xbf16, #tpu.memory_space<vmem>>, %arg5: memref<3x64x1xf32, #tpu.memory_space<vmem>>, %arg6: memref<3x32x64xbf16, #tpu.memory_space<vmem>>, %arg7: memref<3x32x1xf32, #tpu.memory_space<vmem>>, %arg8: memref<32x1xf32, #tpu.memory_space<vmem>>, %arg9: memref<32x1xf32, #tpu.memory_space<vmem>>, %arg10: memref<32x1xf32, #tpu.memory_space<vmem>>, %arg11: memref<1x1xf32, #tpu.memory_space<smem>>, %arg12: memref<1x128xf32, #tpu.memory_space<vmem>>) attributes {dimension_semantics = [#tpu.dimension_semantics<parallel>], iteration_bounds = array<i64: 4>, scalar_prefetch = 0 : i64, scratch_operands = 0 : i64, tpu.core_type = #tpu.core_type<tc>, window_params = [{transform_indices = @transform_0, window_bounds = array<i64: 16, 128>}, {pipeline_mode = #tpu.pipeline_mode<synchronous>, transform_indices = @transform_1, window_bounds = array<i64: 32, 16>}, {pipeline_mode = #tpu.pipeline_mode<synchronous>, transform_indices = @transform_2, window_bounds = array<i64: 32, 1>}, {pipeline_mode = #tpu.pipeline_mode<synchronous>, transform_indices = @transform_3, window_bounds = array<i64: 3, 64, 32>}, {pipeline_mode = #tpu.pipeline_mode<synchronous>, transform_indices = @transform_4, window_bounds = array<i64: 3, 64, 1>}, {pipeline_mode = #tpu.pipeline_mode<synchronous>, transform_indices = @transform_5, window_bounds = array<i64: 3, 32, 64>}, {pipeline_mode = #tpu.pipeline_mode<synchronous>, transform_indices = @transform_6, window_bounds = array<i64: 3, 32, 1>}, {pipeline_mode = #tpu.pipeline_mode<synchronous>, transform_indices = @transform_7, window_bounds = array<i64: 32, 1>}, {pipeline_mode = #tpu.pipeline_mode<synchronous>, transform_indices = @transform_8, window_bounds = array<i64: 32, 1>}, {pipeline_mode = #tpu.pipeline_mode<synchronous>, transform_indices = @transform_9, window_bounds = array<i64: 32, 1>}, {transform_indices = @transform_10, window_bounds = array<i64: 1, 1>}, {transform_indices = @transform_11, window_bounds = array<i64: 1, 128>}]} {
    %c0 = arith.constant 0 : index
    %c0_0 = arith.constant 0 : index
    %0 = vector.load %arg2[%c0, %c0_0] : memref<32x16xbf16, #tpu.memory_space<vmem>>, vector<32x16xbf16>
    %c0_1 = arith.constant 0 : index
    %c0_2 = arith.constant 0 : index
    %1 = vector.load %arg1[%c0_1, %c0_2] : memref<16x128xbf16, #tpu.memory_space<vmem>>, vector<16x128xbf16>
    %cst = arith.constant dense<0.000000e+00> : vector<32x128xf32>
    %2 = tpu.matmul %0, %1, %cst {dimension_numbers = #tpu.dot_dimension_numbers<[1], [0], [0], [1], [0, 0, 1, 1], [], []>} : vector<32x16xbf16>, vector<16x128xbf16>, vector<32x128xf32> -> vector<32x128xf32>
    %c0_3 = arith.constant 0 : index
    %c0_4 = arith.constant 0 : index
    %3 = vector.load %arg3[%c0_3, %c0_4] : memref<32x1xf32, #tpu.memory_space<vmem>>, vector<32x1xf32>
    %4 = vector.broadcast %3 : vector<32x1xf32> to vector<32x128xf32>
    %5 = arith.addf %2, %4 : vector<32x128xf32>
    %c0_5 = arith.constant 0 : index
    %c0_6 = arith.constant 0 : index
    %c0_7 = arith.constant 0 : index
    %6 = vector.load %arg4[%c0_5, %c0_6, %c0_7] : memref<3x64x32xbf16, #tpu.memory_space<vmem>>, vector<1x64x32xbf16>
    %7 = vector.shape_cast %6 : vector<1x64x32xbf16> to vector<64x32xbf16>
    %8 = arith.truncf %5 : vector<32x128xf32> to vector<32x128xbf16>
    %cst_8 = arith.constant dense<0.000000e+00> : vector<64x128xf32>
    %9 = tpu.matmul %7, %8, %cst_8 {dimension_numbers = #tpu.dot_dimension_numbers<[1], [0], [0], [1], [0, 0, 1, 1], [], []>} : vector<64x32xbf16>, vector<32x128xbf16>, vector<64x128xf32> -> vector<64x128xf32>
    %c0_9 = arith.constant 0 : index
    %c0_10 = arith.constant 0 : index
    %c0_11 = arith.constant 0 : index
    %10 = vector.load %arg5[%c0_9, %c0_10, %c0_11] : memref<3x64x1xf32, #tpu.memory_space<vmem>>, vector<1x64x1xf32>
    %11 = vector.shape_cast %10 : vector<1x64x1xf32> to vector<64x1xf32>
    %12 = vector.broadcast %11 : vector<64x1xf32> to vector<64x128xf32>
    %13 = arith.addf %9, %12 : vector<64x128xf32>
    %cst_12 = arith.constant 0.000000e+00 : f32
    %14 = vector.broadcast %cst_12 : f32 to vector<64x128xf32>
    %15 = arith.maximumf %13, %14 : vector<64x128xf32>
    %c0_13 = arith.constant 0 : index
    %c0_14 = arith.constant 0 : index
    %c0_15 = arith.constant 0 : index
    %16 = vector.load %arg6[%c0_13, %c0_14, %c0_15] : memref<3x32x64xbf16, #tpu.memory_space<vmem>>, vector<1x32x64xbf16>
    %17 = vector.shape_cast %16 : vector<1x32x64xbf16> to vector<32x64xbf16>
    %18 = arith.truncf %15 : vector<64x128xf32> to vector<64x128xbf16>
    %cst_16 = arith.constant dense<0.000000e+00> : vector<32x128xf32>
    %19 = tpu.matmul %17, %18, %cst_16 {dimension_numbers = #tpu.dot_dimension_numbers<[1], [0], [0], [1], [0, 0, 1, 1], [], []>} : vector<32x64xbf16>, vector<64x128xbf16>, vector<32x128xf32> -> vector<32x128xf32>
    %c0_17 = arith.constant 0 : index
    %c0_18 = arith.constant 0 : index
    %c0_19 = arith.constant 0 : index
    %20 = vector.load %arg7[%c0_17, %c0_18, %c0_19] : memref<3x32x1xf32, #tpu.memory_space<vmem>>, vector<1x32x1xf32>
    %21 = vector.shape_cast %20 : vector<1x32x1xf32> to vector<32x1xf32>
    %22 = vector.broadcast %21 : vector<32x1xf32> to vector<32x128xf32>
    %23 = arith.addf %19, %22 : vector<32x128xf32>
    %24 = arith.addf %5, %23 : vector<32x128xf32>
    %c1 = arith.constant 1 : index
    %c0_20 = arith.constant 0 : index
    %c0_21 = arith.constant 0 : index
    %25 = vector.load %arg4[%c1, %c0_20, %c0_21] : memref<3x64x32xbf16, #tpu.memory_space<vmem>>, vector<1x64x32xbf16>
    %26 = vector.shape_cast %25 : vector<1x64x32xbf16> to vector<64x32xbf16>
    %27 = arith.truncf %24 : vector<32x128xf32> to vector<32x128xbf16>
    %cst_22 = arith.constant dense<0.000000e+00> : vector<64x128xf32>
    %28 = tpu.matmul %26, %27, %cst_22 {dimension_numbers = #tpu.dot_dimension_numbers<[1], [0], [0], [1], [0, 0, 1, 1], [], []>} : vector<64x32xbf16>, vector<32x128xbf16>, vector<64x128xf32> -> vector<64x128xf32>
    %c1_23 = arith.constant 1 : index
    %c0_24 = arith.constant 0 : index
    %c0_25 = arith.constant 0 : index
    %29 = vector.load %arg5[%c1_23, %c0_24, %c0_25] : memref<3x64x1xf32, #tpu.memory_space<vmem>>, vector<1x64x1xf32>
    %30 = vector.shape_cast %29 : vector<1x64x1xf32> to vector<64x1xf32>
    %31 = vector.broadcast %30 : vector<64x1xf32> to vector<64x128xf32>
    %32 = arith.addf %28, %31 : vector<64x128xf32>
    %cst_26 = arith.constant 0.000000e+00 : f32
    %33 = vector.broadcast %cst_26 : f32 to vector<64x128xf32>
    %34 = arith.maximumf %32, %33 : vector<64x128xf32>
    %c1_27 = arith.constant 1 : index
    %c0_28 = arith.constant 0 : index
    %c0_29 = arith.constant 0 : index
    %35 = vector.load %arg6[%c1_27, %c0_28, %c0_29] : memref<3x32x64xbf16, #tpu.memory_space<vmem>>, vector<1x32x64xbf16>
    %36 = vector.shape_cast %35 : vector<1x32x64xbf16> to vector<32x64xbf16>
    %37 = arith.truncf %34 : vector<64x128xf32> to vector<64x128xbf16>
    %cst_30 = arith.constant dense<0.000000e+00> : vector<32x128xf32>
    %38 = tpu.matmul %36, %37, %cst_30 {dimension_numbers = #tpu.dot_dimension_numbers<[1], [0], [0], [1], [0, 0, 1, 1], [], []>} : vector<32x64xbf16>, vector<64x128xbf16>, vector<32x128xf32> -> vector<32x128xf32>
    %c1_31 = arith.constant 1 : index
    %c0_32 = arith.constant 0 : index
    %c0_33 = arith.constant 0 : index
    %39 = vector.load %arg7[%c1_31, %c0_32, %c0_33] : memref<3x32x1xf32, #tpu.memory_space<vmem>>, vector<1x32x1xf32>
    %40 = vector.shape_cast %39 : vector<1x32x1xf32> to vector<32x1xf32>
    %41 = vector.broadcast %40 : vector<32x1xf32> to vector<32x128xf32>
    %42 = arith.addf %38, %41 : vector<32x128xf32>
    %43 = arith.addf %24, %42 : vector<32x128xf32>
    %c2 = arith.constant 2 : index
    %c0_34 = arith.constant 0 : index
    %c0_35 = arith.constant 0 : index
    %44 = vector.load %arg4[%c2, %c0_34, %c0_35] : memref<3x64x32xbf16, #tpu.memory_space<vmem>>, vector<1x64x32xbf16>
    %45 = vector.shape_cast %44 : vector<1x64x32xbf16> to vector<64x32xbf16>
    %46 = arith.truncf %43 : vector<32x128xf32> to vector<32x128xbf16>
    %cst_36 = arith.constant dense<0.000000e+00> : vector<64x128xf32>
    %47 = tpu.matmul %45, %46, %cst_36 {dimension_numbers = #tpu.dot_dimension_numbers<[1], [0], [0], [1], [0, 0, 1, 1], [], []>} : vector<64x32xbf16>, vector<32x128xbf16>, vector<64x128xf32> -> vector<64x128xf32>
    %c2_37 = arith.constant 2 : index
    %c0_38 = arith.constant 0 : index
    %c0_39 = arith.constant 0 : index
    %48 = vector.load %arg5[%c2_37, %c0_38, %c0_39] : memref<3x64x1xf32, #tpu.memory_space<vmem>>, vector<1x64x1xf32>
    %49 = vector.shape_cast %48 : vector<1x64x1xf32> to vector<64x1xf32>
    %50 = vector.broadcast %49 : vector<64x1xf32> to vector<64x128xf32>
    %51 = arith.addf %47, %50 : vector<64x128xf32>
    %cst_40 = arith.constant 0.000000e+00 : f32
    %52 = vector.broadcast %cst_40 : f32 to vector<64x128xf32>
    %53 = arith.maximumf %51, %52 : vector<64x128xf32>
    %c2_41 = arith.constant 2 : index
    %c0_42 = arith.constant 0 : index
    %c0_43 = arith.constant 0 : index
    %54 = vector.load %arg6[%c2_41, %c0_42, %c0_43] : memref<3x32x64xbf16, #tpu.memory_space<vmem>>, vector<1x32x64xbf16>
    %55 = vector.shape_cast %54 : vector<1x32x64xbf16> to vector<32x64xbf16>
    %56 = arith.truncf %53 : vector<64x128xf32> to vector<64x128xbf16>
    %cst_44 = arith.constant dense<0.000000e+00> : vector<32x128xf32>
    %57 = tpu.matmul %55, %56, %cst_44 {dimension_numbers = #tpu.dot_dimension_numbers<[1], [0], [0], [1], [0, 0, 1, 1], [], []>} : vector<32x64xbf16>, vector<64x128xbf16>, vector<32x128xf32> -> vector<32x128xf32>
    %c2_45 = arith.constant 2 : index
    %c0_46 = arith.constant 0 : index
    %c0_47 = arith.constant 0 : index
    %58 = vector.load %arg7[%c2_45, %c0_46, %c0_47] : memref<3x32x1xf32, #tpu.memory_space<vmem>>, vector<1x32x1xf32>
    %59 = vector.shape_cast %58 : vector<1x32x1xf32> to vector<32x1xf32>
    %60 = vector.broadcast %59 : vector<32x1xf32> to vector<32x128xf32>
    %61 = arith.addf %57, %60 : vector<32x128xf32>
    %62 = arith.addf %43, %61 : vector<32x128xf32>
    %cst_48 = arith.constant dense<0.000000e+00> : vector<128xf32>
    %63 = vector.multi_reduction <add>, %62, %cst_48 [0] : vector<32x128xf32> to vector<128xf32>
    %64 = vector.shape_cast %63 : vector<128xf32> to vector<1x128xf32>
    %cst_49 = arith.constant 3.200000e+01 : f32
    %65 = vector.broadcast %cst_49 : f32 to vector<1x128xf32>
    %66 = arith.divf %64, %65 : vector<1x128xf32>
    %67 = vector.broadcast %66 : vector<1x128xf32> to vector<32x128xf32>
    %68 = arith.subf %62, %67 : vector<32x128xf32>
    %69 = arith.mulf %68, %68 : vector<32x128xf32>
    %cst_50 = arith.constant dense<0.000000e+00> : vector<128xf32>
    %70 = vector.multi_reduction <add>, %69, %cst_50 [0] : vector<32x128xf32> to vector<128xf32>
    %71 = vector.shape_cast %70 : vector<128xf32> to vector<1x128xf32>
    %cst_51 = arith.constant 3.200000e+01 : f32
    %72 = vector.broadcast %cst_51 : f32 to vector<1x128xf32>
    %73 = arith.divf %71, %72 : vector<1x128xf32>
    %74 = vector.broadcast %66 : vector<1x128xf32> to vector<32x128xf32>
    %75 = arith.subf %62, %74 : vector<32x128xf32>
    %cst_52 = arith.constant 9.99999974E-6 : f32
    %76 = vector.broadcast %cst_52 : f32 to vector<1x128xf32>
    %77 = arith.addf %73, %76 : vector<1x128xf32>
    %78 = math.rsqrt %77 : vector<1x128xf32>
    %79 = vector.broadcast %78 : vector<1x128xf32> to vector<32x128xf32>
    %80 = arith.mulf %75, %79 : vector<32x128xf32>
    %c0_53 = arith.constant 0 : index
    %c0_54 = arith.constant 0 : index
    %81 = vector.load %arg8[%c0_53, %c0_54] : memref<32x1xf32, #tpu.memory_space<vmem>>, vector<32x1xf32>
    %82 = vector.broadcast %81 : vector<32x1xf32> to vector<32x128xf32>
    %83 = arith.mulf %80, %82 : vector<32x128xf32>
    %c0_55 = arith.constant 0 : index
    %c0_56 = arith.constant 0 : index
    %84 = vector.load %arg9[%c0_55, %c0_56] : memref<32x1xf32, #tpu.memory_space<vmem>>, vector<32x1xf32>
    %85 = vector.broadcast %84 : vector<32x1xf32> to vector<32x128xf32>
    %86 = arith.addf %83, %85 : vector<32x128xf32>
    %cst_57 = arith.constant 0.000000e+00 : f32
    %87 = vector.broadcast %cst_57 : f32 to vector<32x128xf32>
    %88 = arith.maximumf %86, %87 : vector<32x128xf32>
    %c0_58 = arith.constant 0 : index
    %c0_59 = arith.constant 0 : index
    %89 = vector.load %arg10[%c0_58, %c0_59] : memref<32x1xf32, #tpu.memory_space<vmem>>, vector<32x1xf32>
    %90 = vector.broadcast %89 : vector<32x1xf32> to vector<32x128xf32>
    %91 = arith.mulf %88, %90 : vector<32x128xf32>
    %cst_60 = arith.constant dense<0.000000e+00> : vector<128xf32>
    %92 = vector.multi_reduction <add>, %91, %cst_60 [0] : vector<32x128xf32> to vector<128xf32>
    %93 = vector.shape_cast %92 : vector<128xf32> to vector<1x128xf32>
    %c0_61 = arith.constant 0 : index
    %c0_62 = arith.constant 0 : index
    %94 = memref.load %arg11[%c0_61, %c0_62] : memref<1x1xf32, #tpu.memory_space<smem>>
    %95 = vector.broadcast %94 : f32 to vector<1x128xf32>
    %96 = arith.addf %93, %95 : vector<1x128xf32>
    %c0_63 = arith.constant 0 : index
    %c0_64 = arith.constant 0 : index
    %97 = vector.load %arg12[%c0_63, %c0_64] : memref<1x128xf32, #tpu.memory_space<vmem>>, vector<1x128xf32>
    tpu.vector_store %arg12[%c0_63, %c0_64], %96 {strides = array<i32>} : memref<1x128xf32, #tpu.memory_space<vmem>>, vector<1x128xf32>,
    return
  }
  func.func @transform_0(%arg0: i32) -> (i32, i32) {
    %c0_i32 = arith.constant 0 : i32
    %c0_i32_0 = arith.constant 0 : i32
    return %c0_i32, %arg0 : i32, i32
  }
  func.func @transform_1(%arg0: i32) -> (i32, i32) {
    %c0_i32 = arith.constant 0 : i32
    %c0_i32_0 = arith.constant 0 : i32
    %c0_i32_1 = arith.constant 0 : i32
    return %c0_i32, %c0_i32_0 : i32, i32
  }
  func.func @transform_2(%arg0: i32) -> (i32, i32) {
    %c0_i32 = arith.constant 0 : i32
    %c0_i32_0 = arith.constant 0 : i32
    %c0_i32_1 = arith.constant 0 : i32
    return %c0_i32, %c0_i32_0 : i32, i32
  }
  func.func @transform_3(%arg0: i32) -> (i32, i32, i32) {
    %c0_i32 = arith.constant 0 : i32
    %c0_i32_0 = arith.constant 0 : i32
    %c0_i32_1 = arith.constant 0 : i32
    %c0_i32_2 = arith.constant 0 : i32
    return %c0_i32, %c0_i32_0, %c0_i32_1 : i32, i32, i32
  }
  func.func @transform_4(%arg0: i32) -> (i32, i32, i32) {
    %c0_i32 = arith.constant 0 : i32
    %c0_i32_0 = arith.constant 0 : i32
    %c0_i32_1 = arith.constant 0 : i32
    %c0_i32_2 = arith.constant 0 : i32
    return %c0_i32, %c0_i32_0, %c0_i32_1 : i32, i32, i32
  }
  func.func @transform_5(%arg0: i32) -> (i32, i32, i32) {
    %c0_i32 = arith.constant 0 : i32
    %c0_i32_0 = arith.constant 0 : i32
    %c0_i32_1 = arith.constant 0 : i32
    %c0_i32_2 = arith.constant 0 : i32
    return %c0_i32, %c0_i32_0, %c0_i32_1 : i32, i32, i32
  }
  func.func @transform_6(%arg0: i32) -> (i32, i32, i32) {
    %c0_i32 = arith.constant 0 : i32
    %c0_i32_0 = arith.constant 0 : i32
    %c0_i32_1 = arith.constant 0 : i32
    %c0_i32_2 = arith.constant 0 : i32
    return %c0_i32, %c0_i32_0, %c0_i32_1 : i32, i32, i32
  }
  func.func @transform_7(%arg0: i32) -> (i32, i32) {
    %c0_i32 = arith.constant 0 : i32
    %c0_i32_0 = arith.constant 0 : i32
    %c0_i32_1 = arith.constant 0 : i32
    return %c0_i32, %c0_i32_0 : i32, i32
  }
  func.func @transform_8(%arg0: i32) -> (i32, i32) {
    %c0_i32 = arith.constant 0 : i32
    %c0_i32_0 = arith.constant 0 : i32
    %c0_i32_1 = arith.constant 0 : i32
    return %c0_i32, %c0_i32_0 : i32, i32
  }
  func.func @transform_9(%arg0: i32) -> (i32, i32) {
    %c0_i32 = arith.constant 0 : i32
    %c0_i32_0 = arith.constant 0 : i32
    %c0_i32_1 = arith.constant 0 : i32
    return %c0_i32, %c0_i32_0 : i32, i32
  }
  func.func @transform_10(%arg0: i32) -> (i32, i32) {
    %c0_i32 = arith.constant 0 : i32
    %c0_i32_0 = arith.constant 0 : i32
    %c0_i32_1 = arith.constant 0 : i32
    return %c0_i32, %c0_i32_0 : i32, i32
  }
  func.func @transform_11(%arg0: i32) -> (i32, i32) {
    %c0_i32 = arith.constant 0 : i32
    %c0_i32_0 = arith.constant 0 : i32
    return %c0_i32, %arg0 : i32, i32
  }
}

</mosaic_0001>

<llo_original>
// kernel: tpu_custom_call.1
$region0: #{tpu_custom_call.1}
  #allocation0 [shape = 'u32[]', space=smem, size = 0x4, offset = 0x4, fixed_abs, tag = 'smem constant byte address 0x4 - core index']
  #allocation1 [shape = 'u32[144,128]{1,0:T(1,128)}', space=vmem, size = 0x12000, scoped, tag = 'internal scratch']
  #allocation2 [shape = 'f32[1,1]{1,0:T(1,128)S(6)}', space=smem, size = 0x200, scoped, tag = 'scoped memory for tpu_custom_call.1']
  %s0 = inlined_call_operand.vmem [shape: bf16[16,512], index: 0, kind: input, shape index: {}]
  %s1 = inlined_call_operand.vmem [shape: bf16[32,16], index: 1, kind: input, shape index: {}]
  %s2 = inlined_call_operand.vmem [shape: f32[32,1], index: 2, kind: input, shape index: {}]
  %s3 = inlined_call_operand.vmem [shape: bf16[3,64,32], index: 3, kind: input, shape index: {}]
  %s4 = inlined_call_operand.vmem [shape: f32[3,64,1], index: 4, kind: input, shape index: {}]
  %s5 = inlined_call_operand.vmem [shape: bf16[3,32,64], index: 5, kind: input, shape index: {}]
  %s6 = inlined_call_operand.vmem [shape: f32[3,32,1], index: 6, kind: input, shape index: {}]
  %s7 = inlined_call_operand.vmem [shape: f32[32,1], index: 7, kind: input, shape index: {}]
  %s8 = inlined_call_operand.vmem [shape: f32[32,1], index: 8, kind: input, shape index: {}]
  %s9 = inlined_call_operand.vmem [shape: f32[32,1], index: 9, kind: input, shape index: {}]
  %s10 = inlined_call_operand.<no memory space> [shape: f32[1,1], index: 10, kind: input, shape index: {}]
  %s11 = inlined_call_operand.hbm [shape: f32[1,512], index: 11, kind: output, shape index: {}]
  %s12 = sld [smem:[#allocation0]]
  $region118: #{tpu_custom_call.1} parent=0
    _
  %s14 = ssub.s32 1, %s12
  %s15 = scalar_select 0, %s14, %s12
  %16 = sst [smem:[#allocation2]] %s10
  $region1: #{tpu_custom_call.1} parent=0
    #allocation3 [shape = 'u8[8192]{0}', space=vmem, size = 0x2000, scoped, tag = 'input window, operand 0']
    #allocation4 [shape = 'u8[1024]{0}', space=vmem, size = 0x400, scoped, tag = 'output window, operand 0']
    #allocation5 [shape = 's32[2]{0}', space=sflag, size = 0x8, scoped, tag = 'scoped memory for tpu_custom_call.1']
    %17 = vsyncpa [#allocation5], 0
    %s18 = scalar_lea.sflag [#allocation5], 1
    %19 = vsyncpa %s18, 0
    loop: start=0, step=1, limit=6
    $region2: #{tpu_custom_call.1} parent=1 // loop_pre_header
      _
    $region3: #{tpu_custom_call.1} parent=1 // loop_header
      %s21 = sphi 0, %s25
      %p22 = scmp.ge.s32.totalorder %s21, 6
      %s31 = sphi 0, %s33
      %s34 = sphi 0, %s31
      %s35 = sphi 0, %s34
      %s51 = sphi 0, %s35
      %s55 = sphi 0, %s55
      %s57 = sphi 0, %s55
      %s58 = sphi 0, %s57
      %s72 = sphi 0, %s58
      %s76 = sphi 0, %s76
      %s78 = sphi 0, %s76
      %s79 = sphi 0, %s78
      %s93 = sphi 0, %s79
      %s97 = sphi 0, %s97
      %s99 = sphi 0, %s97
      %s100 = sphi 0, %s99
      %s114 = sphi 0, %s100
      %s118 = sphi 0, %s118
      %s120 = sphi 0, %s118
      %s121 = sphi 0, %s120
      %s135 = sphi 0, %s121
      %s139 = sphi 0, %s139
      %s141 = sphi 0, %s139
      %s142 = sphi 0, %s141
      %s156 = sphi 0, %s142
      %s160 = sphi 0, %s160
      %s162 = sphi 0, %s160
      %s163 = sphi 0, %s162
      %s177 = sphi 0, %s163
      %s181 = sphi 0, %s181
      %s183 = sphi 0, %s181
      %s184 = sphi 0, %s183
      %s198 = sphi 0, %s184
      %s202 = sphi 0, %s202
      %s204 = sphi 0, %s202
      %s205 = sphi 0, %s204
      %s219 = sphi 0, %s205
      %s223 = sphi 0, %s223
      %s225 = sphi 0, %s223
      %s226 = sphi 0, %s225
      %s240 = sphi 0, %s226
      %s244 = sphi 0, %s244
      %s246 = sphi 0, %s244
      %s247 = sphi 0, %s246
      %s261 = sphi 0, %s247
      %s267 = sphi 0, %s269
      %s270 = sphi 0, %s267
      %s271 = sphi 0, %s270
      %s287 = sphi 0, %s271
    $region4: #{tpu_custom_call.1} parent=1 // loop_header_branch
      %24 = sbr.rel (%p22) target = $region8
    $region5: #{tpu_custom_call.1} parent=1 // loop_body
      %s26 = ssub.s32 %s21, 1
      %s27 = ssub.s32 %s21, 2
      %s28 = sadd.s32 %s21, 1
      %s29 = ssub.s32 %s21, %s28
      %p30 = scmp.eq.s32.totalorder %s29, 0
      %s32 = sadd.s32 %s31, 1
      %s33 = scalar_select %p30, %s31, %s32
      %p36 = pneg %p30
      %p37 = scmp.eq.s32.totalorder %s21, 3
      %p38 = por %p36, %p37
      %p39 = scmp.ne.s32.totalorder %s31, %s34
      %p40 = scmp.eq.s32.totalorder %s21, 0
      %p41 = por %p39, %p40
      %p42 = scmp.ne.s32.totalorder %s31, %s34
      %p43 = scmp.eq.s32.totalorder %s26, 3
      %p44 = por %p42, %p43
      %p45 = scmp.ne.s32.totalorder %s34, %s35
      %p46 = scmp.eq.s32.totalorder %s26, 0
      %p47 = por %p45, %p46
      %p48 = scmp.ne.s32.totalorder %s34, %s35
      %p49 = scmp.eq.s32.totalorder %s27, 3
      %p50 = por %p48, %p49
      %p52 = scmp.ne.s32.totalorder %s35, %s51
      %p53 = scmp.eq.s32.totalorder %s27, 0
      %p54 = por %p52, %p53
      %s56 = sadd.s32 %s55, 1
      %p59 = scmp.eq.s32.totalorder %s21, 3
      %p60 = scmp.ne.s32.totalorder %s55, %s57
      %p61 = scmp.eq.s32.totalorder %s21, 0
      %p62 = por %p60, %p61
      %p63 = scmp.ne.s32.totalorder %s55, %s57
      %p64 = scmp.eq.s32.totalorder %s26, 3
      %p65 = por %p63, %p64
      %p66 = scmp.ne.s32.totalorder %s57, %s58
      %p67 = scmp.eq.s32.totalorder %s26, 0
      %p68 = por %p66, %p67
      %p69 = scmp.ne.s32.totalorder %s57, %s58
      %p70 = scmp.eq.s32.totalorder %s27, 3
      %p71 = por %p69, %p70
      %p73 = scmp.ne.s32.totalorder %s58, %s72
      %p74 = scmp.eq.s32.totalorder %s27, 0
      %p75 = por %p73, %p74
      %s77 = sadd.s32 %s76, 1
      %p80 = scmp.eq.s32.totalorder %s21, 3
      %p81 = scmp.ne.s32.totalorder %s76, %s78
      %p82 = scmp.eq.s32.totalorder %s21, 0
      %p83 = por %p81, %p82
      %p84 = scmp.ne.s32.totalorder %s76, %s78
      %p85 = scmp.eq.s32.totalorder %s26, 3
      %p86 = por %p84, %p85
      %p87 = scmp.ne.s32.totalorder %s78, %s79
      %p88 = scmp.eq.s32.totalorder %s26, 0
      %p89 = por %p87, %p88
      %p90 = scmp.ne.s32.totalorder %s78, %s79
      %p91 = scmp.eq.s32.totalorder %s27, 3
      %p92 = por %p90, %p91
      %p94 = scmp.ne.s32.totalorder %s79, %s93
      %p95 = scmp.eq.s32.totalorder %s27, 0
      %p96 = por %p94, %p95
      %s98 = sadd.s32 %s97, 1
      %p101 = scmp.eq.s32.totalorder %s21, 3
      %p102 = scmp.ne.s32.totalorder %s97, %s99
      %p103 = scmp.eq.s32.totalorder %s21, 0
      %p104 = por %p102, %p103
      %p105 = scmp.ne.s32.totalorder %s97, %s99
      %p106 = scmp.eq.s32.totalorder %s26, 3
      %p107 = por %p105, %p106
      %p108 = scmp.ne.s32.totalorder %s99, %s100
      %p109 = scmp.eq.s32.totalorder %s26, 0
      %p110 = por %p108, %p109
      %p111 = scmp.ne.s32.totalorder %s99, %s100
      %p112 = scmp.eq.s32.totalorder %s27, 3
      %p113 = por %p111, %p112
      %p115 = scmp.ne.s32.totalorder %s100, %s114
      %p116 = scmp.eq.s32.totalorder %s27, 0
      %p117 = por %p115, %p116
      %s119 = sadd.s32 %s118, 1
      %p122 = scmp.eq.s32.totalorder %s21, 3
      %p123 = scmp.ne.s32.totalorder %s118, %s120
      %p124 = scmp.eq.s32.totalorder %s21, 0
      %p125 = por %p123, %p124
      %p126 = scmp.ne.s32.totalorder %s118, %s120
      %p127 = scmp.eq.s32.totalorder %s26, 3
      %p128 = por %p126, %p127
      %p129 = scmp.ne.s32.totalorder %s120, %s121
      %p130 = scmp.eq.s32.totalorder %s26, 0
      %p131 = por %p129, %p130
      %p132 = scmp.ne.s32.totalorder %s120, %s121
      %p133 = scmp.eq.s32.totalorder %s27, 3
      %p134 = por %p132, %p133
      %p136 = scmp.ne.s32.totalorder %s121, %s135
      %p137 = scmp.eq.s32.totalorder %s27, 0
      %p138 = por %p136, %p137
      %s140 = sadd.s32 %s139, 1
      %p143 = scmp.eq.s32.totalorder %s21, 3
      %p144 = scmp.ne.s32.totalorder %s139, %s141
      %p145 = scmp.eq.s32.totalorder %s21, 0
      %p146 = por %p144, %p145
      %p147 = scmp.ne.s32.totalorder %s139, %s141
      %p148 = scmp.eq.s32.totalorder %s26, 3
      %p149 = por %p147, %p148
      %p150 = scmp.ne.s32.totalorder %s141, %s142
      %p151 = scmp.eq.s32.totalorder %s26, 0
      %p152 = por %p150, %p151
      %p153 = scmp.ne.s32.totalorder %s141, %s142
      %p154 = scmp.eq.s32.totalorder %s27, 3
      %p155 = por %p153, %p154
      %p157 = scmp.ne.s32.totalorder %s142, %s156
      %p158 = scmp.eq.s32.totalorder %s27, 0
      %p159 = por %p157, %p158
      %s161 = sadd.s32 %s160, 1
      %p164 = scmp.eq.s32.totalorder %s21, 3
      %p165 = scmp.ne.s32.totalorder %s160, %s162
      %p166 = scmp.eq.s32.totalorder %s21, 0
      %p167 = por %p165, %p166
      %p168 = scmp.ne.s32.totalorder %s160, %s162
      %p169 = scmp.eq.s32.totalorder %s26, 3
      %p170 = por %p168, %p169
      %p171 = scmp.ne.s32.totalorder %s162, %s163
      %p172 = scmp.eq.s32.totalorder %s26, 0
      %p173 = por %p171, %p172
      %p174 = scmp.ne.s32.totalorder %s162, %s163
      %p175 = scmp.eq.s32.totalorder %s27, 3
      %p176 = por %p174, %p175
      %p178 = scmp.ne.s32.totalorder %s163, %s177
      %p179 = scmp.eq.s32.totalorder %s27, 0
      %p180 = por %p178, %p179
      %s182 = sadd.s32 %s181, 1
      %p185 = scmp.eq.s32.totalorder %s21, 3
      %p186 = scmp.ne.s32.totalorder %s181, %s183
      %p187 = scmp.eq.s32.totalorder %s21, 0
      %p188 = por %p186, %p187
      %p189 = scmp.ne.s32.totalorder %s181, %s183
      %p190 = scmp.eq.s32.totalorder %s26, 3
      %p191 = por %p189, %p190
      %p192 = scmp.ne.s32.totalorder %s183, %s184
      %p193 = scmp.eq.s32.totalorder %s26, 0
      %p194 = por %p192, %p193
      %p195 = scmp.ne.s32.totalorder %s183, %s184
      %p196 = scmp.eq.s32.totalorder %s27, 3
      %p197 = por %p195, %p196
      %p199 = scmp.ne.s32.totalorder %s184, %s198
      %p200 = scmp.eq.s32.totalorder %s27, 0
      %p201 = por %p199, %p200
      %s203 = sadd.s32 %s202, 1
      %p206 = scmp.eq.s32.totalorder %s21, 3
      %p207 = scmp.ne.s32.totalorder %s202, %s204
      %p208 = scmp.eq.s32.totalorder %s21, 0
      %p209 = por %p207, %p208
      %p210 = scmp.ne.s32.totalorder %s202, %s204
      %p211 = scmp.eq.s32.totalorder %s26, 3
      %p212 = por %p210, %p211
      %p213 = scmp.ne.s32.totalorder %s204, %s205
      %p214 = scmp.eq.s32.totalorder %s26, 0
      %p215 = por %p213, %p214
      %p216 = scmp.ne.s32.totalorder %s204, %s205
      %p217 = scmp.eq.s32.totalorder %s27, 3
      %p218 = por %p216, %p217
      %p220 = scmp.ne.s32.totalorder %s205, %s219
      %p221 = scmp.eq.s32.totalorder %s27, 0
      %p222 = por %p220, %p221
      %s224 = sadd.s32 %s223, 1
      %p227 = scmp.eq.s32.totalorder %s21, 3
      %p228 = scmp.ne.s32.totalorder %s223, %s225
      %p229 = scmp.eq.s32.totalorder %s21, 0
      %p230 = por %p228, %p229
      %p231 = scmp.ne.s32.totalorder %s223, %s225
      %p232 = scmp.eq.s32.totalorder %s26, 3
      %p233 = por %p231, %p232
      %p234 = scmp.ne.s32.totalorder %s225, %s226
      %p235 = scmp.eq.s32.totalorder %s26, 0
      %p236 = por %p234, %p235
      %p237 = scmp.ne.s32.totalorder %s225, %s226
      %p238 = scmp.eq.s32.totalorder %s27, 3
      %p239 = por %p237, %p238
      %p241 = scmp.ne.s32.totalorder %s226, %s240
      %p242 = scmp.eq.s32.totalorder %s27, 0
      %p243 = por %p241, %p242
      %s245 = sadd.s32 %s244, 1
      %p248 = scmp.eq.s32.totalorder %s21, 3
      %p249 = scmp.ne.s32.totalorder %s244, %s246
      %p250 = scmp.eq.s32.totalorder %s21, 0
      %p251 = por %p249, %p250
      %p252 = scmp.ne.s32.totalorder %s244, %s246
      %p253 = scmp.eq.s32.totalorder %s26, 3
      %p254 = por %p252, %p253
      %p255 = scmp.ne.s32.totalorder %s246, %s247
      %p256 = scmp.eq.s32.totalorder %s26, 0
      %p257 = por %p255, %p256
      %p258 = scmp.ne.s32.totalorder %s246, %s247
      %p259 = scmp.eq.s32.totalorder %s27, 3
      %p260 = por %p258, %p259
      %p262 = scmp.ne.s32.totalorder %s247, %s261
      %p263 = scmp.eq.s32.totalorder %s27, 0
      %p264 = por %p262, %p263
      %s265 = ssub.s32 %s21, %s28
      %p266 = scmp.eq.s32.totalorder %s265, 0
      %s268 = sadd.s32 %s267, 1
      %s269 = scalar_select %p266, %s267, %s268
      %p272 = pneg %p266
      %p273 = scmp.eq.s32.totalorder %s21, 3
      %p274 = por %p272, %p273
      %p275 = scmp.ne.s32.totalorder %s267, %s270
      %p276 = scmp.eq.s32.totalorder %s21, 0
      %p277 = por %p275, %p276
      %p278 = scmp.ne.s32.totalorder %s267, %s270
      %p279 = scmp.eq.s32.totalorder %s26, 3
      %p280 = por %p278, %p279
      %p281 = scmp.ne.s32.totalorder %s270, %s271
      %p282 = scmp.eq.s32.totalorder %s26, 0
      %p283 = por %p281, %p282
      %p284 = scmp.ne.s32.totalorder %s270, %s271
      %p285 = scmp.eq.s32.totalorder %s27, 3
      %p286 = por %p284, %p285
      %p288 = scmp.ne.s32.totalorder %s271, %s287
      %p289 = scmp.eq.s32.totalorder %s27, 0
      %p290 = por %p288, %p289
      %p291 = scmp.le.s32.totalorder 1, %s21
      %p292 = scmp.lt.s32.totalorder %s21, 5
      %p293 = pnand %p291, %p292
      %p294 = pneg %p293
      // Predicated region
      $region9: #{tpu_custom_call.1} parent=5 // pred_check
        _
      $region10: #{tpu_custom_call.1} parent=5 // pred_check_branch
        %296 = sbr.rel (%p293) target = $region12
      $region11: #{tpu_custom_call.1} parent=5 // pred_region
        %s297 = ssub.s32 %s21, 1
        // Predicated region
        $region13: #{tpu_custom_call.1} parent=11 // pred_check
          %p298 = pneg %p68
        $region14: #{tpu_custom_call.1} parent=11 // pred_check_branch
          %300 = sbr.rel (%p298) target = $region16
        $region15: #{tpu_custom_call.1} parent=11 // pred_region
          _
        $region16: #{tpu_custom_call.1} parent=11 // pred_fallthru
          _
        // Predicated region
        $region17: #{tpu_custom_call.1} parent=11 // pred_check
          %p301 = pneg %p89
        $region18: #{tpu_custom_call.1} parent=11 // pred_check_branch
          %303 = sbr.rel (%p301) target = $region20
        $region19: #{tpu_custom_call.1} parent=11 // pred_region
          _
        $region20: #{tpu_custom_call.1} parent=11 // pred_fallthru
          _
        // Predicated region
        $region21: #{tpu_custom_call.1} parent=11 // pred_check
          %p304 = pneg %p110
        $region22: #{tpu_custom_call.1} parent=11 // pred_check_branch
          %306 = sbr.rel (%p304) target = $region24
        $region23: #{tpu_custom_call.1} parent=11 // pred_region
          _
        $region24: #{tpu_custom_call.1} parent=11 // pred_fallthru
          _
        // Predicated region
        $region25: #{tpu_custom_call.1} parent=11 // pred_check
          %p307 = pneg %p131
        $region26: #{tpu_custom_call.1} parent=11 // pred_check_branch
          %309 = sbr.rel (%p307) target = $region28
        $region27: #{tpu_custom_call.1} parent=11 // pred_region
          _
        $region28: #{tpu_custom_call.1} parent=11 // pred_fallthru
          _
        // Predicated region
        $region29: #{tpu_custom_call.1} parent=11 // pred_check
          %p310 = pneg %p152
        $region30: #{tpu_custom_call.1} parent=11 // pred_check_branch
          %312 = sbr.rel (%p310) target = $region32
        $region31: #{tpu_custom_call.1} parent=11 // pred_region
          _
        $region32: #{tpu_custom_call.1} parent=11 // pred_fallthru
          _
        // Predicated region
        $region33: #{tpu_custom_call.1} parent=11 // pred_check
          %p313 = pneg %p173
        $region34: #{tpu_custom_call.1} parent=11 // pred_check_branch
          %315 = sbr.rel (%p313) target = $region36
        $region35: #{tpu_custom_call.1} parent=11 // pred_region
          _
        $region36: #{tpu_custom_call.1} parent=11 // pred_fallthru
          _
        // Predicated region
        $region37: #{tpu_custom_call.1} parent=11 // pred_check
          %p316 = pneg %p194
        $region38: #{tpu_custom_call.1} parent=11 // pred_check_branch
          %318 = sbr.rel (%p316) target = $region40
        $region39: #{tpu_custom_call.1} parent=11 // pred_region
          _
        $region40: #{tpu_custom_call.1} parent=11 // pred_fallthru
          _
        // Predicated region
        $region41: #{tpu_custom_call.1} parent=11 // pred_check
          %p319 = pneg %p215
        $region42: #{tpu_custom_call.1} parent=11 // pred_check_branch
          %321 = sbr.rel (%p319) target = $region44
        $region43: #{tpu_custom_call.1} parent=11 // pred_region
          _
        $region44: #{tpu_custom_call.1} parent=11 // pred_fallthru
          _
        // Predicated region
        $region45: #{tpu_custom_call.1} parent=11 // pred_check
          %p322 = pneg %p236
        $region46: #{tpu_custom_call.1} parent=11 // pred_check_branch
          %324 = sbr.rel (%p322) target = $region48
        $region47: #{tpu_custom_call.1} parent=11 // pred_region
          _
        $region48: #{tpu_custom_call.1} parent=11 // pred_fallthru
          _
        // Predicated region
        $region49: #{tpu_custom_call.1} parent=11 // pred_check
          %p325 = pneg %p257
        $region50: #{tpu_custom_call.1} parent=11 // pred_check_branch
          %327 = sbr.rel (%p325) target = $region52
        $region51: #{tpu_custom_call.1} parent=11 // pred_region
          _
        $region52: #{tpu_custom_call.1} parent=11 // pred_fallthru
          _
      $region12: #{tpu_custom_call.1} parent=5 // pred_fallthru
        _
      %p328 = scmp.lt.s32.totalorder %s21, 4
      // Predicated region
      $region53: #{tpu_custom_call.1} parent=5 // pred_check
        %p329 = pneg %p328
      $region54: #{tpu_custom_call.1} parent=5 // pred_check_branch
        %331 = sbr.rel (%p329) target = $region56
      $region55: #{tpu_custom_call.1} parent=5 // pred_region
        // Predicated region
        $region57: #{tpu_custom_call.1} parent=55 // pred_check
          %p332 = pneg %p41
        $region58: #{tpu_custom_call.1} parent=55 // pred_check_branch
          %334 = sbr.rel (%p332) target = $region60
        $region59: #{tpu_custom_call.1} parent=55 // pred_region
          %s335 = sand.u32 %s31, 1
          %s336 = sand.u32 %s31, 1
          %s337 = smul.addr %s336, 8
          %s338 = scalar_lea.vmem [#allocation3], %s337
          %s339 = smul.addr %s21, 4
          %s340 = scalar_lea.vmem %s0, %s339
          // Predicated region
          $region61: #{tpu_custom_call.1} parent=59 // pred_check
            _
          $region62: #{tpu_custom_call.1} parent=59 // pred_check_branch
            %342 = sbr.rel (0) target = $region64
          $region63: #{tpu_custom_call.1} parent=59 // pred_region
            // Predicated region
            $region65: #{tpu_custom_call.1} parent=63 // pred_check
              _
            $region66: #{tpu_custom_call.1} parent=63 // pred_check_branch
              %344 = sbr.rel target = $region68
            $region67: #{tpu_custom_call.1} parent=63 // pred_region
              // Predicated region
              $region80: #{tpu_custom_call.1} parent=67 // pred_check
                _
              $region81: #{tpu_custom_call.1} parent=67 // pred_check_branch
                %361 = sbr.rel (0) target = $region83
              $region82: #{tpu_custom_call.1} parent=67 // pred_region
                loop: start=0, step=1, limit=1
                $region84: #{tpu_custom_call.1} parent=82 // loop_pre_header
                  _
                $region85: #{tpu_custom_call.1} parent=82 // loop_header
                  %s363 = sphi 0, %s367
                  %p364 = scmp.ge.s32.totalorder %s363, 1
                  %s368 = sphi %s340, %s340
                  %s369 = sphi %s338, %s338
                $region86: #{tpu_custom_call.1} parent=82 // loop_header_branch
                  %366 = sbr.rel (%p364) target = $region90
                $region87: #{tpu_custom_call.1} parent=82 // loop_body
                  _
                $region88: #{tpu_custom_call.1} parent=82 // loop_footer
                  %s367 = sadd.s32 1, %s363
                $region89: #{tpu_custom_call.1} parent=82 // loop_footer_branch
                  %362 = sbr.rel target = $region85
                $region90: #{tpu_custom_call.1} parent=82 // loop_exit
                  _
                loop: start=0, step=1, limit=1
                $region91: #{tpu_custom_call.1} parent=82 // loop_pre_header
                  _
                $region92: #{tpu_custom_call.1} parent=82 // loop_header
                  %s372 = sphi 0, %s376
                  %p373 = scmp.ge.s32.totalorder %s372, 1
                  %s377 = sphi %s340, %s340
                  %s378 = sphi %s338, %s338
                $region93: #{tpu_custom_call.1} parent=82 // loop_header_branch
                  %375 = sbr.rel (%p373) target = $region97
                $region94: #{tpu_custom_call.1} parent=82 // loop_body
                  %v379 = vld [vmem:[%s377] sm:$0xf]
                  %380 = vst [vmem:[%s378] sm:$0xf] %v379
                  %v381 = vld [vmem:[%s377 + $0x10] sm:$0xf]
                  %382 = vst [vmem:[%s378 + $0x4] sm:$0xf] %v381
                $region95: #{tpu_custom_call.1} parent=82 // loop_footer
                  %s376 = sadd.s32 1, %s372
                $region96: #{tpu_custom_call.1} parent=82 // loop_footer_branch
                  %371 = sbr.rel target = $region92
                $region97: #{tpu_custom_call.1} parent=82 // loop_exit
                  _
              $region83: #{tpu_custom_call.1} parent=67 // pred_fallthru
                _
            $region68: #{tpu_custom_call.1} parent=63 // pred_fallthru
              _
            // Predicated region
            $region69: #{tpu_custom_call.1} parent=63 // pred_check
              _
            $region70: #{tpu_custom_call.1} parent=63 // pred_check_branch
              %346 = sbr.rel (0) target = $region72
            $region71: #{tpu_custom_call.1} parent=63 // pred_region
              loop: start=0, step=1, limit=1
              $region73: #{tpu_custom_call.1} parent=71 // loop_pre_header
                _
              $region74: #{tpu_custom_call.1} parent=71 // loop_header
                %s349 = sphi 0, %s353
                %p350 = scmp.ge.s32.totalorder %s349, 1
                %s354 = sphi %s340, %s340
                %s355 = sphi %s338, %s338
              $region75: #{tpu_custom_call.1} parent=71 // loop_header_branch
                %352 = sbr.rel (%p350) target = $region79
              $region76: #{tpu_custom_call.1} parent=71 // loop_body
                %v356 = vld [vmem:[%s354] sm:$0xf]
                %357 = vst [vmem:[%s355] sm:$0xf] %v356
                %v358 = vld [vmem:[%s354 + $0x10] sm:$0xf]
                %359 = vst [vmem:[%s355 + $0x4] sm:$0xf] %v358
              $region77: #{tpu_custom_call.1} parent=71 // loop_footer
                %s353 = sadd.s32 1, %s349
              $region78: #{tpu_custom_call.1} parent=71 // loop_footer_branch
                %348 = sbr.rel target = $region74
              $region79: #{tpu_custom_call.1} parent=71 // loop_exit
                _
            $region72: #{tpu_custom_call.1} parent=63 // pred_fallthru
              _
          $region64: #{tpu_custom_call.1} parent=59 // pred_fallthru
            _
          %383 = vnop
        $region60: #{tpu_custom_call.1} parent=55 // pred_fallthru
          _
      $region56: #{tpu_custom_call.1} parent=5 // pred_fallthru
        _
      %p384 = scmp.le.s32.totalorder 1, %s21
      %p385 = scmp.lt.s32.totalorder %s21, 5
      %p386 = pnand %p384, %p385
      %p387 = pneg %p386
      // Predicated region
      $region98: #{tpu_custom_call.1} parent=5 // pred_check
        _
      $region99: #{tpu_custom_call.1} parent=5 // pred_check_branch
        %389 = sbr.rel (%p386) target = $region101
      $region100: #{tpu_custom_call.1} parent=5 // pred_region
        %s390 = ssub.s32 %s21, 1
        %s391 = sand.u32 %s34, 1
        %s392 = sand.u32 %s34, 1
        %s393 = smul.addr %s392, 8
        %s394 = scalar_lea.vmem [#allocation3], %s393
        // Predicated region
        $region102: #{tpu_custom_call.1} parent=100 // pred_check
          %p395 = pneg %p47
        $region103: #{tpu_custom_call.1} parent=100 // pred_check_branch
          %397 = sbr.rel (%p395) target = $region105
        $region104: #{tpu_custom_call.1} parent=100 // pred_region
          _
        $region105: #{tpu_custom_call.1} parent=100 // pred_fallthru
          _
        %s398 = sand.u32 %s34, 1
        %s399 = sand.u32 %s34, 1
        %s400 = smul.addr %s399, 8
        %s401 = scalar_lea.vmem [#allocation3], %s400
        %p402 = pneg %p47
        %p403 = pneg %p44
        %p404 = pneg %p68
        %p405 = pneg %p65
        %p406 = pneg %p89
        %p407 = pneg %p86
        %p408 = pneg %p110
        %p409 = pneg %p107
        %p410 = pneg %p131
        %p411 = pneg %p128
        %p412 = pneg %p152
        %p413 = pneg %p149
        %p414 = pneg %p173
        %p415 = pneg %p170
        %p416 = pneg %p194
        %p417 = pneg %p191
        %p418 = pneg %p215
        %p419 = pneg %p212
        %p420 = pneg %p236
        %p421 = pneg %p233
        %p422 = pneg %p257
        %p423 = pneg %p254
        %p424 = pneg %p283
        %p425 = pneg %p280
        %s426 = sand.u32 %s270, 1
        %s427 = scalar_lea.sflag [#allocation5], %s426
        %s428 = sand.u32 %s270, 1
        %s429 = scalar_lea.vmem [#allocation4], %s428
        %v431 = vld [vmem:[%s1] sm:$0xf]
        %v432 = vld [vmem:[%s1 + $0x4] sm:$0xf]
        %v433 = vld [vmem:[%s1 + $0x8] sm:$0xf]
        %v434 = vld [vmem:[%s1 + $0xc] sm:$0xf]
        %v435 = vld [vmem:[%s394] sm:$0xf]
        %v436 = vld [vmem:[%s394 + $0x4] sm:$0xf]
        %v437 = vld [vmem:[%s2] sm:$0xff]
        %v438 = vld [vmem:[%s2 + $0x8] sm:$0xff]
        %v439 = vld [vmem:[%s2 + $0x10] sm:$0xff]
        %v440 = vld [vmem:[%s2 + $0x18] sm:$0xff]
        %442 = vset.pattern.permute.xlu0 0
        %443 = vperm.xlu0 %442, %v437
        %v444 = vpop.permute.xlu0 %443
        %447 = vset.pattern.permute.xlu0 0
        %448 = vperm.xlu0 %447, %v438
        %v449 = vpop.permute.xlu0 %448
        %452 = vset.pattern.permute.xlu0 0
        %453 = vperm.xlu0 %452, %v439
        %v454 = vpop.permute.xlu0 %453
        %457 = vset.pattern.permute.xlu0 0
        %458 = vperm.xlu0 %457, %v440
        %v459 = vpop.permute.xlu0 %458
        %v465 = vunpack.c.l.b16 %v431
        %v466 = vunpack.c.l.b16 %v432
        %v467 = vunpack.c.l.b16 %v433
        %v468 = vunpack.c.l.b16 %v434
        %v469 = vpack.c.b16 %v466, %v465
        %v470 = vpack.c.b16 %v468, %v467
        %v473 = vunpack.c.l.b16 %v435
        %v474 = vunpack.c.l.b16 %v436
        %v475 = vpack.c.b16 %v474, %v473
        %vm477 = vcmask 130048
        %v479 = vsel %vm477, %v469, 0
        %v482 = vsel %vm477, %v470, 0
        %484 = vmatprep.subr.bf16.mxu0 0
        %485 = vmatpush1.bf16.msra.mxu0 %v475
        %486 = vmatprep.subr.bf16.mxu0 0
        %487 = vmatpush1.bf16.msra.mxu0 0
        %488 = vmatprep.subr.bf16.mxu0 0
        %489 = vmatpush1.bf16.msra.mxu0 0
        %490 = vmatprep.subr.bf16.mxu0 0
        %491 = vmatpush1.bf16.msra.mxu0 0
        %492 = vmatprep.subr.bf16.mxu0 0
        %493 = vmatpush1.bf16.msra.mxu0 0
        %494 = vmatprep.subr.bf16.mxu0 0
        %495 = vmatpush1.bf16.msra.mxu0 0
        %496 = vmatprep.subr.bf16.mxu0 0
        %497 = vmatpush1.bf16.msra.mxu0 0
        %498 = vmatprep.subr.bf16.mxu0 0
        %499 = vmatpush1.bf16.msra.mxu0 0
        %500 = vmatprep.subr.bf16.mxu0 0
        %501 = vmatpush1.bf16.msra.mxu0 0
        %502 = vmatprep.subr.bf16.mxu0 0
        %503 = vmatpush1.bf16.msra.mxu0 0
        %504 = vmatprep.subr.bf16.mxu0 0
        %505 = vmatpush1.bf16.msra.mxu0 0
        %506 = vmatprep.subr.bf16.mxu0 0
        %507 = vmatpush1.bf16.msra.mxu0 0
        %508 = vmatprep.subr.bf16.mxu0 0
        %509 = vmatpush1.bf16.msra.mxu0 0
        %510 = vmatprep.subr.bf16.mxu0 0
        %511 = vmatpush1.bf16.msra.mxu0 0
        %512 = vmatprep.subr.bf16.mxu0 0
        %513 = vmatpush1.bf16.msra.mxu0 0
        %514 = vmatprep.subr.bf16.mxu0 0
        %515 = vmatpush1.bf16.msra.mxu0 0
        %516 = vmatprep.mubr.bf16.mxu0 0
        %517 = vmatmul.mubr.bf16.gmra.mrb[0].mxu0 %v479
        %v518 = vpop.f32.mrb[0].mxu0
        %v519 = vadd.f32 %v444, %v518
        %v520 = vpop.f32.mrb[0].mxu0
        %v521 = vpop.f32.mrb[0].mxu0
        %v522 = vadd.f32 %v449, %v521
        %v523 = vpop.f32.mrb[0].mxu0
        %524 = vmatprep.mubr.bf16.mxu0 0
        %525 = vmatmul.mubr.bf16.gmra.mrb[0].mxu0 %v482
        %v526 = vpop.f32.mrb[0].mxu0
        %v527 = vadd.f32 %v454, %v526
        %v528 = vpop.f32.mrb[0].mxu0
        %v529 = vpop.f32.mrb[0].mxu0
        %v530 = vadd.f32 %v459, %v529
        %v531 = vpop.f32.mrb[0].mxu0
        %532 = vdwg.mxu0
        %v533 = vld [vmem:[%s3] sm:$0xf]
        %v534 = vld [vmem:[%s3 + $0x4] sm:$0xf]
        %v535 = vld [vmem:[%s3 + $0x8] sm:$0xf]
        %v536 = vld [vmem:[%s3 + $0xc] sm:$0xf]
        %v537 = vld [vmem:[%s3 + $0x10] sm:$0xf]
        %v538 = vld [vmem:[%s3 + $0x14] sm:$0xf]
        %v539 = vld [vmem:[%s3 + $0x18] sm:$0xf]
        %v540 = vld [vmem:[%s3 + $0x1c] sm:$0xf]
        %v541 = vpack.c.bf16 %v522, %v519
        %v542 = vpack.c.bf16 %v530, %v527
        %v543 = vld [vmem:[%s4] sm:$0xff]
        %v544 = vld [vmem:[%s4 + $0x8] sm:$0xff]
        %v545 = vld [vmem:[%s4 + $0x10] sm:$0xff]
        %v546 = vld [vmem:[%s4 + $0x18] sm:$0xff]
        %v547 = vld [vmem:[%s4 + $0x20] sm:$0xff]
        %v548 = vld [vmem:[%s4 + $0x28] sm:$0xff]
        %v549 = vld [vmem:[%s4 + $0x30] sm:$0xff]
        %v550 = vld [vmem:[%s4 + $0x38] sm:$0xff]
        %552 = vset.pattern.permute.xlu0 0
        %553 = vperm.xlu0 %552, %v543
        %v554 = vpop.permute.xlu0 %553
        %557 = vset.pattern.permute.xlu0 0
        %558 = vperm.xlu0 %557, %v544
        %v559 = vpop.permute.xlu0 %558
        %562 = vset.pattern.permute.xlu0 0
        %563 = vperm.xlu0 %562, %v545
        %v564 = vpop.permute.xlu0 %563
        %567 = vset.pattern.permute.xlu0 0
        %568 = vperm.xlu0 %567, %v546
        %v569 = vpop.permute.xlu0 %568
        %572 = vset.pattern.permute.xlu0 0
        %573 = vperm.xlu0 %572, %v547
        %v574 = vpop.permute.xlu0 %573
        %577 = vset.pattern.permute.xlu0 0
        %578 = vperm.xlu0 %577, %v548
        %v579 = vpop.permute.xlu0 %578
        %582 = vset.pattern.permute.xlu0 0
        %583 = vperm.xlu0 %582, %v549
        %v584 = vpop.permute.xlu0 %583
        %587 = vset.pattern.permute.xlu0 0
        %588 = vperm.xlu0 %587, %v550
        %v589 = vpop.permute.xlu0 %588
        %v599 = vunpack.c.l.b16 %v533
        %v600 = vunpack.c.l.b16 %v534
        %v601 = vunpack.c.l.b16 %v535
        %v602 = vunpack.c.l.b16 %v536
        %v603 = vunpack.c.l.b16 %v537
        %v604 = vunpack.c.l.b16 %v538
        %v605 = vunpack.c.l.b16 %v539
        %v606 = vunpack.c.l.b16 %v540
        %v607 = vpack.c.b16 %v600, %v599
        %v608 = vpack.c.b16 %v602, %v601
        %v609 = vpack.c.b16 %v604, %v603
        %v610 = vpack.c.b16 %v606, %v605
        %vm611 = vcmask 261120
        %v613 = vsel %vm611, %v607, 0
        %v616 = vsel %vm611, %v608, 0
        %v619 = vsel %vm611, %v609, 0
        %v622 = vsel %vm611, %v610, 0
        %624 = vmatprep.subr.bf16.mxu0 0
        %625 = vmatpush1.bf16.msra.mxu0 %v541
        %626 = vmatprep.subr.bf16.mxu0 0
        %627 = vmatpush1.bf16.msra.mxu0 %v542
        %628 = vmatprep.subr.bf16.mxu0 0
        %629 = vmatpush1.bf16.msra.mxu0 0
        %630 = vmatprep.subr.bf16.mxu0 0
        %631 = vmatpush1.bf16.msra.mxu0 0
        %632 = vmatprep.subr.bf16.mxu0 0
        %633 = vmatpush1.bf16.msra.mxu0 0
        %634 = vmatprep.subr.bf16.mxu0 0
        %635 = vmatpush1.bf16.msra.mxu0 0
        %636 = vmatprep.subr.bf16.mxu0 0
        %637 = vmatpush1.bf16.msra.mxu0 0
        %638 = vmatprep.subr.bf16.mxu0 0
        %639 = vmatpush1.bf16.msra.mxu0 0
        %640 = vmatprep.subr.bf16.mxu0 0
        %641 = vmatpush1.bf16.msra.mxu0 0
        %642 = vmatprep.subr.bf16.mxu0 0
        %643 = vmatpush1.bf16.msra.mxu0 0
        %644 = vmatprep.subr.bf16.mxu0 0
        %645 = vmatpush1.bf16.msra.mxu0 0
        %646 = vmatprep.subr.bf16.mxu0 0
        %647 = vmatpush1.bf16.msra.mxu0 0
        %648 = vmatprep.subr.bf16.mxu0 0
        %649 = vmatpush1.bf16.msra.mxu0 0
        %650 = vmatprep.subr.bf16.mxu0 0
        %651 = vmatpush1.bf16.msra.mxu0 0
        %652 = vmatprep.subr.bf16.mxu0 0
        %653 = vmatpush1.bf16.msra.mxu0 0
        %654 = vmatprep.subr.bf16.mxu0 0
        %655 = vmatpush1.bf16.msra.mxu0 0
        %656 = vmatprep.mubr.bf16.mxu0 0
        %657 = vmatmul.mubr.bf16.gmra.mrb[0].mxu0 %v613
        %v658 = vpop.f32.mrb[0].mxu0
        %v659 = vadd.f32 %v554, %v658
        %v660 = vpop.f32.mrb[0].mxu0
        %v661 = vpop.f32.mrb[0].mxu0
        %v662 = vadd.f32 %v559, %v661
        %v663 = vpop.f32.mrb[0].mxu0
        %664 = vmatprep.mubr.bf16.mxu0 0
        %665 = vmatmul.mubr.bf16.gmra.mrb[0].mxu0 %v616
        %v666 = vpop.f32.mrb[0].mxu0
        %v667 = vadd.f32 %v564, %v666
        %v668 = vpop.f32.mrb[0].mxu0
        %v669 = vpop.f32.mrb[0].mxu0
        %v670 = vadd.f32 %v569, %v669
        %v671 = vpop.f32.mrb[0].mxu0
        %672 = vmatprep.mubr.bf16.mxu0 0
        %673 = vmatmul.mubr.bf16.gmra.mrb[0].mxu0 %v619
        %v674 = vpop.f32.mrb[0].mxu0
        %v675 = vadd.f32 %v574, %v674
        %v676 = vpop.f32.mrb[0].mxu0
        %v677 = vpop.f32.mrb[0].mxu0
        %v678 = vadd.f32 %v579, %v677
        %v679 = vpop.f32.mrb[0].mxu0
        %680 = vmatprep.mubr.bf16.mxu0 0
        %681 = vmatmul.mubr.bf16.gmra.mrb[0].mxu0 %v622
        %v682 = vpop.f32.mrb[0].mxu0
        %v683 = vadd.f32 %v584, %v682
        %v684 = vpop.f32.mrb[0].mxu0
        %v685 = vpop.f32.mrb[0].mxu0
        %v686 = vadd.f32 %v589, %v685
        %v687 = vpop.f32.mrb[0].mxu0
        %688 = vdwg.mxu0
        %v689 = vmax.f32 %v659, 0.0
        %v690 = vmax.f32 %v662, 0.0
        %v691 = vmax.f32 %v667, 0.0
        %v692 = vmax.f32 %v670, 0.0
        %v693 = vmax.f32 %v675, 0.0
        %v694 = vmax.f32 %v678, 0.0
        %v695 = vmax.f32 %v683, 0.0
        %v696 = vmax.f32 %v686, 0.0
        %v697 = vld [vmem:[%s5] sm:$0xf]
        %v698 = vld [vmem:[%s5 + $0x4] sm:$0xf]
        %v699 = vld [vmem:[%s5 + $0x8] sm:$0xf]
        %v700 = vld [vmem:[%s5 + $0xc] sm:$0xf]
        %v701 = vpack.c.bf16 %v690, %v689
        %v702 = vpack.c.bf16 %v692, %v691
        %v703 = vpack.c.bf16 %v694, %v693
        %v704 = vpack.c.bf16 %v696, %v695
        %v705 = vld [vmem:[%s6] sm:$0xff]
        %v706 = vld [vmem:[%s6 + $0x8] sm:$0xff]
        %v707 = vld [vmem:[%s6 + $0x10] sm:$0xff]
        %v708 = vld [vmem:[%s6 + $0x18] sm:$0xff]
        %710 = vset.pattern.permute.xlu0 0
        %711 = vperm.xlu0 %710, %v705
        %v712 = vpop.permute.xlu0 %711
        %715 = vset.pattern.permute.xlu0 0
        %716 = vperm.xlu0 %715, %v706
        %v717 = vpop.permute.xlu0 %716
        %720 = vset.pattern.permute.xlu0 0
        %721 = vperm.xlu0 %720, %v707
        %v722 = vpop.permute.xlu0 %721
        %725 = vset.pattern.permute.xlu0 0
        %726 = vperm.xlu0 %725, %v708
        %v727 = vpop.permute.xlu0 %726
        %v733 = vunpack.c.l.b16 %v697
        %v734 = vunpack.c.l.b16 %v698
        %v735 = vunpack.c.l.b16 %v699
        %v736 = vunpack.c.l.b16 %v700
        %v737 = vpack.c.b16 %v734, %v733
        %v738 = vpack.c.b16 %v736, %v735
        %vm739 = vcmask 523264
        %v741 = vsel %vm739, %v737, 0
        %v744 = vsel %vm739, %v738, 0
        %746 = vmatprep.subr.bf16.mxu0 0
        %747 = vmatpush1.bf16.msra.mxu0 %v701
        %748 = vmatprep.subr.bf16.mxu0 0
        %749 = vmatpush1.bf16.msra.mxu0 %v702
        %750 = vmatprep.subr.bf16.mxu0 0
        %751 = vmatpush1.bf16.msra.mxu0 %v703
        %752 = vmatprep.subr.bf16.mxu0 0
        %753 = vmatpush1.bf16.msra.mxu0 %v704
        %754 = vmatprep.subr.bf16.mxu0 0
        %755 = vmatpush1.bf16.msra.mxu0 0
        %756 = vmatprep.subr.bf16.mxu0 0
        %757 = vmatpush1.bf16.msra.mxu0 0
        %758 = vmatprep.subr.bf16.mxu0 0
        %759 = vmatpush1.bf16.msra.mxu0 0
        %760 = vmatprep.subr.bf16.mxu0 0
        %761 = vmatpush1.bf16.msra.mxu0 0
        %762 = vmatprep.subr.bf16.mxu0 0
        %763 = vmatpush1.bf16.msra.mxu0 0
        %764 = vmatprep.subr.bf16.mxu0 0
        %765 = vmatpush1.bf16.msra.mxu0 0
        %766 = vmatprep.subr.bf16.mxu0 0
        %767 = vmatpush1.bf16.msra.mxu0 0
        %768 = vmatprep.subr.bf16.mxu0 0
        %769 = vmatpush1.bf16.msra.mxu0 0
        %770 = vmatprep.subr.bf16.mxu0 0
        %771 = vmatpush1.bf16.msra.mxu0 0
        %772 = vmatprep.subr.bf16.mxu0 0
        %773 = vmatpush1.bf16.msra.mxu0 0
        %774 = vmatprep.subr.bf16.mxu0 0
        %775 = vmatpush1.bf16.msra.mxu0 0
        %776 = vmatprep.subr.bf16.mxu0 0
        %777 = vmatpush1.bf16.msra.mxu0 0
        %778 = vmatprep.mubr.bf16.mxu0 0
        %779 = vmatmul.mubr.bf16.gmra.mrb[0].mxu0 %v741
        %v780 = vpop.f32.mrb[0].mxu0
        %v781 = vadd.f32 %v712, %v780
        %v782 = vpop.f32.mrb[0].mxu0
        %v783 = vpop.f32.mrb[0].mxu0
        %v784 = vadd.f32 %v717, %v783
        %v785 = vpop.f32.mrb[0].mxu0
        %786 = vmatprep.mubr.bf16.mxu0 0
        %787 = vmatmul.mubr.bf16.gmra.mrb[0].mxu0 %v744
        %v788 = vpop.f32.mrb[0].mxu0
        %v789 = vadd.f32 %v722, %v788
        %v790 = vpop.f32.mrb[0].mxu0
        %v791 = vpop.f32.mrb[0].mxu0
        %v792 = vadd.f32 %v727, %v791
        %v793 = vpop.f32.mrb[0].mxu0
        %794 = vdwg.mxu0
        %v795 = vadd.f32 %v519, %v781
        %v796 = vadd.f32 %v522, %v784
        %v797 = vadd.f32 %v527, %v789
        %v798 = vadd.f32 %v530, %v792
        %s799 = scalar_lea.vmem %s3, 32
        %v800 = vld [vmem:[%s799] sm:$0xf]
        %v801 = vld [vmem:[%s799 + $0x4] sm:$0xf]
        %v802 = vld [vmem:[%s799 + $0x8] sm:$0xf]
        %v803 = vld [vmem:[%s799 + $0xc] sm:$0xf]
        %v804 = vld [vmem:[%s799 + $0x10] sm:$0xf]
        %v805 = vld [vmem:[%s799 + $0x14] sm:$0xf]
        %v806 = vld [vmem:[%s799 + $0x18] sm:$0xf]
        %v807 = vld [vmem:[%s799 + $0x1c] sm:$0xf]
        %v808 = vpack.c.bf16 %v796, %v795
        %v809 = vpack.c.bf16 %v798, %v797
        %s810 = scalar_lea.vmem %s4, 64
        %v811 = vld [vmem:[%s810] sm:$0xff]
        %v812 = vld [vmem:[%s810 + $0x8] sm:$0xff]
        %v813 = vld [vmem:[%s810 + $0x10] sm:$0xff]
        %v814 = vld [vmem:[%s810 + $0x18] sm:$0xff]
        %v815 = vld [vmem:[%s810 + $0x20] sm:$0xff]
        %v816 = vld [vmem:[%s810 + $0x28] sm:$0xff]
        %v817 = vld [vmem:[%s810 + $0x30] sm:$0xff]
        %v818 = vld [vmem:[%s810 + $0x38] sm:$0xff]
        %820 = vset.pattern.permute.xlu0 0
        %821 = vperm.xlu0 %820, %v811
        %v822 = vpop.permute.xlu0 %821
        %825 = vset.pattern.permute.xlu0 0
        %826 = vperm.xlu0 %825, %v812
        %v827 = vpop.permute.xlu0 %826
        %830 = vset.pattern.permute.xlu0 0
        %831 = vperm.xlu0 %830, %v813
        %v832 = vpop.permute.xlu0 %831
        %835 = vset.pattern.permute.xlu0 0
        %836 = vperm.xlu0 %835, %v814
        %v837 = vpop.permute.xlu0 %836
        %840 = vset.pattern.permute.xlu0 0
        %841 = vperm.xlu0 %840, %v815
        %v842 = vpop.permute.xlu0 %841
        %845 = vset.pattern.permute.xlu0 0
        %846 = vperm.xlu0 %845, %v816
        %v847 = vpop.permute.xlu0 %846
        %850 = vset.pattern.permute.xlu0 0
        %851 = vperm.xlu0 %850, %v817
        %v852 = vpop.permute.xlu0 %851
        %855 = vset.pattern.permute.xlu0 0
        %856 = vperm.xlu0 %855, %v818
        %v857 = vpop.permute.xlu0 %856
        %v867 = vunpack.c.l.b16 %v800
        %v868 = vunpack.c.l.b16 %v801
        %v869 = vunpack.c.l.b16 %v802
        %v870 = vunpack.c.l.b16 %v803
        %v871 = vunpack.c.l.b16 %v804
        %v872 = vunpack.c.l.b16 %v805
        %v873 = vunpack.c.l.b16 %v806
        %v874 = vunpack.c.l.b16 %v807
        %v875 = vpack.c.b16 %v868, %v867
        %v876 = vpack.c.b16 %v870, %v869
        %v877 = vpack.c.b16 %v872, %v871
        %v878 = vpack.c.b16 %v874, %v873
        %v880 = vsel %vm611, %v875, 0
        %v883 = vsel %vm611, %v876, 0
        %v886 = vsel %vm611, %v877, 0
        %v889 = vsel %vm611, %v878, 0
        %891 = vmatprep.subr.bf16.mxu0 0
        %892 = vmatpush1.bf16.msra.mxu0 %v808
        %893 = vmatprep.subr.bf16.mxu0 0
        %894 = vmatpush1.bf16.msra.mxu0 %v809
        %895 = vmatprep.subr.bf16.mxu0 0
        %896 = vmatpush1.bf16.msra.mxu0 0
        %897 = vmatprep.subr.bf16.mxu0 0
        %898 = vmatpush1.bf16.msra.mxu0 0
        %899 = vmatprep.subr.bf16.mxu0 0
        %900 = vmatpush1.bf16.msra.mxu0 0
        %901 = vmatprep.subr.bf16.mxu0 0
        %902 = vmatpush1.bf16.msra.mxu0 0
        %903 = vmatprep.subr.bf16.mxu0 0
        %904 = vmatpush1.bf16.msra.mxu0 0
        %905 = vmatprep.subr.bf16.mxu0 0
        %906 = vmatpush1.bf16.msra.mxu0 0
        %907 = vmatprep.subr.bf16.mxu0 0
        %908 = vmatpush1.bf16.msra.mxu0 0
        %909 = vmatprep.subr.bf16.mxu0 0
        %910 = vmatpush1.bf16.msra.mxu0 0
        %911 = vmatprep.subr.bf16.mxu0 0
        %912 = vmatpush1.bf16.msra.mxu0 0
        %913 = vmatprep.subr.bf16.mxu0 0
        %914 = vmatpush1.bf16.msra.mxu0 0
        %915 = vmatprep.subr.bf16.mxu0 0
        %916 = vmatpush1.bf16.msra.mxu0 0
        %917 = vmatprep.subr.bf16.mxu0 0
        %918 = vmatpush1.bf16.msra.mxu0 0
        %919 = vmatprep.subr.bf16.mxu0 0
        %920 = vmatpush1.bf16.msra.mxu0 0
        %921 = vmatprep.subr.bf16.mxu0 0
        %922 = vmatpush1.bf16.msra.mxu0 0
        %923 = vmatprep.mubr.bf16.mxu0 0
        %924 = vmatmul.mubr.bf16.gmra.mrb[0].mxu0 %v880
        %v925 = vpop.f32.mrb[0].mxu0
        %v926 = vadd.f32 %v822, %v925
        %v927 = vpop.f32.mrb[0].mxu0
        %v928 = vpop.f32.mrb[0].mxu0
        %v929 = vadd.f32 %v827, %v928
        %v930 = vpop.f32.mrb[0].mxu0
        %931 = vmatprep.mubr.bf16.mxu0 0
        %932 = vmatmul.mubr.bf16.gmra.mrb[0].mxu0 %v883
        %v933 = vpop.f32.mrb[0].mxu0
        %v934 = vadd.f32 %v832, %v933
        %v935 = vpop.f32.mrb[0].mxu0
        %v936 = vpop.f32.mrb[0].mxu0
        %v937 = vadd.f32 %v837, %v936
        %v938 = vpop.f32.mrb[0].mxu0
        %939 = vmatprep.mubr.bf16.mxu0 0
        %940 = vmatmul.mubr.bf16.gmra.mrb[0].mxu0 %v886
        %v941 = vpop.f32.mrb[0].mxu0
        %v942 = vadd.f32 %v842, %v941
        %v943 = vpop.f32.mrb[0].mxu0
        %v944 = vpop.f32.mrb[0].mxu0
        %v945 = vadd.f32 %v847, %v944
        %v946 = vpop.f32.mrb[0].mxu0
        %947 = vmatprep.mubr.bf16.mxu0 0
        %948 = vmatmul.mubr.bf16.gmra.mrb[0].mxu0 %v889
        %v949 = vpop.f32.mrb[0].mxu0
        %v950 = vadd.f32 %v852, %v949
        %v951 = vpop.f32.mrb[0].mxu0
        %v952 = vpop.f32.mrb[0].mxu0
        %v953 = vadd.f32 %v857, %v952
        %v954 = vpop.f32.mrb[0].mxu0
        %955 = vdwg.mxu0
        %v956 = vmax.f32 %v926, 0.0
        %v957 = vmax.f32 %v929, 0.0
        %v958 = vmax.f32 %v934, 0.0
        %v959 = vmax.f32 %v937, 0.0
        %v960 = vmax.f32 %v942, 0.0
        %v961 = vmax.f32 %v945, 0.0
        %v962 = vmax.f32 %v950, 0.0
        %v963 = vmax.f32 %v953, 0.0
        %s964 = scalar_lea.vmem %s5, 16
        %v965 = vld [vmem:[%s964] sm:$0xf]
        %v966 = vld [vmem:[%s964 + $0x4] sm:$0xf]
        %v967 = vld [vmem:[%s964 + $0x8] sm:$0xf]
        %v968 = vld [vmem:[%s964 + $0xc] sm:$0xf]
        %v969 = vpack.c.bf16 %v957, %v956
        %v970 = vpack.c.bf16 %v959, %v958
        %v971 = vpack.c.bf16 %v961, %v960
        %v972 = vpack.c.bf16 %v963, %v962
        %s973 = scalar_lea.vmem %s6, 32
        %v974 = vld [vmem:[%s973] sm:$0xff]
        %v975 = vld [vmem:[%s973 + $0x8] sm:$0xff]
        %v976 = vld [vmem:[%s973 + $0x10] sm:$0xff]
        %v977 = vld [vmem:[%s973 + $0x18] sm:$0xff]
        %979 = vset.pattern.permute.xlu0 0
        %980 = vperm.xlu0 %979, %v974
        %v981 = vpop.permute.xlu0 %980
        %984 = vset.pattern.permute.xlu0 0
        %985 = vperm.xlu0 %984, %v975
        %v986 = vpop.permute.xlu0 %985
        %989 = vset.pattern.permute.xlu0 0
        %990 = vperm.xlu0 %989, %v976
        %v991 = vpop.permute.xlu0 %990
        %994 = vset.pattern.permute.xlu0 0
        %995 = vperm.xlu0 %994, %v977
        %v996 = vpop.permute.xlu0 %995
        %v1002 = vunpack.c.l.b16 %v965
        %v1003 = vunpack.c.l.b16 %v966
        %v1004 = vunpack.c.l.b16 %v967
        %v1005 = vunpack.c.l.b16 %v968
        %v1006 = vpack.c.b16 %v1003, %v1002
        %v1007 = vpack.c.b16 %v1005, %v1004
        %v1009 = vsel %vm739, %v1006, 0
        %v1012 = vsel %vm739, %v1007, 0
        %1014 = vmatprep.subr.bf16.mxu0 0
        %1015 = vmatpush1.bf16.msra.mxu0 %v969
        %1016 = vmatprep.subr.bf16.mxu0 0
        %1017 = vmatpush1.bf16.msra.mxu0 %v970
        %1018 = vmatprep.subr.bf16.mxu0 0
        %1019 = vmatpush1.bf16.msra.mxu0 %v971
        %1020 = vmatprep.subr.bf16.mxu0 0
        %1021 = vmatpush1.bf16.msra.mxu0 %v972
        %1022 = vmatprep.subr.bf16.mxu0 0
        %1023 = vmatpush1.bf16.msra.mxu0 0
        %1024 = vmatprep.subr.bf16.mxu0 0
        %1025 = vmatpush1.bf16.msra.mxu0 0
        %1026 = vmatprep.subr.bf16.mxu0 0
        %1027 = vmatpush1.bf16.msra.mxu0 0
        %1028 = vmatprep.subr.bf16.mxu0 0
        %1029 = vmatpush1.bf16.msra.mxu0 0
        %1030 = vmatprep.subr.bf16.mxu0 0
        %1031 = vmatpush1.bf16.msra.mxu0 0
        %1032 = vmatprep.subr.bf16.mxu0 0
        %1033 = vmatpush1.bf16.msra.mxu0 0
        %1034 = vmatprep.subr.bf16.mxu0 0
        %1035 = vmatpush1.bf16.msra.mxu0 0
        %1036 = vmatprep.subr.bf16.mxu0 0
        %1037 = vmatpush1.bf16.msra.mxu0 0
        %1038 = vmatprep.subr.bf16.mxu0 0
        %1039 = vmatpush1.bf16.msra.mxu0 0
        %1040 = vmatprep.subr.bf16.mxu0 0
        %1041 = vmatpush1.bf16.msra.mxu0 0
        %1042 = vmatprep.subr.bf16.mxu0 0
        %1043 = vmatpush1.bf16.msra.mxu0 0
        %1044 = vmatprep.subr.bf16.mxu0 0
        %1045 = vmatpush1.bf16.msra.mxu0 0
        %1046 = vmatprep.mubr.bf16.mxu0 0
        %1047 = vmatmul.mubr.bf16.gmra.mrb[0].mxu0 %v1009
        %v1048 = vpop.f32.mrb[0].mxu0
        %v1049 = vadd.f32 %v981, %v1048
        %v1050 = vpop.f32.mrb[0].mxu0
        %v1051 = vpop.f32.mrb[0].mxu0
        %v1052 = vadd.f32 %v986, %v1051
        %v1053 = vpop.f32.mrb[0].mxu0
        %1054 = vmatprep.mubr.bf16.mxu0 0
        %1055 = vmatmul.mubr.bf16.gmra.mrb[0].mxu0 %v1012
        %v1056 = vpop.f32.mrb[0].mxu0
        %v1057 = vadd.f32 %v991, %v1056
        %v1058 = vpop.f32.mrb[0].mxu0
        %v1059 = vpop.f32.mrb[0].mxu0
        %v1060 = vadd.f32 %v996, %v1059
        %v1061 = vpop.f32.mrb[0].mxu0
        %1062 = vdwg.mxu0
        %v1063 = vadd.f32 %v795, %v1049
        %v1064 = vadd.f32 %v796, %v1052
        %v1065 = vadd.f32 %v797, %v1057
        %v1066 = vadd.f32 %v798, %v1060
        %s1067 = scalar_lea.vmem %s3, 64
        %v1068 = vld [vmem:[%s1067] sm:$0xf]
        %v1069 = vld [vmem:[%s1067 + $0x4] sm:$0xf]
        %v1070 = vld [vmem:[%s1067 + $0x8] sm:$0xf]
        %v1071 = vld [vmem:[%s1067 + $0xc] sm:$0xf]
        %v1072 = vld [vmem:[%s1067 + $0x10] sm:$0xf]
        %v1073 = vld [vmem:[%s1067 + $0x14] sm:$0xf]
        %v1074 = vld [vmem:[%s1067 + $0x18] sm:$0xf]
        %v1075 = vld [vmem:[%s1067 + $0x1c] sm:$0xf]
        %v1076 = vpack.c.bf16 %v1064, %v1063
        %v1077 = vpack.c.bf16 %v1066, %v1065
        %s1078 = scalar_lea.vmem %s4, 128
        %v1079 = vld [vmem:[%s1078] sm:$0xff]
        %v1080 = vld [vmem:[%s1078 + $0x8] sm:$0xff]
        %v1081 = vld [vmem:[%s1078 + $0x10] sm:$0xff]
        %v1082 = vld [vmem:[%s1078 + $0x18] sm:$0xff]
        %v1083 = vld [vmem:[%s1078 + $0x20] sm:$0xff]
        %v1084 = vld [vmem:[%s1078 + $0x28] sm:$0xff]
        %v1085 = vld [vmem:[%s1078 + $0x30] sm:$0xff]
        %v1086 = vld [vmem:[%s1078 + $0x38] sm:$0xff]
        %1088 = vset.pattern.permute.xlu0 0
        %1089 = vperm.xlu0 %1088, %v1079
        %v1090 = vpop.permute.xlu0 %1089
        %1093 = vset.pattern.permute.xlu0 0
        %1094 = vperm.xlu0 %1093, %v1080
        %v1095 = vpop.permute.xlu0 %1094
        %1098 = vset.pattern.permute.xlu0 0
        %1099 = vperm.xlu0 %1098, %v1081
        %v1100 = vpop.permute.xlu0 %1099
        %1103 = vset.pattern.permute.xlu0 0
        %1104 = vperm.xlu0 %1103, %v1082
        %v1105 = vpop.permute.xlu0 %1104
        %1108 = vset.pattern.permute.xlu0 0
        %1109 = vperm.xlu0 %1108, %v1083
        %v1110 = vpop.permute.xlu0 %1109
        %1113 = vset.pattern.permute.xlu0 0
        %1114 = vperm.xlu0 %1113, %v1084
        %v1115 = vpop.permute.xlu0 %1114
        %1118 = vset.pattern.permute.xlu0 0
        %1119 = vperm.xlu0 %1118, %v1085
        %v1120 = vpop.permute.xlu0 %1119
        %1123 = vset.pattern.permute.xlu0 0
        %1124 = vperm.xlu0 %1123, %v1086
        %v1125 = vpop.permute.xlu0 %1124
        %v1135 = vunpack.c.l.b16 %v1068
        %v1136 = vunpack.c.l.b16 %v1069
        %v1137 = vunpack.c.l.b16 %v1070
        %v1138 = vunpack.c.l.b16 %v1071
        %v1139 = vunpack.c.l.b16 %v1072
        %v1140 = vunpack.c.l.b16 %v1073
        %v1141 = vunpack.c.l.b16 %v1074
        %v1142 = vunpack.c.l.b16 %v1075
        %v1143 = vpack.c.b16 %v1136, %v1135
        %v1144 = vpack.c.b16 %v1138, %v1137
        %v1145 = vpack.c.b16 %v1140, %v1139
        %v1146 = vpack.c.b16 %v1142, %v1141
        %v1148 = vsel %vm611, %v1143, 0
        %v1151 = vsel %vm611, %v1144, 0
        %v1154 = vsel %vm611, %v1145, 0
        %v1157 = vsel %vm611, %v1146, 0
        %1159 = vmatprep.subr.bf16.mxu0 0
        %1160 = vmatpush1.bf16.msra.mxu0 %v1076
        %1161 = vmatprep.subr.bf16.mxu0 0
        %1162 = vmatpush1.bf16.msra.mxu0 %v1077
        %1163 = vmatprep.subr.bf16.mxu0 0
        %1164 = vmatpush1.bf16.msra.mxu0 0
        %1165 = vmatprep.subr.bf16.mxu0 0
        %1166 = vmatpush1.bf16.msra.mxu0 0
        %1167 = vmatprep.subr.bf16.mxu0 0
        %1168 = vmatpush1.bf16.msra.mxu0 0
        %1169 = vmatprep.subr.bf16.mxu0 0
        %1170 = vmatpush1.bf16.msra.mxu0 0
        %1171 = vmatprep.subr.bf16.mxu0 0
        %1172 = vmatpush1.bf16.msra.mxu0 0
        %1173 = vmatprep.subr.bf16.mxu0 0
        %1174 = vmatpush1.bf16.msra.mxu0 0
        %1175 = vmatprep.subr.bf16.mxu0 0
        %1176 = vmatpush1.bf16.msra.mxu0 0
        %1177 = vmatprep.subr.bf16.mxu0 0
        %1178 = vmatpush1.bf16.msra.mxu0 0
        %1179 = vmatprep.subr.bf16.mxu0 0
        %1180 = vmatpush1.bf16.msra.mxu0 0
        %1181 = vmatprep.subr.bf16.mxu0 0
        %1182 = vmatpush1.bf16.msra.mxu0 0
        %1183 = vmatprep.subr.bf16.mxu0 0
        %1184 = vmatpush1.bf16.msra.mxu0 0
        %1185 = vmatprep.subr.bf16.mxu0 0
        %1186 = vmatpush1.bf16.msra.mxu0 0
        %1187 = vmatprep.subr.bf16.mxu0 0
        %1188 = vmatpush1.bf16.msra.mxu0 0
        %1189 = vmatprep.subr.bf16.mxu0 0
        %1190 = vmatpush1.bf16.msra.mxu0 0
        %1191 = vmatprep.mubr.bf16.mxu0 0
        %1192 = vmatmul.mubr.bf16.gmra.mrb[0].mxu0 %v1148
        %v1193 = vpop.f32.mrb[0].mxu0
        %v1194 = vadd.f32 %v1090, %v1193
        %v1195 = vpop.f32.mrb[0].mxu0
        %v1196 = vpop.f32.mrb[0].mxu0
        %v1197 = vadd.f32 %v1095, %v1196
        %v1198 = vpop.f32.mrb[0].mxu0
        %1199 = vmatprep.mubr.bf16.mxu0 0
        %1200 = vmatmul.mubr.bf16.gmra.mrb[0].mxu0 %v1151
        %v1201 = vpop.f32.mrb[0].mxu0
        %v1202 = vadd.f32 %v1100, %v1201
        %v1203 = vpop.f32.mrb[0].mxu0
        %v1204 = vpop.f32.mrb[0].mxu0
        %v1205 = vadd.f32 %v1105, %v1204
        %v1206 = vpop.f32.mrb[0].mxu0
        %1207 = vmatprep.mubr.bf16.mxu0 0
        %1208 = vmatmul.mubr.bf16.gmra.mrb[0].mxu0 %v1154
        %v1209 = vpop.f32.mrb[0].mxu0
        %v1210 = vadd.f32 %v1110, %v1209
        %v1211 = vpop.f32.mrb[0].mxu0
        %v1212 = vpop.f32.mrb[0].mxu0
        %v1213 = vadd.f32 %v1115, %v1212
        %v1214 = vpop.f32.mrb[0].mxu0
        %1215 = vmatprep.mubr.bf16.mxu0 0
        %1216 = vmatmul.mubr.bf16.gmra.mrb[0].mxu0 %v1157
        %v1217 = vpop.f32.mrb[0].mxu0
        %v1218 = vadd.f32 %v1120, %v1217
        %v1219 = vpop.f32.mrb[0].mxu0
        %v1220 = vpop.f32.mrb[0].mxu0
        %v1221 = vadd.f32 %v1125, %v1220
        %v1222 = vpop.f32.mrb[0].mxu0
        %1223 = vdwg.mxu0
        %v1224 = vmax.f32 %v1194, 0.0
        %v1225 = vmax.f32 %v1197, 0.0
        %v1226 = vmax.f32 %v1202, 0.0
        %v1227 = vmax.f32 %v1205, 0.0
        %v1228 = vmax.f32 %v1210, 0.0
        %v1229 = vmax.f32 %v1213, 0.0
        %v1230 = vmax.f32 %v1218, 0.0
        %v1231 = vmax.f32 %v1221, 0.0
        %s1232 = scalar_lea.vmem %s5, 32
        %v1233 = vld [vmem:[%s1232] sm:$0xf]
        %v1234 = vld [vmem:[%s1232 + $0x4] sm:$0xf]
        %v1235 = vld [vmem:[%s1232 + $0x8] sm:$0xf]
        %v1236 = vld [vmem:[%s1232 + $0xc] sm:$0xf]
        %v1237 = vpack.c.bf16 %v1225, %v1224
        %v1238 = vpack.c.bf16 %v1227, %v1226
        %v1239 = vpack.c.bf16 %v1229, %v1228
        %v1240 = vpack.c.bf16 %v1231, %v1230
        %s1241 = scalar_lea.vmem %s6, 64
        %v1242 = vld [vmem:[%s1241] sm:$0xff]
        %v1243 = vld [vmem:[%s1241 + $0x8] sm:$0xff]
        %v1244 = vld [vmem:[%s1241 + $0x10] sm:$0xff]
        %v1245 = vld [vmem:[%s1241 + $0x18] sm:$0xff]
        %1247 = vset.pattern.permute.xlu0 0
        %1248 = vperm.xlu0 %1247, %v1242
        %v1249 = vpop.permute.xlu0 %1248
        %1252 = vset.pattern.permute.xlu0 0
        %1253 = vperm.xlu0 %1252, %v1243
        %v1254 = vpop.permute.xlu0 %1253
        %1257 = vset.pattern.permute.xlu0 0
        %1258 = vperm.xlu0 %1257, %v1244
        %v1259 = vpop.permute.xlu0 %1258
        %1262 = vset.pattern.permute.xlu0 0
        %1263 = vperm.xlu0 %1262, %v1245
        %v1264 = vpop.permute.xlu0 %1263
        %v1270 = vunpack.c.l.b16 %v1233
        %v1271 = vunpack.c.l.b16 %v1234
        %v1272 = vunpack.c.l.b16 %v1235
        %v1273 = vunpack.c.l.b16 %v1236
        %v1274 = vpack.c.b16 %v1271, %v1270
        %v1275 = vpack.c.b16 %v1273, %v1272
        %v1277 = vsel %vm739, %v1274, 0
        %v1280 = vsel %vm739, %v1275, 0
        %1282 = vmatprep.subr.bf16.mxu0 0
        %1283 = vmatpush1.bf16.msra.mxu0 %v1237
        %1284 = vmatprep.subr.bf16.mxu0 0
        %1285 = vmatpush1.bf16.msra.mxu0 %v1238
        %1286 = vmatprep.subr.bf16.mxu0 0
        %1287 = vmatpush1.bf16.msra.mxu0 %v1239
        %1288 = vmatprep.subr.bf16.mxu0 0
        %1289 = vmatpush1.bf16.msra.mxu0 %v1240
        %1290 = vmatprep.subr.bf16.mxu0 0
        %1291 = vmatpush1.bf16.msra.mxu0 0
        %1292 = vmatprep.subr.bf16.mxu0 0
        %1293 = vmatpush1.bf16.msra.mxu0 0
        %1294 = vmatprep.subr.bf16.mxu0 0
        %1295 = vmatpush1.bf16.msra.mxu0 0
        %1296 = vmatprep.subr.bf16.mxu0 0
        %1297 = vmatpush1.bf16.msra.mxu0 0
        %1298 = vmatprep.subr.bf16.mxu0 0
        %1299 = vmatpush1.bf16.msra.mxu0 0
        %1300 = vmatprep.subr.bf16.mxu0 0
        %1301 = vmatpush1.bf16.msra.mxu0 0
        %1302 = vmatprep.subr.bf16.mxu0 0
        %1303 = vmatpush1.bf16.msra.mxu0 0
        %1304 = vmatprep.subr.bf16.mxu0 0
        %1305 = vmatpush1.bf16.msra.mxu0 0
        %1306 = vmatprep.subr.bf16.mxu0 0
        %1307 = vmatpush1.bf16.msra.mxu0 0
        %1308 = vmatprep.subr.bf16.mxu0 0
        %1309 = vmatpush1.bf16.msra.mxu0 0
        %1310 = vmatprep.subr.bf16.mxu0 0
        %1311 = vmatpush1.bf16.msra.mxu0 0
        %1312 = vmatprep.subr.bf16.mxu0 0
        %1313 = vmatpush1.bf16.msra.mxu0 0
        %1314 = vmatprep.mubr.bf16.mxu0 0
        %1315 = vmatmul.mubr.bf16.gmra.mrb[0].mxu0 %v1277
        %v1316 = vpop.f32.mrb[0].mxu0
        %v1317 = vadd.f32 %v1249, %v1316
        %v1318 = vpop.f32.mrb[0].mxu0
        %v1319 = vpop.f32.mrb[0].mxu0
        %v1320 = vadd.f32 %v1254, %v1319
        %v1321 = vpop.f32.mrb[0].mxu0
        %1322 = vmatprep.mubr.bf16.mxu0 0
        %1323 = vmatmul.mubr.bf16.gmra.mrb[0].mxu0 %v1280
        %v1324 = vpop.f32.mrb[0].mxu0
        %v1325 = vadd.f32 %v1259, %v1324
        %v1326 = vpop.f32.mrb[0].mxu0
        %v1327 = vpop.f32.mrb[0].mxu0
        %v1328 = vadd.f32 %v1264, %v1327
        %v1329 = vpop.f32.mrb[0].mxu0
        %1330 = vdwg.mxu0
        %v1331 = vadd.f32 %v1063, %v1317
        %v1332 = vadd.f32 %v1064, %v1320
        %v1333 = vadd.f32 %v1065, %v1325
        %v1334 = vadd.f32 %v1066, %v1328
        %v1335 = vadd.f32 %v1331, %v1332
        %v1336 = vadd.f32 %v1335, %v1333
        %v1337 = vadd.f32 %v1336, %v1334
        %v1338 = vrot.slane %v1337, 4
        %v1339 = vadd.f32 %v1337, %v1338
        %v1340 = vrot.slane %v1339, 2
        %v1341 = vadd.f32 %v1339, %v1340
        %v1342 = vrot.slane %v1341, 1
        %v1343 = vadd.f32 %v1341, %v1342
        %v1344 = vrcp.pop 32.0
        %v1345 = vmul.f32 %v1343, %v1344
        %v1346 = vsub.f32 %v1331, %v1345
        %v1347 = vsub.f32 %v1332, %v1345
        %v1348 = vsub.f32 %v1333, %v1345
        %v1349 = vsub.f32 %v1334, %v1345
        %v1350 = vmul.f32 %v1346, %v1346
        %v1351 = vmul.f32 %v1347, %v1347
        %v1352 = vmul.f32 %v1348, %v1348
        %v1353 = vmul.f32 %v1349, %v1349
        %v1354 = vadd.f32 %v1350, %v1351
        %v1355 = vadd.f32 %v1354, %v1352
        %v1356 = vadd.f32 %v1355, %v1353
        %v1357 = vrot.slane %v1356, 4
        %v1358 = vadd.f32 %v1356, %v1357
        %v1359 = vrot.slane %v1358, 2
        %v1360 = vadd.f32 %v1358, %v1359
        %v1361 = vrot.slane %v1360, 1
        %v1362 = vadd.f32 %v1360, %v1361
        %v1363 = vmul.f32 %v1362, %v1344
        %v1364 = vadd.f32 %v1363, 1e-05
        %v1365 = vrsqrt.pop %v1364
        %v1366 = vmul.f32 %v1346, %v1365
        %v1367 = vmul.f32 %v1347, %v1365
        %v1368 = vmul.f32 %v1348, %v1365
        %v1369 = vmul.f32 %v1349, %v1365
        %v1370 = vld [vmem:[%s7] sm:$0xff]
        %v1371 = vld [vmem:[%s7 + $0x8] sm:$0xff]
        %v1372 = vld [vmem:[%s7 + $0x10] sm:$0xff]
        %v1373 = vld [vmem:[%s7 + $0x18] sm:$0xff]
        %1375 = vset.pattern.permute.xlu0 0
        %1376 = vperm.xlu0 %1375, %v1370
        %v1377 = vpop.permute.xlu0 %1376
        %1380 = vset.pattern.permute.xlu0 0
        %1381 = vperm.xlu0 %1380, %v1371
        %v1382 = vpop.permute.xlu0 %1381
        %1385 = vset.pattern.permute.xlu0 0
        %1386 = vperm.xlu0 %1385, %v1372
        %v1387 = vpop.permute.xlu0 %1386
        %1390 = vset.pattern.permute.xlu0 0
        %1391 = vperm.xlu0 %1390, %v1373
        %v1392 = vpop.permute.xlu0 %1391
        %v1394 = vmul.f32 %v1366, %v1377
        %v1395 = vmul.f32 %v1367, %v1382
        %v1396 = vmul.f32 %v1368, %v1387
        %v1397 = vmul.f32 %v1369, %v1392
        %v1398 = vld [vmem:[%s8] sm:$0xff]
        %v1399 = vld [vmem:[%s8 + $0x8] sm:$0xff]
        %v1400 = vld [vmem:[%s8 + $0x10] sm:$0xff]
        %v1401 = vld [vmem:[%s8 + $0x18] sm:$0xff]
        %1403 = vset.pattern.permute.xlu0 0
        %1404 = vperm.xlu0 %1403, %v1398
        %v1405 = vpop.permute.xlu0 %1404
        %1408 = vset.pattern.permute.xlu0 0
        %1409 = vperm.xlu0 %1408, %v1399
        %v1410 = vpop.permute.xlu0 %1409
        %1413 = vset.pattern.permute.xlu0 0
        %1414 = vperm.xlu0 %1413, %v1400
        %v1415 = vpop.permute.xlu0 %1414
        %1418 = vset.pattern.permute.xlu0 0
        %1419 = vperm.xlu0 %1418, %v1401
        %v1420 = vpop.permute.xlu0 %1419
        %v1422 = vadd.f32 %v1394, %v1405
        %v1423 = vadd.f32 %v1395, %v1410
        %v1424 = vadd.f32 %v1396, %v1415
        %v1425 = vadd.f32 %v1397, %v1420
        %v1426 = vmax.f32 %v1422, 0.0
        %v1427 = vmax.f32 %v1423, 0.0
        %v1428 = vmax.f32 %v1424, 0.0
        %v1429 = vmax.f32 %v1425, 0.0
        %v1430 = vld [vmem:[%s9] sm:$0xff]
        %v1431 = vld [vmem:[%s9 + $0x8] sm:$0xff]
        %v1432 = vld [vmem:[%s9 + $0x10] sm:$0xff]
        %v1433 = vld [vmem:[%s9 + $0x18] sm:$0xff]
        %1435 = vset.pattern.permute.xlu0 0
        %1436 = vperm.xlu0 %1435, %v1430
        %v1437 = vpop.permute.xlu0 %1436
        %1440 = vset.pattern.permute.xlu0 0
        %1441 = vperm.xlu0 %1440, %v1431
        %v1442 = vpop.permute.xlu0 %1441
        %1445 = vset.pattern.permute.xlu0 0
        %1446 = vperm.xlu0 %1445, %v1432
        %v1447 = vpop.permute.xlu0 %1446
        %1450 = vset.pattern.permute.xlu0 0
        %1451 = vperm.xlu0 %1450, %v1433
        %v1452 = vpop.permute.xlu0 %1451
        %v1454 = vmul.f32 %v1426, %v1437
        %v1455 = vmul.f32 %v1427, %v1442
        %v1456 = vmul.f32 %v1428, %v1447
        %v1457 = vmul.f32 %v1429, %v1452
        %v1458 = vadd.f32 %v1454, %v1455
        %v1459 = vadd.f32 %v1458, %v1456
        %v1460 = vadd.f32 %v1459, %v1457
        %v1461 = vrot.slane %v1460, 4
        %v1462 = vadd.f32 %v1460, %v1461
        %v1463 = vrot.slane %v1462, 2
        %v1464 = vadd.f32 %v1462, %v1463
        %v1465 = vrot.slane %v1464, 1
        %v1466 = vadd.f32 %v1464, %v1465
        %s1467 = sld [smem:[#allocation2]]
        %v1468 = vstv %s1467
        %v1469 = vadd.f32 %v1466, %v1468
        %1470 = vst [vmem:[%s429] sm:$0x1] %v1469
        %s1471 = sand.u32 %s270, 1
        %s1472 = scalar_lea.sflag [#allocation5], %s1471
        %s1473 = sand.u32 %s270, 1
        %s1474 = scalar_lea.vmem [#allocation4], %s1473
        // Predicated region
        $region106: #{tpu_custom_call.1} parent=100 // pred_check
          %p1475 = pneg %p280
        $region107: #{tpu_custom_call.1} parent=100 // pred_check_branch
          %1477 = sbr.rel (%p1475) target = $region109
        $region108: #{tpu_custom_call.1} parent=100 // pred_region
          %s1479 = ssub.s32 16, 16
          %1480 = vsyncadd %s1472, %s1479
          %s1481 = smul.addr %s26, 16
          %s1482 = scalar_lea.hbm %s11, %s1481
          %s1484 = sshll.u32 %s1474, 4
          %s1485 = int_to_ptr.vmem [resolvable:$true] %s1484
          %1487 = dma.vmem_to_hbm [thread:$0]  %s1485, 16, %s1482, %s1472
        $region109: #{tpu_custom_call.1} parent=100 // pred_fallthru
          _
      $region101: #{tpu_custom_call.1} parent=5 // pred_fallthru
        _
      %p1488 = scmp.le.s32.totalorder 2, %s21
      // Predicated region
      $region110: #{tpu_custom_call.1} parent=5 // pred_check
        %p1489 = pneg %p1488
      $region111: #{tpu_custom_call.1} parent=5 // pred_check_branch
        %1491 = sbr.rel (%p1489) target = $region113
      $region112: #{tpu_custom_call.1} parent=5 // pred_region
        %s1492 = ssub.s32 %s21, 2
        // Predicated region
        $region114: #{tpu_custom_call.1} parent=112 // pred_check
          %p1493 = pneg %p286
        $region115: #{tpu_custom_call.1} parent=112 // pred_check_branch
          %1495 = sbr.rel (%p1493) target = $region117
        $region116: #{tpu_custom_call.1} parent=112 // pred_region
          %s1496 = sand.u32 %s271, 1
          %s1497 = scalar_lea.sflag [#allocation5], %s1496
          %s1498 = sand.u32 %s271, 1
          %s1499 = scalar_lea.vmem [#allocation4], %s1498
          %1500 = dma.done %s1497, 16
        $region117: #{tpu_custom_call.1} parent=112 // pred_fallthru
          _
      $region113: #{tpu_custom_call.1} parent=5 // pred_fallthru
        _
    $region6: #{tpu_custom_call.1} parent=1 // loop_footer
      %s25 = sadd.s32 1, %s21
    $region7: #{tpu_custom_call.1} parent=1 // loop_footer_branch
      %20 = sbr.rel target = $region3
    $region8: #{tpu_custom_call.1} parent=1 // loop_exit
      _
    %1501 = vsyncpa [#allocation5], 1
    %s1502 = scalar_lea.sflag [#allocation5], 1
    %1503 = vsyncpa %s1502, 1

// kernel: tpu_custom_call.1
$region0: #{tpu_custom_call.1}
  #allocation0 [shape = 'u32[]', space=smem, size = 0x4, offset = 0x4, fixed_abs, tag = 'smem constant byte address 0x4 - core index']
  #allocation1 [shape = 'u32[144,128]{1,0:T(1,128)}', space=vmem, size = 0x12000, scoped, tag = 'internal scratch']
  #allocation2 [shape = 'f32[1,1]{1,0:T(1,128)S(6)}', space=smem, size = 0x200, scoped, tag = 'scoped memory for tpu_custom_call.1']
  %s0 = inlined_call_operand.vmem [shape: bf16[16,512], index: 0, kind: input, shape index: {}]
  %s1 = inlined_call_operand.vmem [shape: bf16[32,16], index: 1, kind: input, shape index: {}]
  %s2 = inlined_call_operand.vmem [shape: f32[32,1], index: 2, kind: input, shape index: {}]
  %s3 = inlined_call_operand.vmem [shape: bf16[3,64,32], index: 3, kind: input, shape index: {}]
  %s4 = inlined_call_operand.vmem [shape: f32[3,64,1], index: 4, kind: input, shape index: {}]
  %s5 = inlined_call_operand.vmem [shape: bf16[3,32,64], index: 5, kind: input, shape index: {}]
  %s6 = inlined_call_operand.vmem [shape: f32[3,32,1], index: 6, kind: input, shape index: {}]
  %s7 = inlined_call_operand.vmem [shape: f32[32,1], index: 7, kind: input, shape index: {}]
  %s8 = inlined_call_operand.vmem [shape: f32[32,1], index: 8, kind: input, shape index: {}]
  %s9 = inlined_call_operand.vmem [shape: f32[32,1], index: 9, kind: input, shape index: {}]
  %s10 = inlined_call_operand.<no memory space> [shape: f32[1,1], index: 10, kind: input, shape index: {}]
  %s11 = inlined_call_operand.hbm [shape: f32[1,512], index: 11, kind: output, shape index: {}]
  %s12 = sld [smem:[#allocation0]]
  $region118: #{tpu_custom_call.1} parent=0
    _
  %s14 = ssub.s32 1, %s12
  %s15 = scalar_select 0, %s14, %s12
  %16 = sst [smem:[#allocation2]] %s10
  $region1: #{tpu_custom_call.1} parent=0
    #allocation3 [shape = 'u8[8192]{0}', space=vmem, size = 0x2000, scoped, tag = 'input window, operand 0']
    #allocation4 [shape = 'u8[1024]{0}', space=vmem, size = 0x400, scoped, tag = 'output window, operand 0']
    #allocation5 [shape = 's32[2]{0}', space=sflag, size = 0x8, scoped, tag = 'scoped memory for tpu_custom_call.1']
    %17 = vsyncpa [#allocation5], 0
    %s18 = scalar_lea.sflag [#allocation5], 1
    %19 = vsyncpa %s18, 0
    loop: start=0, step=1, limit=6
    $region2: #{tpu_custom_call.1} parent=1 // loop_pre_header
      _
    $region3: #{tpu_custom_call.1} parent=1 // loop_header
      %s21 = sphi 0, %s25
      %p22 = scmp.ge.s32.totalorder %s21, 6
      %s31 = sphi 0, %s33
      %s34 = sphi 0, %s31
      %s35 = sphi 0, %s34
      %s51 = sphi 0, %s35
      %s55 = sphi 0, %s55
      %s57 = sphi 0, %s55
      %s58 = sphi 0, %s57
      %s72 = sphi 0, %s58
      %s76 = sphi 0, %s76
      %s78 = sphi 0, %s76
      %s79 = sphi 0, %s78
      %s93 = sphi 0, %s79
      %s97 = sphi 0, %s97
      %s99 = sphi 0, %s97
      %s100 = sphi 0, %s99
      %s114 = sphi 0, %s100
      %s118 = sphi 0, %s118
      %s120 = sphi 0, %s118
      %s121 = sphi 0, %s120
      %s135 = sphi 0, %s121
      %s139 = sphi 0, %s139
      %s141 = sphi 0, %s139
      %s142 = sphi 0, %s141
      %s156 = sphi 0, %s142
      %s160 = sphi 0, %s160
      %s162 = sphi 0, %s160
      %s163 = sphi 0, %s162
      %s177 = sphi 0, %s163
      %s181 = sphi 0, %s181
      %s183 = sphi 0, %s181
      %s184 = sphi 0, %s183
      %s198 = sphi 0, %s184
      %s202 = sphi 0, %s202
      %s204 = sphi 0, %s202
      %s205 = sphi 0, %s204
      %s219 = sphi 0, %s205
      %s223 = sphi 0, %s223
      %s225 = sphi 0, %s223
      %s226 = sphi 0, %s225
      %s240 = sphi 0, %s226
      %s244 = sphi 0, %s244
      %s246 = sphi 0, %s244
      %s247 = sphi 0, %s246
      %s261 = sphi 0, %s247
      %s267 = sphi 0, %s269
      %s270 = sphi 0, %s267
      %s271 = sphi 0, %s270
      %s287 = sphi 0, %s271
    $region4: #{tpu_custom_call.1} parent=1 // loop_header_branch
      %24 = sbr.rel (%p22) target = $region8
    $region5: #{tpu_custom_call.1} parent=1 // loop_body
      %s26 = ssub.s32 %s21, 1
      %s27 = ssub.s32 %s21, 2
      %s28 = sadd.s32 %s21, 1
      %s29 = ssub.s32 %s21, %s28
      %p30 = scmp.eq.s32.totalorder %s29, 0
      %s32 = sadd.s32 %s31, 1
      %s33 = scalar_select %p30, %s31, %s32
      %p36 = pneg %p30
      %p37 = scmp.eq.s32.totalorder %s21, 3
      %p38 = por %p36, %p37
      %p39 = scmp.ne.s32.totalorder %s31, %s34
      %p40 = scmp.eq.s32.totalorder %s21, 0
      %p41 = por %p39, %p40
      %p42 = scmp.ne.s32.totalorder %s31, %s34
      %p43 = scmp.eq.s32.totalorder %s26, 3
      %p44 = por %p42, %p43
      %p45 = scmp.ne.s32.totalorder %s34, %s35
      %p46 = scmp.eq.s32.totalorder %s26, 0
      %p47 = por %p45, %p46
      %p48 = scmp.ne.s32.totalorder %s34, %s35
      %p49 = scmp.eq.s32.totalorder %s27, 3
      %p50 = por %p48, %p49
      %p52 = scmp.ne.s32.totalorder %s35, %s51
      %p53 = scmp.eq.s32.totalorder %s27, 0
      %p54 = por %p52, %p53
      %s56 = sadd.s32 %s55, 1
      %p59 = scmp.eq.s32.totalorder %s21, 3
      %p60 = scmp.ne.s32.totalorder %s55, %s57
      %p61 = scmp.eq.s32.totalorder %s21, 0
      %p62 = por %p60, %p61
      %p63 = scmp.ne.s32.totalorder %s55, %s57
      %p64 = scmp.eq.s32.totalorder %s26, 3
      %p65 = por %p63, %p64
      %p66 = scmp.ne.s32.totalorder %s57, %s58
      %p67 = scmp.eq.s32.totalorder %s26, 0
      %p68 = por %p66, %p67
      %p69 = scmp.ne.s32.totalorder %s57, %s58
      %p70 = scmp.eq.s32.totalorder %s27, 3
      %p71 = por %p69, %p70
      %p73 = scmp.ne.s32.totalorder %s58, %s72
      %p74 = scmp.eq.s32.totalorder %s27, 0
      %p75 = por %p73, %p74
      %s77 = sadd.s32 %s76, 1
      %p80 = scmp.eq.s32.totalorder %s21, 3
      %p81 = scmp.ne.s32.totalorder %s76, %s78
      %p82 = scmp.eq.s32.totalorder %s21, 0
      %p83 = por %p81, %p82
      %p84 = scmp.ne.s32.totalorder %s76, %s78
      %p85 = scmp.eq.s32.totalorder %s26, 3
      %p86 = por %p84, %p85
      %p87 = scmp.ne.s32.totalorder %s78, %s79
      %p88 = scmp.eq.s32.totalorder %s26, 0
      %p89 = por %p87, %p88
      %p90 = scmp.ne.s32.totalorder %s78, %s79
      %p91 = scmp.eq.s32.totalorder %s27, 3
      %p92 = por %p90, %p91
      %p94 = scmp.ne.s32.totalorder %s79, %s93
      %p95 = scmp.eq.s32.totalorder %s27, 0
      %p96 = por %p94, %p95
      %s98 = sadd.s32 %s97, 1
      %p101 = scmp.eq.s32.totalorder %s21, 3
      %p102 = scmp.ne.s32.totalorder %s97, %s99
      %p103 = scmp.eq.s32.totalorder %s21, 0
      %p104 = por %p102, %p103
      %p105 = scmp.ne.s32.totalorder %s97, %s99
      %p106 = scmp.eq.s32.totalorder %s26, 3
      %p107 = por %p105, %p106
      %p108 = scmp.ne.s32.totalorder %s99, %s100
      %p109 = scmp.eq.s32.totalorder %s26, 0
      %p110 = por %p108, %p109
      %p111 = scmp.ne.s32.totalorder %s99, %s100
      %p112 = scmp.eq.s32.totalorder %s27, 3
      %p113 = por %p111, %p112
      %p115 = scmp.ne.s32.totalorder %s100, %s114
      %p116 = scmp.eq.s32.totalorder %s27, 0
      %p117 = por %p115, %p116
      %s119 = sadd.s32 %s118, 1
      %p122 = scmp.eq.s32.totalorder %s21, 3
      %p123 = scmp.ne.s32.totalorder %s118, %s120
      %p124 = scmp.eq.s32.totalorder %s21, 0
      %p125 = por %p123, %p124
      %p126 = scmp.ne.s32.totalorder %s118, %s120
      %p127 = scmp.eq.s32.totalorder %s26, 3
      %p128 = por %p126, %p127
      %p129 = scmp.ne.s32.totalorder %s120, %s121
      %p130 = scmp.eq.s32.totalorder %s26, 0
      %p131 = por %p129, %p130
      %p132 = scmp.ne.s32.totalorder %s120, %s121
      %p133 = scmp.eq.s32.totalorder %s27, 3
      %p134 = por %p132, %p133
      %p136 = scmp.ne.s32.totalorder %s121, %s135
      %p137 = scmp.eq.s32.totalorder %s27, 0
      %p138 = por %p136, %p137
      %s140 = sadd.s32 %s139, 1
      %p143 = scmp.eq.s32.totalorder %s21, 3
      %p144 = scmp.ne.s32.totalorder %s139, %s141
      %p145 = scmp.eq.s32.totalorder %s21, 0
      %p146 = por %p144, %p145
      %p147 = scmp.ne.s32.totalorder %s139, %s141
      %p148 = scmp.eq.s32.totalorder %s26, 3
      %p149 = por %p147, %p148
      %p150 = scmp.ne.s32.totalorder %s141, %s142
      %p151 = scmp.eq.s32.totalorder %s26, 0
      %p152 = por %p150, %p151
      %p153 = scmp.ne.s32.totalorder %s141, %s142
      %p154 = scmp.eq.s32.totalorder %s27, 3
      %p155 = por %p153, %p154
      %p157 = scmp.ne.s32.totalorder %s142, %s156
      %p158 = scmp.eq.s32.totalorder %s27, 0
      %p159 = por %p157, %p158
      %s161 = sadd.s32 %s160, 1
      %p164 = scmp.eq.s32.totalorder %s21, 3
      %p165 = scmp.ne.s32.totalorder %s160, %s162
      %p166 = scmp.eq.s32.totalorder %s21, 0
      %p167 = por %p165, %p166
      %p168 = scmp.ne.s32.totalorder %s160, %s162
      %p169 = scmp.eq.s32.totalorder %s26, 3
      %p170 = por %p168, %p169
      %p171 = scmp.ne.s32.totalorder %s162, %s163
      %p172 = scmp.eq.s32.totalorder %s26, 0
      %p173 = por %p171, %p172
      %p174 = scmp.ne.s32.totalorder %s162, %s163
      %p175 = scmp.eq.s32.totalorder %s27, 3
      %p176 = por %p174, %p175
      %p178 = scmp.ne.s32.totalorder %s163, %s177
      %p179 = scmp.eq.s32.totalorder %s27, 0
      %p180 = por %p178, %p179
      %s182 = sadd.s32 %s181, 1
      %p185 = scmp.eq.s32.totalorder %s21, 3
      %p186 = scmp.ne.s32.totalorder %s181, %s183
      %p187 = scmp.eq.s32.totalorder %s21, 0
      %p188 = por %p186, %p187
      %p189 = scmp.ne.s32.totalorder %s181, %s183
      %p190 = scmp.eq.s32.totalorder %s26, 3
      %p191 = por %p189, %p190
      %p192 = scmp.ne.s32.totalorder %s183, %s184
      %p193 = scmp.eq.s32.totalorder %s26, 0
      %p194 = por %p192, %p193
      %p195 = scmp.ne.s32.totalorder %s183, %s184
      %p196 = scmp.eq.s32.totalorder %s27, 3
      %p197 = por %p195, %p196
      %p199 = scmp.ne.s32.totalorder %s184, %s198
      %p200 = scmp.eq.s32.totalorder %s27, 0
      %p201 = por %p199, %p200
      %s203 = sadd.s32 %s202, 1
      %p206 = scmp.eq.s32.totalorder %s21, 3
      %p207 = scmp.ne.s32.totalorder %s202, %s204
      %p208 = scmp.eq.s32.totalorder %s21, 0
      %p209 = por %p207, %p208
      %p210 = scmp.ne.s32.totalorder %s202, %s204
      %p211 = scmp.eq.s32.totalorder %s26, 3
      %p212 = por %p210, %p211
      %p213 = scmp.ne.s32.totalorder %s204, %s205
      %p214 = scmp.eq.s32.totalorder %s26, 0
      %p215 = por %p213, %p214
      %p216 = scmp.ne.s32.totalorder %s204, %s205
      %p217 = scmp.eq.s32.totalorder %s27, 3
      %p218 = por %p216, %p217
      %p220 = scmp.ne.s32.totalorder %s205, %s219
      %p221 = scmp.eq.s32.totalorder %s27, 0
      %p222 = por %p220, %p221
      %s224 = sadd.s32 %s223, 1
      %p227 = scmp.eq.s32.totalorder %s21, 3
      %p228 = scmp.ne.s32.totalorder %s223, %s225
      %p229 = scmp.eq.s32.totalorder %s21, 0
      %p230 = por %p228, %p229
      %p231 = scmp.ne.s32.totalorder %s223, %s225
      %p232 = scmp.eq.s32.totalorder %s26, 3
      %p233 = por %p231, %p232
      %p234 = scmp.ne.s32.totalorder %s225, %s226
      %p235 = scmp.eq.s32.totalorder %s26, 0
      %p236 = por %p234, %p235
      %p237 = scmp.ne.s32.totalorder %s225, %s226
      %p238 = scmp.eq.s32.totalorder %s27, 3
      %p239 = por %p237, %p238
      %p241 = scmp.ne.s32.totalorder %s226, %s240
      %p242 = scmp.eq.s32.totalorder %s27, 0
      %p243 = por %p241, %p242
      %s245 = sadd.s32 %s244, 1
      %p248 = scmp.eq.s32.totalorder %s21, 3
      %p249 = scmp.ne.s32.totalorder %s244, %s246
      %p250 = scmp.eq.s32.totalorder %s21, 0
      %p251 = por %p249, %p250
      %p252 = scmp.ne.s32.totalorder %s244, %s246
      %p253 = scmp.eq.s32.totalorder %s26, 3
      %p254 = por %p252, %p253
      %p255 = scmp.ne.s32.totalorder %s246, %s247
      %p256 = scmp.eq.s32.totalorder %s26, 0
      %p257 = por %p255, %p256
      %p258 = scmp.ne.s32.totalorder %s246, %s247
      %p259 = scmp.eq.s32.totalorder %s27, 3
      %p260 = por %p258, %p259
      %p262 = scmp.ne.s32.totalorder %s247, %s261
      %p263 = scmp.eq.s32.totalorder %s27, 0
      %p264 = por %p262, %p263
      %s265 = ssub.s32 %s21, %s28
      %p266 = scmp.eq.s32.totalorder %s265, 0
      %s268 = sadd.s32 %s267, 1
      %s269 = scalar_select %p266, %s267, %s268
      %p272 = pneg %p266
      %p273 = scmp.eq.s32.totalorder %s21, 3
      %p274 = por %p272, %p273
      %p275 = scmp.ne.s32.totalorder %s267, %s270
      %p276 = scmp.eq.s32.totalorder %s21, 0
      %p277 = por %p275, %p276
      %p278 = scmp.ne.s32.totalorder %s267, %s270
      %p279 = scmp.eq.s32.totalorder %s26, 3
      %p280 = por %p278, %p279
      %p281 = scmp.ne.s32.totalorder %s270, %s271
      %p282 = scmp.eq.s32.totalorder %s26, 0
      %p283 = por %p281, %p282
      %p284 = scmp.ne.s32.totalorder %s270, %s271
      %p285 = scmp.eq.s32.totalorder %s27, 3
      %p286 = por %p284, %p285
      %p288 = scmp.ne.s32.totalorder %s271, %s287
      %p289 = scmp.eq.s32.totalorder %s27, 0
      %p290 = por %p288, %p289
      %p291 = scmp.le.s32.totalorder 1, %s21
      %p292 = scmp.lt.s32.totalorder %s21, 5
      %p293 = pnand %p291, %p292
      %p294 = pneg %p293
      // Predicated region
      $region9: #{tpu_custom_call.1} parent=5 // pred_check
        _
      $region10: #{tpu_custom_call.1} parent=5 // pred_check_branch
        %296 = sbr.rel (%p293) target = $region12
      $region11: #{tpu_custom_call.1} parent=5 // pred_region
        %s297 = ssub.s32 %s21, 1
        // Predicated region
        $region13: #{tpu_custom_call.1} parent=11 // pred_check
          %p298 = pneg %p68
        $region14: #{tpu_custom_call.1} parent=11 // pred_check_branch
          %300 = sbr.rel (%p298) target = $region16
        $region15: #{tpu_custom_call.1} parent=11 // pred_region
          _
        $region16: #{tpu_custom_call.1} parent=11 // pred_fallthru
          _
        // Predicated region
        $region17: #{tpu_custom_call.1} parent=11 // pred_check
          %p301 = pneg %p89
        $region18: #{tpu_custom_call.1} parent=11 // pred_check_branch
          %303 = sbr.rel (%p301) target = $region20
        $region19: #{tpu_custom_call.1} parent=11 // pred_region
          _
        $region20: #{tpu_custom_call.1} parent=11 // pred_fallthru
          _
        // Predicated region
        $region21: #{tpu_custom_call.1} parent=11 // pred_check
          %p304 = pneg %p110
        $region22: #{tpu_custom_call.1} parent=11 // pred_check_branch
          %306 = sbr.rel (%p304) target = $region24
        $region23: #{tpu_custom_call.1} parent=11 // pred_region
          _
        $region24: #{tpu_custom_call.1} parent=11 // pred_fallthru
          _
        // Predicated region
        $region25: #{tpu_custom_call.1} parent=11 // pred_check
          %p307 = pneg %p131
        $region26: #{tpu_custom_call.1} parent=11 // pred_check_branch
          %309 = sbr.rel (%p307) target = $region28
        $region27: #{tpu_custom_call.1} parent=11 // pred_region
          _
        $region28: #{tpu_custom_call.1} parent=11 // pred_fallthru
          _
        // Predicated region
        $region29: #{tpu_custom_call.1} parent=11 // pred_check
          %p310 = pneg %p152
        $region30: #{tpu_custom_call.1} parent=11 // pred_check_branch
          %312 = sbr.rel (%p310) target = $region32
        $region31: #{tpu_custom_call.1} parent=11 // pred_region
          _
        $region32: #{tpu_custom_call.1} parent=11 // pred_fallthru
          _
        // Predicated region
        $region33: #{tpu_custom_call.1} parent=11 // pred_check
          %p313 = pneg %p173
        $region34: #{tpu_custom_call.1} parent=11 // pred_check_branch
          %315 = sbr.rel (%p313) target = $region36
        $region35: #{tpu_custom_call.1} parent=11 // pred_region
          _
        $region36: #{tpu_custom_call.1} parent=11 // pred_fallthru
          _
        // Predicated region
        $region37: #{tpu_custom_call.1} parent=11 // pred_check
          %p316 = pneg %p194
        $region38: #{tpu_custom_call.1} parent=11 // pred_check_branch
          %318 = sbr.rel (%p316) target = $region40
        $region39: #{tpu_custom_call.1} parent=11 // pred_region
          _
        $region40: #{tpu_custom_call.1} parent=11 // pred_fallthru
          _
        // Predicated region
        $region41: #{tpu_custom_call.1} parent=11 // pred_check
          %p319 = pneg %p215
        $region42: #{tpu_custom_call.1} parent=11 // pred_check_branch
          %321 = sbr.rel (%p319) target = $region44
        $region43: #{tpu_custom_call.1} parent=11 // pred_region
          _
        $region44: #{tpu_custom_call.1} parent=11 // pred_fallthru
          _
        // Predicated region
        $region45: #{tpu_custom_call.1} parent=11 // pred_check
          %p322 = pneg %p236
        $region46: #{tpu_custom_call.1} parent=11 // pred_check_branch
          %324 = sbr.rel (%p322) target = $region48
        $region47: #{tpu_custom_call.1} parent=11 // pred_region
          _
        $region48: #{tpu_custom_call.1} parent=11 // pred_fallthru
          _
        // Predicated region
        $region49: #{tpu_custom_call.1} parent=11 // pred_check
          %p325 = pneg %p257
        $region50: #{tpu_custom_call.1} parent=11 // pred_check_branch
          %327 = sbr.rel (%p325) target = $region52
        $region51: #{tpu_custom_call.1} parent=11 // pred_region
          _
        $region52: #{tpu_custom_call.1} parent=11 // pred_fallthru
          _
      $region12: #{tpu_custom_call.1} parent=5 // pred_fallthru
        _
      %p328 = scmp.lt.s32.totalorder %s21, 4
      // Predicated region
      $region53: #{tpu_custom_call.1} parent=5 // pred_check
        %p329 = pneg %p328
      $region54: #{tpu_custom_call.1} parent=5 // pred_check_branch
        %331 = sbr.rel (%p329) target = $region56
      $region55: #{tpu_custom_call.1} parent=5 // pred_region
        // Predicated region
        $region57: #{tpu_custom_call.1} parent=55 // pred_check
          %p332 = pneg %p41
        $region58: #{tpu_custom_call.1} parent=55 // pred_check_branch
          %334 = sbr.rel (%p332) target = $region60
        $region59: #{tpu_custom_call.1} parent=55 // pred_region
          %s335 = sand.u32 %s31, 1
          %s336 = sand.u32 %s31, 1
          %s337 = smul.addr %s336, 8
          %s338 = scalar_lea.vmem [#allocation3], %s337
          %s339 = smul.addr %s21, 4
          %s340 = scalar_lea.vmem %s0, %s339
          // Predicated region
          $region61: #{tpu_custom_call.1} parent=59 // pred_check
            _
          $region62: #{tpu_custom_call.1} parent=59 // pred_check_branch
            %342 = sbr.rel (0) target = $region64
          $region63: #{tpu_custom_call.1} parent=59 // pred_region
            // Predicated region
            $region65: #{tpu_custom_call.1} parent=63 // pred_check
              _
            $region66: #{tpu_custom_call.1} parent=63 // pred_check_branch
              %344 = sbr.rel target = $region68
            $region67: #{tpu_custom_call.1} parent=63 // pred_region
              // Predicated region
              $region80: #{tpu_custom_call.1} parent=67 // pred_check
                _
              $region81: #{tpu_custom_call.1} parent=67 // pred_check_branch
                %361 = sbr.rel (0) target = $region83
              $region82: #{tpu_custom_call.1} parent=67 // pred_region
                loop: start=0, step=1, limit=1
                $region84: #{tpu_custom_call.1} parent=82 // loop_pre_header
                  _
                $region85: #{tpu_custom_call.1} parent=82 // loop_header
                  %s363 = sphi 0, %s367
                  %p364 = scmp.ge.s32.totalorder %s363, 1
                  %s368 = sphi %s340, %s340
                  %s369 = sphi %s338, %s338
                $region86: #{tpu_custom_call.1} parent=82 // loop_header_branch
                  %366 = sbr.rel (%p364) target = $region90
                $region87: #{tpu_custom_call.1} parent=82 // loop_body
                  _
                $region88: #{tpu_custom_call.1} parent=82 // loop_footer
                  %s367 = sadd.s32 1, %s363
                $region89: #{tpu_custom_call.1} parent=82 // loop_footer_branch
                  %362 = sbr.rel target = $region85
                $region90: #{tpu_custom_call.1} parent=82 // loop_exit
                  _
                loop: start=0, step=1, limit=1
                $region91: #{tpu_custom_call.1} parent=82 // loop_pre_header
                  _
                $region92: #{tpu_custom_call.1} parent=82 // loop_header
                  %s372 = sphi 0, %s376
                  %p373 = scmp.ge.s32.totalorder %s372, 1
                  %s377 = sphi %s340, %s340
                  %s378 = sphi %s338, %s338
                $region93: #{tpu_custom_call.1} parent=82 // loop_header_branch
                  %375 = sbr.rel (%p373) target = $region97
                $region94: #{tpu_custom_call.1} parent=82 // loop_body
                  %v379 = vld [vmem:[%s377] sm:$0xf]
                  %380 = vst [vmem:[%s378] sm:$0xf] %v379
                  %v381 = vld [vmem:[%s377 + $0x10] sm:$0xf]
                  %382 = vst [vmem:[%s378 + $0x4] sm:$0xf] %v381
                $region95: #{tpu_custom_call.1} parent=82 // loop_footer
                  %s376 = sadd.s32 1, %s372
                $region96: #{tpu_custom_call.1} parent=82 // loop_footer_branch
                  %371 = sbr.rel target = $region92
                $region97: #{tpu_custom_call.1} parent=82 // loop_exit
                  _
              $region83: #{tpu_custom_call.1} parent=67 // pred_fallthru
                _
            $region68: #{tpu_custom_call.1} parent=63 // pred_fallthru
              _
            // Predicated region
            $region69: #{tpu_custom_call.1} parent=63 // pred_check
              _
            $region70: #{tpu_custom_call.1} parent=63 // pred_check_branch
              %346 = sbr.rel (0) target = $region72
            $region71: #{tpu_custom_call.1} parent=63 // pred_region
              loop: start=0, step=1, limit=1
              $region73: #{tpu_custom_call.1} parent=71 // loop_pre_header
                _
              $region74: #{tpu_custom_call.1} parent=71 // loop_header
                %s349 = sphi 0, %s353
                %p350 = scmp.ge.s32.totalorder %s349, 1
                %s354 = sphi %s340, %s340
                %s355 = sphi %s338, %s338
              $region75: #{tpu_custom_call.1} parent=71 // loop_header_branch
                %352 = sbr.rel (%p350) target = $region79
              $region76: #{tpu_custom_call.1} parent=71 // loop_body
                %v356 = vld [vmem:[%s354] sm:$0xf]
                %357 = vst [vmem:[%s355] sm:$0xf] %v356
                %v358 = vld [vmem:[%s354 + $0x10] sm:$0xf]
                %359 = vst [vmem:[%s355 + $0x4] sm:$0xf] %v358
              $region77: #{tpu_custom_call.1} parent=71 // loop_footer
                %s353 = sadd.s32 1, %s349
              $region78: #{tpu_custom_call.1} parent=71 // loop_footer_branch
                %348 = sbr.rel target = $region74
              $region79: #{tpu_custom_call.1} parent=71 // loop_exit
                _
            $region72: #{tpu_custom_call.1} parent=63 // pred_fallthru
              _
          $region64: #{tpu_custom_call.1} parent=59 // pred_fallthru
            _
          %383 = vnop
        $region60: #{tpu_custom_call.1} parent=55 // pred_fallthru
          _
      $region56: #{tpu_custom_call.1} parent=5 // pred_fallthru
        _
      %p384 = scmp.le.s32.totalorder 1, %s21
      %p385 = scmp.lt.s32.totalorder %s21, 5
      %p386 = pnand %p384, %p385
      %p387 = pneg %p386
      // Predicated region
      $region98: #{tpu_custom_call.1} parent=5 // pred_check
        _
      $region99: #{tpu_custom_call.1} parent=5 // pred_check_branch
        %389 = sbr.rel (%p386) target = $region101
      $region100: #{tpu_custom_call.1} parent=5 // pred_region
        %s390 = ssub.s32 %s21, 1
        %s391 = sand.u32 %s34, 1
        %s392 = sand.u32 %s34, 1
        %s393 = smul.addr %s392, 8
        %s394 = scalar_lea.vmem [#allocation3], %s393
        // Predicated region
        $region102: #{tpu_custom_call.1} parent=100 // pred_check
          %p395 = pneg %p47
        $region103: #{tpu_custom_call.1} parent=100 // pred_check_branch
          %397 = sbr.rel (%p395) target = $region105
        $region104: #{tpu_custom_call.1} parent=100 // pred_region
          _
        $region105: #{tpu_custom_call.1} parent=100 // pred_fallthru
          _
        %s398 = sand.u32 %s34, 1
        %s399 = sand.u32 %s34, 1
        %s400 = smul.addr %s399, 8
        %s401 = scalar_lea.vmem [#allocation3], %s400
        %p402 = pneg %p47
        %p403 = pneg %p44
        %p404 = pneg %p68
        %p405 = pneg %p65
        %p406 = pneg %p89
        %p407 = pneg %p86
        %p408 = pneg %p110
        %p409 = pneg %p107
        %p410 = pneg %p131
        %p411 = pneg %p128
        %p412 = pneg %p152
        %p413 = pneg %p149
        %p414 = pneg %p173
        %p415 = pneg %p170
        %p416 = pneg %p194
        %p417 = pneg %p191
        %p418 = pneg %p215
        %p419 = pneg %p212
        %p420 = pneg %p236
        %p421 = pneg %p233
        %p422 = pneg %p257
        %p423 = pneg %p254
        %p424 = pneg %p283
        %p425 = pneg %p280
        %s426 = sand.u32 %s270, 1
        %s427 = scalar_lea.sflag [#allocation5], %s426
        %s428 = sand.u32 %s270, 1
        %s429 = scalar_lea.vmem [#allocation4], %s428
        %v431 = vld [vmem:[%s1] sm:$0xf]
        %v432 = vld [vmem:[%s1 + $0x4] sm:$0xf]
        %v433 = vld [vmem:[%s1 + $0x8] sm:$0xf]
        %v434 = vld [vmem:[%s1 + $0xc] sm:$0xf]
        %v435 = vld [vmem:[%s394] sm:$0xf]
        %v436 = vld [vmem:[%s394 + $0x4] sm:$0xf]
        %v437 = vld [vmem:[%s2] sm:$0xff]
        %v438 = vld [vmem:[%s2 + $0x8] sm:$0xff]
        %v439 = vld [vmem:[%s2 + $0x10] sm:$0xff]
        %v440 = vld [vmem:[%s2 + $0x18] sm:$0xff]
        %442 = vset.pattern.permute.xlu0 0
        %443 = vperm.xlu0 %442, %v437
        %v444 = vpop.permute.xlu0 %443
        %447 = vset.pattern.permute.xlu0 0
        %448 = vperm.xlu0 %447, %v438
        %v449 = vpop.permute.xlu0 %448
        %452 = vset.pattern.permute.xlu0 0
        %453 = vperm.xlu0 %452, %v439
        %v454 = vpop.permute.xlu0 %453
        %457 = vset.pattern.permute.xlu0 0
        %458 = vperm.xlu0 %457, %v440
        %v459 = vpop.permute.xlu0 %458
        %v465 = vunpack.c.l.b16 %v431
        %v466 = vunpack.c.l.b16 %v432
        %v467 = vunpack.c.l.b16 %v433
        %v468 = vunpack.c.l.b16 %v434
        %v469 = vpack.c.b16 %v466, %v465
        %v470 = vpack.c.b16 %v468, %v467
        %v473 = vunpack.c.l.b16 %v435
        %v474 = vunpack.c.l.b16 %v436
        %v475 = vpack.c.b16 %v474, %v473
        %vm477 = vcmask 130048
        %v479 = vsel %vm477, %v469, 0
        %v482 = vsel %vm477, %v470, 0
        %484 = vmatprep.subr.bf16.mxu0 0
        %485 = vmatpush1.bf16.msra.mxu0 %v475
        %486 = vmatprep.subr.bf16.mxu0 0
        %487 = vmatpush1.bf16.msra.mxu0 0
        %488 = vmatprep.subr.bf16.mxu0 0
        %489 = vmatpush1.bf16.msra.mxu0 0
        %490 = vmatprep.subr.bf16.mxu0 0
        %491 = vmatpush1.bf16.msra.mxu0 0
        %492 = vmatprep.subr.bf16.mxu0 0
        %493 = vmatpush1.bf16.msra.mxu0 0
        %494 = vmatprep.subr.bf16.mxu0 0
        %495 = vmatpush1.bf16.msra.mxu0 0
        %496 = vmatprep.subr.bf16.mxu0 0
        %497 = vmatpush1.bf16.msra.mxu0 0
        %498 = vmatprep.subr.bf16.mxu0 0
        %499 = vmatpush1.bf16.msra.mxu0 0
        %500 = vmatprep.subr.bf16.mxu0 0
        %501 = vmatpush1.bf16.msra.mxu0 0
        %502 = vmatprep.subr.bf16.mxu0 0
        %503 = vmatpush1.bf16.msra.mxu0 0
        %504 = vmatprep.subr.bf16.mxu0 0
        %505 = vmatpush1.bf16.msra.mxu0 0
        %506 = vmatprep.subr.bf16.mxu0 0
        %507 = vmatpush1.bf16.msra.mxu0 0
        %508 = vmatprep.subr.bf16.mxu0 0
        %509 = vmatpush1.bf16.msra.mxu0 0
        %510 = vmatprep.subr.bf16.mxu0 0
        %511 = vmatpush1.bf16.msra.mxu0 0
        %512 = vmatprep.subr.bf16.mxu0 0
        %513 = vmatpush1.bf16.msra.mxu0 0
        %514 = vmatprep.subr.bf16.mxu0 0
        %515 = vmatpush1.bf16.msra.mxu0 0
        %516 = vmatprep.mubr.bf16.mxu0 0
        %517 = vmatmul.mubr.bf16.gmra.mrb[0].mxu0 %v479
        %v518 = vpop.f32.mrb[0].mxu0
        %v519 = vadd.f32 %v444, %v518
        %v520 = vpop.f32.mrb[0].mxu0
        %v521 = vpop.f32.mrb[0].mxu0
        %v522 = vadd.f32 %v449, %v521
        %v523 = vpop.f32.mrb[0].mxu0
        %524 = vmatprep.mubr.bf16.mxu0 0
        %525 = vmatmul.mubr.bf16.gmra.mrb[0].mxu0 %v482
        %v526 = vpop.f32.mrb[0].mxu0
        %v527 = vadd.f32 %v454, %v526
        %v528 = vpop.f32.mrb[0].mxu0
        %v529 = vpop.f32.mrb[0].mxu0
        %v530 = vadd.f32 %v459, %v529
        %v531 = vpop.f32.mrb[0].mxu0
        %532 = vdwg.mxu0
        %v533 = vld [vmem:[%s3] sm:$0xf]
        %v534 = vld [vmem:[%s3 + $0x4] sm:$0xf]
        %v535 = vld [vmem:[%s3 + $0x8] sm:$0xf]
        %v536 = vld [vmem:[%s3 + $0xc] sm:$0xf]
        %v537 = vld [vmem:[%s3 + $0x10] sm:$0xf]
        %v538 = vld [vmem:[%s3 + $0x14] sm:$0xf]
        %v539 = vld [vmem:[%s3 + $0x18] sm:$0xf]
        %v540 = vld [vmem:[%s3 + $0x1c] sm:$0xf]
        %v541 = vpack.c.bf16 %v522, %v519
        %v542 = vpack.c.bf16 %v530, %v527
        %v543 = vld [vmem:[%s4] sm:$0xff]
        %v544 = vld [vmem:[%s4 + $0x8] sm:$0xff]
        %v545 = vld [vmem:[%s4 + $0x10] sm:$0xff]
        %v546 = vld [vmem:[%s4 + $0x18] sm:$0xff]
        %v547 = vld [vmem:[%s4 + $0x20] sm:$0xff]
        %v548 = vld [vmem:[%s4 + $0x28] sm:$0xff]
        %v549 = vld [vmem:[%s4 + $0x30] sm:$0xff]
        %v550 = vld [vmem:[%s4 + $0x38] sm:$0xff]
        %552 = vset.pattern.permute.xlu0 0
        %553 = vperm.xlu0 %552, %v543
        %v554 = vpop.permute.xlu0 %553
        %557 = vset.pattern.permute.xlu0 0
        %558 = vperm.xlu0 %557, %v544
        %v559 = vpop.permute.xlu0 %558
        %562 = vset.pattern.permute.xlu0 0
        %563 = vperm.xlu0 %562, %v545
        %v564 = vpop.permute.xlu0 %563
        %567 = vset.pattern.permute.xlu0 0
        %568 = vperm.xlu0 %567, %v546
        %v569 = vpop.permute.xlu0 %568
        %572 = vset.pattern.permute.xlu0 0
        %573 = vperm.xlu0 %572, %v547
        %v574 = vpop.permute.xlu0 %573
        %577 = vset.pattern.permute.xlu0 0
        %578 = vperm.xlu0 %577, %v548
        %v579 = vpop.permute.xlu0 %578
        %582 = vset.pattern.permute.xlu0 0
        %583 = vperm.xlu0 %582, %v549
        %v584 = vpop.permute.xlu0 %583
        %587 = vset.pattern.permute.xlu0 0
        %588 = vperm.xlu0 %587, %v550
        %v589 = vpop.permute.xlu0 %588
        %v599 = vunpack.c.l.b16 %v533
        %v600 = vunpack.c.l.b16 %v534
        %v601 = vunpack.c.l.b16 %v535
        %v602 = vunpack.c.l.b16 %v536
        %v603 = vunpack.c.l.b16 %v537
        %v604 = vunpack.c.l.b16 %v538
        %v605 = vunpack.c.l.b16 %v539
        %v606 = vunpack.c.l.b16 %v540
        %v607 = vpack.c.b16 %v600, %v599
        %v608 = vpack.c.b16 %v602, %v601
        %v609 = vpack.c.b16 %v604, %v603
        %v610 = vpack.c.b16 %v606, %v605
        %vm611 = vcmask 261120
        %v613 = vsel %vm611, %v607, 0
        %v616 = vsel %vm611, %v608, 0
        %v619 = vsel %vm611, %v609, 0
        %v622 = vsel %vm611, %v610, 0
        %624 = vmatprep.subr.bf16.mxu0 0
        %625 = vmatpush1.bf16.msra.mxu0 %v541
        %626 = vmatprep.subr.bf16.mxu0 0
        %627 = vmatpush1.bf16.msra.mxu0 %v542
        %628 = vmatprep.subr.bf16.mxu0 0
        %629 = vmatpush1.bf16.msra.mxu0 0
        %630 = vmatprep.subr.bf16.mxu0 0
        %631 = vmatpush1.bf16.msra.mxu0 0
        %632 = vmatprep.subr.bf16.mxu0 0
        %633 = vmatpush1.bf16.msra.mxu0 0
        %634 = vmatprep.subr.bf16.mxu0 0
        %635 = vmatpush1.bf16.msra.mxu0 0
        %636 = vmatprep.subr.bf16.mxu0 0
        %637 = vmatpush1.bf16.msra.mxu0 0
        %638 = vmatprep.subr.bf16.mxu0 0
        %639 = vmatpush1.bf16.msra.mxu0 0
        %640 = vmatprep.subr.bf16.mxu0 0
        %641 = vmatpush1.bf16.msra.mxu0 0
        %642 = vmatprep.subr.bf16.mxu0 0
        %643 = vmatpush1.bf16.msra.mxu0 0
        %644 = vmatprep.subr.bf16.mxu0 0
        %645 = vmatpush1.bf16.msra.mxu0 0
        %646 = vmatprep.subr.bf16.mxu0 0
        %647 = vmatpush1.bf16.msra.mxu0 0
        %648 = vmatprep.subr.bf16.mxu0 0
        %649 = vmatpush1.bf16.msra.mxu0 0
        %650 = vmatprep.subr.bf16.mxu0 0
        %651 = vmatpush1.bf16.msra.mxu0 0
        %652 = vmatprep.subr.bf16.mxu0 0
        %653 = vmatpush1.bf16.msra.mxu0 0
        %654 = vmatprep.subr.bf16.mxu0 0
        %655 = vmatpush1.bf16.msra.mxu0 0
        %656 = vmatprep.mubr.bf16.mxu0 0
        %657 = vmatmul.mubr.bf16.gmra.mrb[0].mxu0 %v613
        %v658 = vpop.f32.mrb[0].mxu0
        %v659 = vadd.f32 %v554, %v658
        %v660 = vpop.f32.mrb[0].mxu0
        %v661 = vpop.f32.mrb[0].mxu0
        %v662 = vadd.f32 %v559, %v661
        %v663 = vpop.f32.mrb[0].mxu0
        %664 = vmatprep.mubr.bf16.mxu0 0
        %665 = vmatmul.mubr.bf16.gmra.mrb[0].mxu0 %v616
        %v666 = vpop.f32.mrb[0].mxu0
        %v667 = vadd.f32 %v564, %v666
        %v668 = vpop.f32.mrb[0].mxu0
        %v669 = vpop.f32.mrb[0].mxu0
        %v670 = vadd.f32 %v569, %v669
        %v671 = vpop.f32.mrb[0].mxu0
        %672 = vmatprep.mubr.bf16.mxu0 0
        %673 = vmatmul.mubr.bf16.gmra.mrb[0].mxu0 %v619
        %v674 = vpop.f32.mrb[0].mxu0
        %v675 = vadd.f32 %v574, %v674
        %v676 = vpop.f32.mrb[0].mxu0
        %v677 = vpop.f32.mrb[0].mxu0
        %v678 = vadd.f32 %v579, %v677
        %v679 = vpop.f32.mrb[0].mxu0
        %680 = vmatprep.mubr.bf16.mxu0 0
        %681 = vmatmul.mubr.bf16.gmra.mrb[0].mxu0 %v622
        %v682 = vpop.f32.mrb[0].mxu0
        %v683 = vadd.f32 %v584, %v682
        %v684 = vpop.f32.mrb[0].mxu0
        %v685 = vpop.f32.mrb[0].mxu0
        %v686 = vadd.f32 %v589, %v685
        %v687 = vpop.f32.mrb[0].mxu0
        %688 = vdwg.mxu0
        %v689 = vmax.f32 %v659, 0.0
        %v690 = vmax.f32 %v662, 0.0
        %v691 = vmax.f32 %v667, 0.0
        %v692 = vmax.f32 %v670, 0.0
        %v693 = vmax.f32 %v675, 0.0
        %v694 = vmax.f32 %v678, 0.0
        %v695 = vmax.f32 %v683, 0.0
        %v696 = vmax.f32 %v686, 0.0
        %v697 = vld [vmem:[%s5] sm:$0xf]
        %v698 = vld [vmem:[%s5 + $0x4] sm:$0xf]
        %v699 = vld [vmem:[%s5 + $0x8] sm:$0xf]
        %v700 = vld [vmem:[%s5 + $0xc] sm:$0xf]
        %v701 = vpack.c.bf16 %v690, %v689
        %v702 = vpack.c.bf16 %v692, %v691
        %v703 = vpack.c.bf16 %v694, %v693
        %v704 = vpack.c.bf16 %v696, %v695
        %v705 = vld [vmem:[%s6] sm:$0xff]
        %v706 = vld [vmem:[%s6 + $0x8] sm:$0xff]
        %v707 = vld [vmem:[%s6 + $0x10] sm:$0xff]
        %v708 = vld [vmem:[%s6 + $0x18] sm:$0xff]
        %710 = vset.pattern.permute.xlu0 0
        %711 = vperm.xlu0 %710, %v705
        %v712 = vpop.permute.xlu0 %711
        %715 = vset.pattern.permute.xlu0 0
        %716 = vperm.xlu0 %715, %v706
        %v717 = vpop.permute.xlu0 %716
        %720 = vset.pattern.permute.xlu0 0
        %721 = vperm.xlu0 %720, %v707
        %v722 = vpop.permute.xlu0 %721
        %725 = vset.pattern.permute.xlu0 0
        %726 = vperm.xlu0 %725, %v708
        %v727 = vpop.permute.xlu0 %726
        %v733 = vunpack.c.l.b16 %v697
        %v734 = vunpack.c.l.b16 %v698
        %v735 = vunpack.c.l.b16 %v699
        %v736 = vunpack.c.l.b16 %v700
        %v737 = vpack.c.b16 %v734, %v733
        %v738 = vpack.c.b16 %v736, %v735
        %vm739 = vcmask 523264
        %v741 = vsel %vm739, %v737, 0
        %v744 = vsel %vm739, %v738, 0
        %746 = vmatprep.subr.bf16.mxu0 0
        %747 = vmatpush1.bf16.msra.mxu0 %v701
        %748 = vmatprep.subr.bf16.mxu0 0
        %749 = vmatpush1.bf16.msra.mxu0 %v702
        %750 = vmatprep.subr.bf16.mxu0 0
        %751 = vmatpush1.bf16.msra.mxu0 %v703
        %752 = vmatprep.subr.bf16.mxu0 0
        %753 = vmatpush1.bf16.msra.mxu0 %v704
        %754 = vmatprep.subr.bf16.mxu0 0
        %755 = vmatpush1.bf16.msra.mxu0 0
        %756 = vmatprep.subr.bf16.mxu0 0
        %757 = vmatpush1.bf16.msra.mxu0 0
        %758 = vmatprep.subr.bf16.mxu0 0
        %759 = vmatpush1.bf16.msra.mxu0 0
        %760 = vmatprep.subr.bf16.mxu0 0
        %761 = vmatpush1.bf16.msra.mxu0 0
        %762 = vmatprep.subr.bf16.mxu0 0
        %763 = vmatpush1.bf16.msra.mxu0 0
        %764 = vmatprep.subr.bf16.mxu0 0
        %765 = vmatpush1.bf16.msra.mxu0 0
        %766 = vmatprep.subr.bf16.mxu0 0
        %767 = vmatpush1.bf16.msra.mxu0 0
        %768 = vmatprep.subr.bf16.mxu0 0
        %769 = vmatpush1.bf16.msra.mxu0 0
        %770 = vmatprep.subr.bf16.mxu0 0
        %771 = vmatpush1.bf16.msra.mxu0 0
        %772 = vmatprep.subr.bf16.mxu0 0
        %773 = vmatpush1.bf16.msra.mxu0 0
        %774 = vmatprep.subr.bf16.mxu0 0
        %775 = vmatpush1.bf16.msra.mxu0 0
        %776 = vmatprep.subr.bf16.mxu0 0
        %777 = vmatpush1.bf16.msra.mxu0 0
        %778 = vmatprep.mubr.bf16.mxu0 0
        %779 = vmatmul.mubr.bf16.gmra.mrb[0].mxu0 %v741
        %v780 = vpop.f32.mrb[0].mxu0
        %v781 = vadd.f32 %v712, %v780
        %v782 = vpop.f32.mrb[0].mxu0
        %v783 = vpop.f32.mrb[0].mxu0
        %v784 = vadd.f32 %v717, %v783
        %v785 = vpop.f32.mrb[0].mxu0
        %786 = vmatprep.mubr.bf16.mxu0 0
        %787 = vmatmul.mubr.bf16.gmra.mrb[0].mxu0 %v744
        %v788 = vpop.f32.mrb[0].mxu0
        %v789 = vadd.f32 %v722, %v788
        %v790 = vpop.f32.mrb[0].mxu0
        %v791 = vpop.f32.mrb[0].mxu0
        %v792 = vadd.f32 %v727, %v791
        %v793 = vpop.f32.mrb[0].mxu0
        %794 = vdwg.mxu0
        %v795 = vadd.f32 %v519, %v781
        %v796 = vadd.f32 %v522, %v784
        %v797 = vadd.f32 %v527, %v789
        %v798 = vadd.f32 %v530, %v792
        %s799 = scalar_lea.vmem %s3, 32
        %v800 = vld [vmem:[%s799] sm:$0xf]
        %v801 = vld [vmem:[%s799 + $0x4] sm:$0xf]
        %v802 = vld [vmem:[%s799 + $0x8] sm:$0xf]
        %v803 = vld [vmem:[%s799 + $0xc] sm:$0xf]
        %v804 = vld [vmem:[%s799 + $0x10] sm:$0xf]
        %v805 = vld [vmem:[%s799 + $0x14] sm:$0xf]
        %v806 = vld [vmem:[%s799 + $0x18] sm:$0xf]
        %v807 = vld [vmem:[%s799 + $0x1c] sm:$0xf]
        %v808 = vpack.c.bf16 %v796, %v795
        %v809 = vpack.c.bf16 %v798, %v797
        %s810 = scalar_lea.vmem %s4, 64
        %v811 = vld [vmem:[%s810] sm:$0xff]
        %v812 = vld [vmem:[%s810 + $0x8] sm:$0xff]
        %v813 = vld [vmem:[%s810 + $0x10] sm:$0xff]
        %v814 = vld [vmem:[%s810 + $0x18] sm:$0xff]
        %v815 = vld [vmem:[%s810 + $0x20] sm:$0xff]
        %v816 = vld [vmem:[%s810 + $0x28] sm:$0xff]
        %v817 = vld [vmem:[%s810 + $0x30] sm:$0xff]
        %v818 = vld [vmem:[%s810 + $0x38] sm:$0xff]
        %820 = vset.pattern.permute.xlu0 0
        %821 = vperm.xlu0 %820, %v811
        %v822 = vpop.permute.xlu0 %821
        %825 = vset.pattern.permute.xlu0 0
        %826 = vperm.xlu0 %825, %v812
        %v827 = vpop.permute.xlu0 %826
        %830 = vset.pattern.permute.xlu0 0
        %831 = vperm.xlu0 %830, %v813
        %v832 = vpop.permute.xlu0 %831
        %835 = vset.pattern.permute.xlu0 0
        %836 = vperm.xlu0 %835, %v814
        %v837 = vpop.permute.xlu0 %836
        %840 = vset.pattern.permute.xlu0 0
        %841 = vperm.xlu0 %840, %v815
        %v842 = vpop.permute.xlu0 %841
        %845 = vset.pattern.permute.xlu0 0
        %846 = vperm.xlu0 %845, %v816
        %v847 = vpop.permute.xlu0 %846
        %850 = vset.pattern.permute.xlu0 0
        %851 = vperm.xlu0 %850, %v817
        %v852 = vpop.permute.xlu0 %851
        %855 = vset.pattern.permute.xlu0 0
        %856 = vperm.xlu0 %855, %v818
        %v857 = vpop.permute.xlu0 %856
        %v867 = vunpack.c.l.b16 %v800
        %v868 = vunpack.c.l.b16 %v801
        %v869 = vunpack.c.l.b16 %v802
        %v870 = vunpack.c.l.b16 %v803
        %v871 = vunpack.c.l.b16 %v804
        %v872 = vunpack.c.l.b16 %v805
        %v873 = vunpack.c.l.b16 %v806
        %v874 = vunpack.c.l.b16 %v807
        %v875 = vpack.c.b16 %v868, %v867
        %v876 = vpack.c.b16 %v870, %v869
        %v877 = vpack.c.b16 %v872, %v871
        %v878 = vpack.c.b16 %v874, %v873
        %v880 = vsel %vm611, %v875, 0
        %v883 = vsel %vm611, %v876, 0
        %v886 = vsel %vm611, %v877, 0
        %v889 = vsel %vm611, %v878, 0
        %891 = vmatprep.subr.bf16.mxu0 0
        %892 = vmatpush1.bf16.msra.mxu0 %v808
        %893 = vmatprep.subr.bf16.mxu0 0
        %894 = vmatpush1.bf16.msra.mxu0 %v809
        %895 = vmatprep.subr.bf16.mxu0 0
        %896 = vmatpush1.bf16.msra.mxu0 0
        %897 = vmatprep.subr.bf16.mxu0 0
        %898 = vmatpush1.bf16.msra.mxu0 0
        %899 = vmatprep.subr.bf16.mxu0 0
        %900 = vmatpush1.bf16.msra.mxu0 0
        %901 = vmatprep.subr.bf16.mxu0 0
        %902 = vmatpush1.bf16.msra.mxu0 0
        %903 = vmatprep.subr.bf16.mxu0 0
        %904 = vmatpush1.bf16.msra.mxu0 0
        %905 = vmatprep.subr.bf16.mxu0 0
        %906 = vmatpush1.bf16.msra.mxu0 0
        %907 = vmatprep.subr.bf16.mxu0 0
        %908 = vmatpush1.bf16.msra.mxu0 0
        %909 = vmatprep.subr.bf16.mxu0 0
        %910 = vmatpush1.bf16.msra.mxu0 0
        %911 = vmatprep.subr.bf16.mxu0 0
        %912 = vmatpush1.bf16.msra.mxu0 0
        %913 = vmatprep.subr.bf16.mxu0 0
        %914 = vmatpush1.bf16.msra.mxu0 0
        %915 = vmatprep.subr.bf16.mxu0 0
        %916 = vmatpush1.bf16.msra.mxu0 0
        %917 = vmatprep.subr.bf16.mxu0 0
        %918 = vmatpush1.bf16.msra.mxu0 0
        %919 = vmatprep.subr.bf16.mxu0 0
        %920 = vmatpush1.bf16.msra.mxu0 0
        %921 = vmatprep.subr.bf16.mxu0 0
        %922 = vmatpush1.bf16.msra.mxu0 0
        %923 = vmatprep.mubr.bf16.mxu0 0
        %924 = vmatmul.mubr.bf16.gmra.mrb[0].mxu0 %v880
        %v925 = vpop.f32.mrb[0].mxu0
        %v926 = vadd.f32 %v822, %v925
        %v927 = vpop.f32.mrb[0].mxu0
        %v928 = vpop.f32.mrb[0].mxu0
        %v929 = vadd.f32 %v827, %v928
        %v930 = vpop.f32.mrb[0].mxu0
        %931 = vmatprep.mubr.bf16.mxu0 0
        %932 = vmatmul.mubr.bf16.gmra.mrb[0].mxu0 %v883
        %v933 = vpop.f32.mrb[0].mxu0
        %v934 = vadd.f32 %v832, %v933
        %v935 = vpop.f32.mrb[0].mxu0
        %v936 = vpop.f32.mrb[0].mxu0
        %v937 = vadd.f32 %v837, %v936
        %v938 = vpop.f32.mrb[0].mxu0
        %939 = vmatprep.mubr.bf16.mxu0 0
        %940 = vmatmul.mubr.bf16.gmra.mrb[0].mxu0 %v886
        %v941 = vpop.f32.mrb[0].mxu0
        %v942 = vadd.f32 %v842, %v941
        %v943 = vpop.f32.mrb[0].mxu0
        %v944 = vpop.f32.mrb[0].mxu0
        %v945 = vadd.f32 %v847, %v944
        %v946 = vpop.f32.mrb[0].mxu0
        %947 = vmatprep.mubr.bf16.mxu0 0
        %948 = vmatmul.mubr.bf16.gmra.mrb[0].mxu0 %v889
        %v949 = vpop.f32.mrb[0].mxu0
        %v950 = vadd.f32 %v852, %v949
        %v951 = vpop.f32.mrb[0].mxu0
        %v952 = vpop.f32.mrb[0].mxu0
        %v953 = vadd.f32 %v857, %v952
        %v954 = vpop.f32.mrb[0].mxu0
        %955 = vdwg.mxu0
        %v956 = vmax.f32 %v926, 0.0
        %v957 = vmax.f32 %v929, 0.0
        %v958 = vmax.f32 %v934, 0.0
        %v959 = vmax.f32 %v937, 0.0
        %v960 = vmax.f32 %v942, 0.0
        %v961 = vmax.f32 %v945, 0.0
        %v962 = vmax.f32 %v950, 0.0
        %v963 = vmax.f32 %v953, 0.0
        %s964 = scalar_lea.vmem %s5, 16
        %v965 = vld [vmem:[%s964] sm:$0xf]
        %v966 = vld [vmem:[%s964 + $0x4] sm:$0xf]
        %v967 = vld [vmem:[%s964 + $0x8] sm:$0xf]
        %v968 = vld [vmem:[%s964 + $0xc] sm:$0xf]
        %v969 = vpack.c.bf16 %v957, %v956
        %v970 = vpack.c.bf16 %v959, %v958
        %v971 = vpack.c.bf16 %v961, %v960
        %v972 = vpack.c.bf16 %v963, %v962
        %s973 = scalar_lea.vmem %s6, 32
        %v974 = vld [vmem:[%s973] sm:$0xff]
        %v975 = vld [vmem:[%s973 + $0x8] sm:$0xff]
        %v976 = vld [vmem:[%s973 + $0x10] sm:$0xff]
        %v977 = vld [vmem:[%s973 + $0x18] sm:$0xff]
        %979 = vset.pattern.permute.xlu0 0
        %980 = vperm.xlu0 %979, %v974
        %v981 = vpop.permute.xlu0 %980
        %984 = vset.pattern.permute.xlu0 0
        %985 = vperm.xlu0 %984, %v975
        %v986 = vpop.permute.xlu0 %985
        %989 = vset.pattern.permute.xlu0 0
        %990 = vperm.xlu0 %989, %v976
        %v991 = vpop.permute.xlu0 %990
        %994 = vset.pattern.permute.xlu0 0
        %995 = vperm.xlu0 %994, %v977
        %v996 = vpop.permute.xlu0 %995
        %v1002 = vunpack.c.l.b16 %v965
        %v1003 = vunpack.c.l.b16 %v966
        %v1004 = vunpack.c.l.b16 %v967
        %v1005 = vunpack.c.l.b16 %v968
        %v1006 = vpack.c.b16 %v1003, %v1002
        %v1007 = vpack.c.b16 %v1005, %v1004
        %v1009 = vsel %vm739, %v1006, 0
        %v1012 = vsel %vm739, %v1007, 0
        %1014 = vmatprep.subr.bf16.mxu0 0
        %1015 = vmatpush1.bf16.msra.mxu0 %v969
        %1016 = vmatprep.subr.bf16.mxu0 0
        %1017 = vmatpush1.bf16.msra.mxu0 %v970
        %1018 = vmatprep.subr.bf16.mxu0 0
        %1019 = vmatpush1.bf16.msra.mxu0 %v971
        %1020 = vmatprep.subr.bf16.mxu0 0
        %1021 = vmatpush1.bf16.msra.mxu0 %v972
        %1022 = vmatprep.subr.bf16.mxu0 0
        %1023 = vmatpush1.bf16.msra.mxu0 0
        %1024 = vmatprep.subr.bf16.mxu0 0
        %1025 = vmatpush1.bf16.msra.mxu0 0
        %1026 = vmatprep.subr.bf16.mxu0 0
        %1027 = vmatpush1.bf16.msra.mxu0 0
        %1028 = vmatprep.subr.bf16.mxu0 0
        %1029 = vmatpush1.bf16.msra.mxu0 0
        %1030 = vmatprep.subr.bf16.mxu0 0
        %1031 = vmatpush1.bf16.msra.mxu0 0
        %1032 = vmatprep.subr.bf16.mxu0 0
        %1033 = vmatpush1.bf16.msra.mxu0 0
        %1034 = vmatprep.subr.bf16.mxu0 0
        %1035 = vmatpush1.bf16.msra.mxu0 0
        %1036 = vmatprep.subr.bf16.mxu0 0
        %1037 = vmatpush1.bf16.msra.mxu0 0
        %1038 = vmatprep.subr.bf16.mxu0 0
        %1039 = vmatpush1.bf16.msra.mxu0 0
        %1040 = vmatprep.subr.bf16.mxu0 0
        %1041 = vmatpush1.bf16.msra.mxu0 0
        %1042 = vmatprep.subr.bf16.mxu0 0
        %1043 = vmatpush1.bf16.msra.mxu0 0
        %1044 = vmatprep.subr.bf16.mxu0 0
        %1045 = vmatpush1.bf16.msra.mxu0 0
        %1046 = vmatprep.mubr.bf16.mxu0 0
        %1047 = vmatmul.mubr.bf16.gmra.mrb[0].mxu0 %v1009
        %v1048 = vpop.f32.mrb[0].mxu0
        %v1049 = vadd.f32 %v981, %v1048
        %v1050 = vpop.f32.mrb[0].mxu0
        %v1051 = vpop.f32.mrb[0].mxu0
        %v1052 = vadd.f32 %v986, %v1051
        %v1053 = vpop.f32.mrb[0].mxu0
        %1054 = vmatprep.mubr.bf16.mxu0 0
        %1055 = vmatmul.mubr.bf16.gmra.mrb[0].mxu0 %v1012
        %v1056 = vpop.f32.mrb[0].mxu0
        %v1057 = vadd.f32 %v991, %v1056
        %v1058 = vpop.f32.mrb[0].mxu0
        %v1059 = vpop.f32.mrb[0].mxu0
        %v1060 = vadd.f32 %v996, %v1059
        %v1061 = vpop.f32.mrb[0].mxu0
        %1062 = vdwg.mxu0
        %v1063 = vadd.f32 %v795, %v1049
        %v1064 = vadd.f32 %v796, %v1052
        %v1065 = vadd.f32 %v797, %v1057
        %v1066 = vadd.f32 %v798, %v1060
        %s1067 = scalar_lea.vmem %s3, 64
        %v1068 = vld [vmem:[%s1067] sm:$0xf]
        %v1069 = vld [vmem:[%s1067 + $0x4] sm:$0xf]
        %v1070 = vld [vmem:[%s1067 + $0x8] sm:$0xf]
        %v1071 = vld [vmem:[%s1067 + $0xc] sm:$0xf]
        %v1072 = vld [vmem:[%s1067 + $0x10] sm:$0xf]
        %v1073 = vld [vmem:[%s1067 + $0x14] sm:$0xf]
        %v1074 = vld [vmem:[%s1067 + $0x18] sm:$0xf]
        %v1075 = vld [vmem:[%s1067 + $0x1c] sm:$0xf]
        %v1076 = vpack.c.bf16 %v1064, %v1063
        %v1077 = vpack.c.bf16 %v1066, %v1065
        %s1078 = scalar_lea.vmem %s4, 128
        %v1079 = vld [vmem:[%s1078] sm:$0xff]
        %v1080 = vld [vmem:[%s1078 + $0x8] sm:$0xff]
        %v1081 = vld [vmem:[%s1078 + $0x10] sm:$0xff]
        %v1082 = vld [vmem:[%s1078 + $0x18] sm:$0xff]
        %v1083 = vld [vmem:[%s1078 + $0x20] sm:$0xff]
        %v1084 = vld [vmem:[%s1078 + $0x28] sm:$0xff]
        %v1085 = vld [vmem:[%s1078 + $0x30] sm:$0xff]
        %v1086 = vld [vmem:[%s1078 + $0x38] sm:$0xff]
        %1088 = vset.pattern.permute.xlu0 0
        %1089 = vperm.xlu0 %1088, %v1079
        %v1090 = vpop.permute.xlu0 %1089
        %1093 = vset.pattern.permute.xlu0 0
        %1094 = vperm.xlu0 %1093, %v1080
        %v1095 = vpop.permute.xlu0 %1094
        %1098 = vset.pattern.permute.xlu0 0
        %1099 = vperm.xlu0 %1098, %v1081
        %v1100 = vpop.permute.xlu0 %1099
        %1103 = vset.pattern.permute.xlu0 0
        %1104 = vperm.xlu0 %1103, %v1082
        %v1105 = vpop.permute.xlu0 %1104
        %1108 = vset.pattern.permute.xlu0 0
        %1109 = vperm.xlu0 %1108, %v1083
        %v1110 = vpop.permute.xlu0 %1109
        %1113 = vset.pattern.permute.xlu0 0
        %1114 = vperm.xlu0 %1113, %v1084
        %v1115 = vpop.permute.xlu0 %1114
        %1118 = vset.pattern.permute.xlu0 0
        %1119 = vperm.xlu0 %1118, %v1085
        %v1120 = vpop.permute.xlu0 %1119
        %1123 = vset.pattern.permute.xlu0 0
        %1124 = vperm.xlu0 %1123, %v1086
        %v1125 = vpop.permute.xlu0 %1124
        %v1135 = vunpack.c.l.b16 %v1068
        %v1136 = vunpack.c.l.b16 %v1069
        %v1137 = vunpack.c.l.b16 %v1070
        %v1138 = vunpack.c.l.b16 %v1071
        %v1139 = vunpack.c.l.b16 %v1072
        %v1140 = vunpack.c.l.b16 %v1073
        %v1141 = vunpack.c.l.b16 %v1074
        %v1142 = vunpack.c.l.b16 %v1075
        %v1143 = vpack.c.b16 %v1136, %v1135
        %v1144 = vpack.c.b16 %v1138, %v1137
        %v1145 = vpack.c.b16 %v1140, %v1139
        %v1146 = vpack.c.b16 %v1142, %v1141
        %v1148 = vsel %vm611, %v1143, 0
        %v1151 = vsel %vm611, %v1144, 0
        %v1154 = vsel %vm611, %v1145, 0
        %v1157 = vsel %vm611, %v1146, 0
        %1159 = vmatprep.subr.bf16.mxu0 0
        %1160 = vmatpush1.bf16.msra.mxu0 %v1076
        %1161 = vmatprep.subr.bf16.mxu0 0
        %1162 = vmatpush1.bf16.msra.mxu0 %v1077
        %1163 = vmatprep.subr.bf16.mxu0 0
        %1164 = vmatpush1.bf16.msra.mxu0 0
        %1165 = vmatprep.subr.bf16.mxu0 0
        %1166 = vmatpush1.bf16.msra.mxu0 0
        %1167 = vmatprep.subr.bf16.mxu0 0
        %1168 = vmatpush1.bf16.msra.mxu0 0
        %1169 = vmatprep.subr.bf16.mxu0 0
        %1170 = vmatpush1.bf16.msra.mxu0 0
        %1171 = vmatprep.subr.bf16.mxu0 0
        %1172 = vmatpush1.bf16.msra.mxu0 0
        %1173 = vmatprep.subr.bf16.mxu0 0
        %1174 = vmatpush1.bf16.msra.mxu0 0
        %1175 = vmatprep.subr.bf16.mxu0 0
        %1176 = vmatpush1.bf16.msra.mxu0 0
        %1177 = vmatprep.subr.bf16.mxu0 0
        %1178 = vmatpush1.bf16.msra.mxu0 0
        %1179 = vmatprep.subr.bf16.mxu0 0
        %1180 = vmatpush1.bf16.msra.mxu0 0
        %1181 = vmatprep.subr.bf16.mxu0 0
        %1182 = vmatpush1.bf16.msra.mxu0 0
        %1183 = vmatprep.subr.bf16.mxu0 0
        %1184 = vmatpush1.bf16.msra.mxu0 0
        %1185 = vmatprep.subr.bf16.mxu0 0
        %1186 = vmatpush1.bf16.msra.mxu0 0
        %1187 = vmatprep.subr.bf16.mxu0 0
        %1188 = vmatpush1.bf16.msra.mxu0 0
        %1189 = vmatprep.subr.bf16.mxu0 0
        %1190 = vmatpush1.bf16.msra.mxu0 0
        %1191 = vmatprep.mubr.bf16.mxu0 0
        %1192 = vmatmul.mubr.bf16.gmra.mrb[0].mxu0 %v1148
        %v1193 = vpop.f32.mrb[0].mxu0
        %v1194 = vadd.f32 %v1090, %v1193
        %v1195 = vpop.f32.mrb[0].mxu0
        %v1196 = vpop.f32.mrb[0].mxu0
        %v1197 = vadd.f32 %v1095, %v1196
        %v1198 = vpop.f32.mrb[0].mxu0
        %1199 = vmatprep.mubr.bf16.mxu0 0
        %1200 = vmatmul.mubr.bf16.gmra.mrb[0].mxu0 %v1151
        %v1201 = vpop.f32.mrb[0].mxu0
        %v1202 = vadd.f32 %v1100, %v1201
        %v1203 = vpop.f32.mrb[0].mxu0
        %v1204 = vpop.f32.mrb[0].mxu0
        %v1205 = vadd.f32 %v1105, %v1204
        %v1206 = vpop.f32.mrb[0].mxu0
        %1207 = vmatprep.mubr.bf16.mxu0 0
        %1208 = vmatmul.mubr.bf16.gmra.mrb[0].mxu0 %v1154
        %v1209 = vpop.f32.mrb[0].mxu0
        %v1210 = vadd.f32 %v1110, %v1209
        %v1211 = vpop.f32.mrb[0].mxu0
        %v1212 = vpop.f32.mrb[0].mxu0
        %v1213 = vadd.f32 %v1115, %v1212
        %v1214 = vpop.f32.mrb[0].mxu0
        %1215 = vmatprep.mubr.bf16.mxu0 0
        %1216 = vmatmul.mubr.bf16.gmra.mrb[0].mxu0 %v1157
        %v1217 = vpop.f32.mrb[0].mxu0
        %v1218 = vadd.f32 %v1120, %v1217
        %v1219 = vpop.f32.mrb[0].mxu0
        %v1220 = vpop.f32.mrb[0].mxu0
        %v1221 = vadd.f32 %v1125, %v1220
        %v1222 = vpop.f32.mrb[0].mxu0
        %1223 = vdwg.mxu0
        %v1224 = vmax.f32 %v1194, 0.0
        %v1225 = vmax.f32 %v1197, 0.0
        %v1226 = vmax.f32 %v1202, 0.0
        %v1227 = vmax.f32 %v1205, 0.0
        %v1228 = vmax.f32 %v1210, 0.0
        %v1229 = vmax.f32 %v1213, 0.0
        %v1230 = vmax.f32 %v1218, 0.0
        %v1231 = vmax.f32 %v1221, 0.0
        %s1232 = scalar_lea.vmem %s5, 32
        %v1233 = vld [vmem:[%s1232] sm:$0xf]
        %v1234 = vld [vmem:[%s1232 + $0x4] sm:$0xf]
        %v1235 = vld [vmem:[%s1232 + $0x8] sm:$0xf]
        %v1236 = vld [vmem:[%s1232 + $0xc] sm:$0xf]
        %v1237 = vpack.c.bf16 %v1225, %v1224
        %v1238 = vpack.c.bf16 %v1227, %v1226
        %v1239 = vpack.c.bf16 %v1229, %v1228
        %v1240 = vpack.c.bf16 %v1231, %v1230
        %s1241 = scalar_lea.vmem %s6, 64
        %v1242 = vld [vmem:[%s1241] sm:$0xff]
        %v1243 = vld [vmem:[%s1241 + $0x8] sm:$0xff]
        %v1244 = vld [vmem:[%s1241 + $0x10] sm:$0xff]
        %v1245 = vld [vmem:[%s1241 + $0x18] sm:$0xff]
        %1247 = vset.pattern.permute.xlu0 0
        %1248 = vperm.xlu0 %1247, %v1242
        %v1249 = vpop.permute.xlu0 %1248
        %1252 = vset.pattern.permute.xlu0 0
        %1253 = vperm.xlu0 %1252, %v1243
        %v1254 = vpop.permute.xlu0 %1253
        %1257 = vset.pattern.permute.xlu0 0
        %1258 = vperm.xlu0 %1257, %v1244
        %v1259 = vpop.permute.xlu0 %1258
        %1262 = vset.pattern.permute.xlu0 0
        %1263 = vperm.xlu0 %1262, %v1245
        %v1264 = vpop.permute.xlu0 %1263
        %v1270 = vunpack.c.l.b16 %v1233
        %v1271 = vunpack.c.l.b16 %v1234
        %v1272 = vunpack.c.l.b16 %v1235
        %v1273 = vunpack.c.l.b16 %v1236
        %v1274 = vpack.c.b16 %v1271, %v1270
        %v1275 = vpack.c.b16 %v1273, %v1272
        %v1277 = vsel %vm739, %v1274, 0
        %v1280 = vsel %vm739, %v1275, 0
        %1282 = vmatprep.subr.bf16.mxu0 0
        %1283 = vmatpush1.bf16.msra.mxu0 %v1237
        %1284 = vmatprep.subr.bf16.mxu0 0
        %1285 = vmatpush1.bf16.msra.mxu0 %v1238
        %1286 = vmatprep.subr.bf16.mxu0 0
        %1287 = vmatpush1.bf16.msra.mxu0 %v1239
        %1288 = vmatprep.subr.bf16.mxu0 0
        %1289 = vmatpush1.bf16.msra.mxu0 %v1240
        %1290 = vmatprep.subr.bf16.mxu0 0
        %1291 = vmatpush1.bf16.msra.mxu0 0
        %1292 = vmatprep.subr.bf16.mxu0 0
        %1293 = vmatpush1.bf16.msra.mxu0 0
        %1294 = vmatprep.subr.bf16.mxu0 0
        %1295 = vmatpush1.bf16.msra.mxu0 0
        %1296 = vmatprep.subr.bf16.mxu0 0
        %1297 = vmatpush1.bf16.msra.mxu0 0
        %1298 = vmatprep.subr.bf16.mxu0 0
        %1299 = vmatpush1.bf16.msra.mxu0 0
        %1300 = vmatprep.subr.bf16.mxu0 0
        %1301 = vmatpush1.bf16.msra.mxu0 0
        %1302 = vmatprep.subr.bf16.mxu0 0
        %1303 = vmatpush1.bf16.msra.mxu0 0
        %1304 = vmatprep.subr.bf16.mxu0 0
        %1305 = vmatpush1.bf16.msra.mxu0 0
        %1306 = vmatprep.subr.bf16.mxu0 0
        %1307 = vmatpush1.bf16.msra.mxu0 0
        %1308 = vmatprep.subr.bf16.mxu0 0
        %1309 = vmatpush1.bf16.msra.mxu0 0
        %1310 = vmatprep.subr.bf16.mxu0 0
        %1311 = vmatpush1.bf16.msra.mxu0 0
        %1312 = vmatprep.subr.bf16.mxu0 0
        %1313 = vmatpush1.bf16.msra.mxu0 0
        %1314 = vmatprep.mubr.bf16.mxu0 0
        %1315 = vmatmul.mubr.bf16.gmra.mrb[0].mxu0 %v1277
        %v1316 = vpop.f32.mrb[0].mxu0
        %v1317 = vadd.f32 %v1249, %v1316
        %v1318 = vpop.f32.mrb[0].mxu0
        %v1319 = vpop.f32.mrb[0].mxu0
        %v1320 = vadd.f32 %v1254, %v1319
        %v1321 = vpop.f32.mrb[0].mxu0
        %1322 = vmatprep.mubr.bf16.mxu0 0
        %1323 = vmatmul.mubr.bf16.gmra.mrb[0].mxu0 %v1280
        %v1324 = vpop.f32.mrb[0].mxu0
        %v1325 = vadd.f32 %v1259, %v1324
        %v1326 = vpop.f32.mrb[0].mxu0
        %v1327 = vpop.f32.mrb[0].mxu0
        %v1328 = vadd.f32 %v1264, %v1327
        %v1329 = vpop.f32.mrb[0].mxu0
        %1330 = vdwg.mxu0
        %v1331 = vadd.f32 %v1063, %v1317
        %v1332 = vadd.f32 %v1064, %v1320
        %v1333 = vadd.f32 %v1065, %v1325
        %v1334 = vadd.f32 %v1066, %v1328
        %v1335 = vadd.f32 %v1331, %v1332
        %v1336 = vadd.f32 %v1335, %v1333
        %v1337 = vadd.f32 %v1336, %v1334
        %v1338 = vrot.slane %v1337, 4
        %v1339 = vadd.f32 %v1337, %v1338
        %v1340 = vrot.slane %v1339, 2
        %v1341 = vadd.f32 %v1339, %v1340
        %v1342 = vrot.slane %v1341, 1
        %v1343 = vadd.f32 %v1341, %v1342
        %v1344 = vrcp.pop 32.0
        %v1345 = vmul.f32 %v1343, %v1344
        %v1346 = vsub.f32 %v1331, %v1345
        %v1347 = vsub.f32 %v1332, %v1345
        %v1348 = vsub.f32 %v1333, %v1345
        %v1349 = vsub.f32 %v1334, %v1345
        %v1350 = vmul.f32 %v1346, %v1346
        %v1351 = vmul.f32 %v1347, %v1347
        %v1352 = vmul.f32 %v1348, %v1348
        %v1353 = vmul.f32 %v1349, %v1349
        %v1354 = vadd.f32 %v1350, %v1351
        %v1355 = vadd.f32 %v1354, %v1352
        %v1356 = vadd.f32 %v1355, %v1353
        %v1357 = vrot.slane %v1356, 4
        %v1358 = vadd.f32 %v1356, %v1357
        %v1359 = vrot.slane %v1358, 2
        %v1360 = vadd.f32 %v1358, %v1359
        %v1361 = vrot.slane %v1360, 1
        %v1362 = vadd.f32 %v1360, %v1361
        %v1363 = vmul.f32 %v1362, %v1344
        %v1364 = vadd.f32 %v1363, 1e-05
        %v1365 = vrsqrt.pop %v1364
        %v1366 = vmul.f32 %v1346, %v1365
        %v1367 = vmul.f32 %v1347, %v1365
        %v1368 = vmul.f32 %v1348, %v1365
        %v1369 = vmul.f32 %v1349, %v1365
        %v1370 = vld [vmem:[%s7] sm:$0xff]
        %v1371 = vld [vmem:[%s7 + $0x8] sm:$0xff]
        %v1372 = vld [vmem:[%s7 + $0x10] sm:$0xff]
        %v1373 = vld [vmem:[%s7 + $0x18] sm:$0xff]
        %1375 = vset.pattern.permute.xlu0 0
        %1376 = vperm.xlu0 %1375, %v1370
        %v1377 = vpop.permute.xlu0 %1376
        %1380 = vset.pattern.permute.xlu0 0
        %1381 = vperm.xlu0 %1380, %v1371
        %v1382 = vpop.permute.xlu0 %1381
        %1385 = vset.pattern.permute.xlu0 0
        %1386 = vperm.xlu0 %1385, %v1372
        %v1387 = vpop.permute.xlu0 %1386
        %1390 = vset.pattern.permute.xlu0 0
        %1391 = vperm.xlu0 %1390, %v1373
        %v1392 = vpop.permute.xlu0 %1391
        %v1394 = vmul.f32 %v1366, %v1377
        %v1395 = vmul.f32 %v1367, %v1382
        %v1396 = vmul.f32 %v1368, %v1387
        %v1397 = vmul.f32 %v1369, %v1392
        %v1398 = vld [vmem:[%s8] sm:$0xff]
        %v1399 = vld [vmem:[%s8 + $0x8] sm:$0xff]
        %v1400 = vld [vmem:[%s8 + $0x10] sm:$0xff]
        %v1401 = vld [vmem:[%s8 + $0x18] sm:$0xff]
        %1403 = vset.pattern.permute.xlu0 0
        %1404 = vperm.xlu0 %1403, %v1398
        %v1405 = vpop.permute.xlu0 %1404
        %1408 = vset.pattern.permute.xlu0 0
        %1409 = vperm.xlu0 %1408, %v1399
        %v1410 = vpop.permute.xlu0 %1409
        %1413 = vset.pattern.permute.xlu0 0
        %1414 = vperm.xlu0 %1413, %v1400
        %v1415 = vpop.permute.xlu0 %1414
        %1418 = vset.pattern.permute.xlu0 0
        %1419 = vperm.xlu0 %1418, %v1401
        %v1420 = vpop.permute.xlu0 %1419
        %v1422 = vadd.f32 %v1394, %v1405
        %v1423 = vadd.f32 %v1395, %v1410
        %v1424 = vadd.f32 %v1396, %v1415
        %v1425 = vadd.f32 %v1397, %v1420
        %v1426 = vmax.f32 %v1422, 0.0
        %v1427 = vmax.f32 %v1423, 0.0
        %v1428 = vmax.f32 %v1424, 0.0
        %v1429 = vmax.f32 %v1425, 0.0
        %v1430 = vld [vmem:[%s9] sm:$0xff]
        %v1431 = vld [vmem:[%s9 + $0x8] sm:$0xff]
        %v1432 = vld [vmem:[%s9 + $0x10] sm:$0xff]
        %v1433 = vld [vmem:[%s9 + $0x18] sm:$0xff]
        %1435 = vset.pattern.permute.xlu0 0
        %1436 = vperm.xlu0 %1435, %v1430
        %v1437 = vpop.permute.xlu0 %1436
        %1440 = vset.pattern.permute.xlu0 0
        %1441 = vperm.xlu0 %1440, %v1431
        %v1442 = vpop.permute.xlu0 %1441
        %1445 = vset.pattern.permute.xlu0 0
        %1446 = vperm.xlu0 %1445, %v1432
        %v1447 = vpop.permute.xlu0 %1446
        %1450 = vset.pattern.permute.xlu0 0
        %1451 = vperm.xlu0 %1450, %v1433
        %v1452 = vpop.permute.xlu0 %1451
        %v1454 = vmul.f32 %v1426, %v1437
        %v1455 = vmul.f32 %v1427, %v1442
        %v1456 = vmul.f32 %v1428, %v1447
        %v1457 = vmul.f32 %v1429, %v1452
        %v1458 = vadd.f32 %v1454, %v1455
        %v1459 = vadd.f32 %v1458, %v1456
        %v1460 = vadd.f32 %v1459, %v1457
        %v1461 = vrot.slane %v1460, 4
        %v1462 = vadd.f32 %v1460, %v1461
        %v1463 = vrot.slane %v1462, 2
        %v1464 = vadd.f32 %v1462, %v1463
        %v1465 = vrot.slane %v1464, 1
        %v1466 = vadd.f32 %v1464, %v1465
        %s1467 = sld [smem:[#allocation2]]
        %v1468 = vstv %s1467
        %v1469 = vadd.f32 %v1466, %v1468
        %1470 = vst [vmem:[%s429] sm:$0x1] %v1469
        %s1471 = sand.u32 %s270, 1
        %s1472 = scalar_lea.sflag [#allocation5], %s1471
        %s1473 = sand.u32 %s270, 1
        %s1474 = scalar_lea.vmem [#allocation4], %s1473
        // Predicated region
        $region106: #{tpu_custom_call.1} parent=100 // pred_check
          %p1475 = pneg %p280
        $region107: #{tpu_custom_call.1} parent=100 // pred_check_branch
          %1477 = sbr.rel (%p1475) target = $region109
        $region108: #{tpu_custom_call.1} parent=100 // pred_region
          %s1479 = ssub.s32 16, 16
          %1480 = vsyncadd %s1472, %s1479
          %s1481 = smul.addr %s26, 16
          %s1482 = scalar_lea.hbm %s11, %s1481
          %s1484 = sshll.u32 %s1474, 4
          %s1485 = int_to_ptr.vmem [resolvable:$true] %s1484
          %1487 = dma.vmem_to_hbm [thread:$0]  %s1485, 16, %s1482, %s1472
        $region109: #{tpu_custom_call.1} parent=100 // pred_fallthru
          _
      $region101: #{tpu_custom_call.1} parent=5 // pred_fallthru
        _
      %p1488 = scmp.le.s32.totalorder 2, %s21
      // Predicated region
      $region110: #{tpu_custom_call.1} parent=5 // pred_check
        %p1489 = pneg %p1488
      $region111: #{tpu_custom_call.1} parent=5 // pred_check_branch
        %1491 = sbr.rel (%p1489) target = $region113
      $region112: #{tpu_custom_call.1} parent=5 // pred_region
        %s1492 = ssub.s32 %s21, 2
        // Predicated region
        $region114: #{tpu_custom_call.1} parent=112 // pred_check
          %p1493 = pneg %p286
        $region115: #{tpu_custom_call.1} parent=112 // pred_check_branch
          %1495 = sbr.rel (%p1493) target = $region117
        $region116: #{tpu_custom_call.1} parent=112 // pred_region
          %s1496 = sand.u32 %s271, 1
          %s1497 = scalar_lea.sflag [#allocation5], %s1496
          %s1498 = sand.u32 %s271, 1
          %s1499 = scalar_lea.vmem [#allocation4], %s1498
          %1500 = dma.done %s1497, 16
        $region117: #{tpu_custom_call.1} parent=112 // pred_fallthru
          _
      $region113: #{tpu_custom_call.1} parent=5 // pred_fallthru
        _
    $region6: #{tpu_custom_call.1} parent=1 // loop_footer
      %s25 = sadd.s32 1, %s21
    $region7: #{tpu_custom_call.1} parent=1 // loop_footer_branch
      %20 = sbr.rel target = $region3
    $region8: #{tpu_custom_call.1} parent=1 // loop_exit
      _
    %1501 = vsyncpa [#allocation5], 1
    %s1502 = scalar_lea.sflag [#allocation5], 1
    %1503 = vsyncpa %s1502, 1

</llo_original>
